<compile_context>
chip_gen: v7x
topology: tpu7x:2x2x1
jax: 0.10.0
libtpu: 0.0.40
codegen_flags: <defaults>
</compile_context>

<pallas_src>
import functools
import math

import jax
import jax.numpy as jnp
from jax.experimental import pallas as pl
from jax.experimental.pallas import tpu as pltpu

_LANES = 128
_BN_EPS = 1e-5


def _ceil_to(x, m):
    return (x + m - 1) // m * m


def _conv_fused_kernel(use_bn, act, *refs):
    """Fused GEMM tile + optional train-mode BatchNorm + activation.

    refs = (patches, weight[, gamma, beta], out)
      patches: (tm, Kp) bf16   weight: (Kp, OCp) bf16
      gamma/beta: (1, OCp) f32   out: (tm, OCp) out-dtype
    Kp and OCp are zero-padded multiples of 128 (lane-dense tiles).  BN layers
    always see the full M in one block, so batch statistics are exact.
    """
    if use_bn:
        p_ref, w_ref, g_ref, b_ref, o_ref = refs
    else:
        p_ref, w_ref, o_ref = refs

    # bf16 operands on the MXU, f32 accumulation.
    y = jnp.dot(p_ref[...], w_ref[...], preferred_element_type=jnp.float32)

    if use_bn:
        # One-pass batch statistics over M = N*OH*OW (train mode, biased var),
        # folded into a single per-channel scale/shift.
        inv_m = 1.0 / y.shape[0]
        mean = jnp.sum(y, axis=0, keepdims=True) * inv_m
        ex2 = jnp.sum(y * y, axis=0, keepdims=True) * inv_m
        var = ex2 - mean * mean
        scale = g_ref[...] * jax.lax.rsqrt(var + _BN_EPS)
        shift = b_ref[...] - mean * scale
        y = y * scale + shift

    if act == "lrelu":
        y = jnp.maximum(y, 0.2 * y)            # single VPU max
    elif act == "sigmoid":
        y = 0.5 * (jnp.tanh(0.5 * y) + 1.0)    # stable sigmoid via EUP tanh

    o_ref[...] = y.astype(o_ref.dtype)


def _choose_m_tile(M, use_bn):
    """M-tile for the pipelined grid.  BN layers need the full M in one block
    (exact batch stats); activation-only layers are tiled when M is large."""
    if use_bn:
        return M
    for tm in (1024, 512, 256):
        if M > tm and M % tm == 0:
            return tm
    return M


def conv_block(x, w_oihw, stride, pad, gamma=None, beta=None, act="lrelu",
               out_dtype=jnp.bfloat16):
    """One Conv2d(+BN)(+act) layer.  x: (N,H,W,C), w_oihw: PyTorch (OC,IC,KH,KW)."""
    OC, IC, KH, KW = w_oihw.shape
    N, _, _, C = x.shape
    assert C == IC

    # Lane alignment: pad IC so K = IC*KH*KW is a multiple of 128 (only the
    # first layer, IC=3 -> 8, actually needs it) and pad OC up to a multiple of
    # 128 so the GEMM output is lane-dense (unmasked stores).  Padded output
    # channels compute to exactly zero and are sliced away below.
    ic_mult = _LANES // math.gcd(KH * KW, _LANES)
    ICp = _ceil_to(IC, ic_mult)
    OCp = _ceil_to(OC, _LANES)
    Kp = ICp * KH * KW

    if ICp != IC:
        x = jnp.pad(x, ((0, 0), (0, 0), (0, 0), (0, ICp - IC)))
    x = x.astype(jnp.bfloat16)

    # im2col in one layout-preserving XLA op; output patch-channel order is
    # (c, kh, kw) with c major, matching the weight reshape below.
    patches = jax.lax.conv_general_dilated_patches(
        x, filter_shape=(KH, KW), window_strides=(stride, stride),
        padding=((pad, pad), (pad, pad)),
        dimension_numbers=("NHWC", "HWIO", "NHWC"))
    _, OH, OW, Kgot = patches.shape
    assert Kgot == Kp, (Kgot, Kp)
    M = N * OH * OW
    patches = patches.reshape(M, Kp)

    # (OC, IC, KH, KW) -> (IC, KH, KW, OC), zero-pad IC/OC, flatten to (Kp, OCp).
    w = jnp.transpose(w_oihw, (1, 2, 3, 0))
    w = jnp.pad(w, ((0, ICp - IC), (0, 0), (0, 0), (0, OCp - OC)))
    w = w.reshape(Kp, OCp).astype(jnp.bfloat16)

    use_bn = gamma is not None
    tm = _choose_m_tile(M, use_bn)
    grid = (M // tm,)

    in_specs = [
        pl.BlockSpec((tm, Kp), lambda i: (i, 0)),    # M-tiled patches
        pl.BlockSpec((Kp, OCp), lambda i: (0, 0)),   # weight resident across grid
    ]
    operands = [patches, w]
    if use_bn:
        operands += [
            jnp.pad(gamma.astype(jnp.float32), (0, OCp - OC)).reshape(1, OCp),
            jnp.pad(beta.astype(jnp.float32), (0, OCp - OC)).reshape(1, OCp),
        ]
        in_specs += [pl.BlockSpec((1, OCp), lambda i: (0, 0))] * 2

    # TODO(synk): for very large batches, the BN layers would need a two-pass
    # (stats then normalize) M-tiled grid; at this model size their M <= 512.
    out = pl.pallas_call(
        functools.partial(_conv_fused_kernel, use_bn, act),
        out_shape=jax.ShapeDtypeStruct((M, OCp), out_dtype),
        grid=grid,
        in_specs=in_specs,
        out_specs=pl.BlockSpec((tm, OCp), lambda i: (i, 0)),
        compiler_params=pltpu.CompilerParams(
            dimension_semantics=("parallel",),
            vmem_limit_bytes=32 * 1024 * 1024),
    )(*operands)

    # Drop padded output channels, restore NHWC.
    return out.reshape(N, OH, OW, OCp)[..., :OC]


def init_params(key, img_channels=3, feature_maps=16):
    """Deterministic synthetic parameters (shapes match the PyTorch module)."""
    fm = feature_maps
    conv_shapes = [
        (fm, img_channels, 4, 4),
        (fm * 2, fm, 4, 4),
        (fm * 4, fm * 2, 4, 4),
        (fm * 8, fm * 4, 4, 4),
        (1, fm * 8, 4, 4),
    ]
    params = {}
    keys = jax.random.split(key, len(conv_shapes))
    for idx, (k, s) in enumerate(zip(keys, conv_shapes)):
        params[f"w{idx}"] = jax.random.normal(k, s, jnp.float32) * 0.05
    # BatchNorm2d default init: gamma = 1, beta = 0
    for i, c in [(1, fm * 2), (2, fm * 4), (3, fm * 8)]:
        params[f"gamma{i}"] = jnp.ones((c,), jnp.float32)
        params[f"beta{i}"] = jnp.zeros((c,), jnp.float32)
    return params


def discriminator_forward(params, img_nchw):
    """Equivalent of Discriminator.forward.  img_nchw: (N, C, 64, 64) -> (N, 1, 1, 1)."""
    x = jnp.transpose(img_nchw, (0, 2, 3, 1)).astype(jnp.float32)  # NCHW -> NHWC
    x = conv_block(x, params["w0"], stride=2, pad=1, act="lrelu")
    x = conv_block(x, params["w1"], 2, 1, params["gamma1"], params["beta1"], "lrelu")
    x = conv_block(x, params["w2"], 2, 1, params["gamma2"], params["beta2"], "lrelu")
    x = conv_block(x, params["w3"], 2, 1, params["gamma3"], params["beta3"], "lrelu")
    x = conv_block(x, params["w4"], stride=1, pad=0, act="sigmoid",
                   out_dtype=jnp.float32)
    return jnp.transpose(x, (0, 3, 1, 2))  # back to NCHW: (N, 1, 1, 1)


def _reference_forward(params, img_nchw):
    """Pure-JAX f32 reference (for a runtime numerical check)."""
    hi = jax.lax.Precision.HIGHEST

    def conv(x, w, stride, pad):
        return jax.lax.conv_general_dilated(
            x, jnp.transpose(w, (2, 3, 1, 0)),  # OIHW -> HWIO
            window_strides=(stride, stride),
            padding=((pad, pad), (pad, pad)),
            dimension_numbers=("NHWC", "HWIO", "NHWC"),
            precision=hi)

    def bn(x, g, b):
        mean = jnp.mean(x, axis=(0, 1, 2), keepdims=True)
        var = jnp.mean((x - mean) ** 2, axis=(0, 1, 2), keepdims=True)
        return (x - mean) * jax.lax.rsqrt(var + _BN_EPS) * g + b

    lrelu = lambda v: jnp.where(v >= 0, v, 0.2 * v)

    x = jnp.transpose(img_nchw, (0, 2, 3, 1)).astype(jnp.float32)
    x = lrelu(conv(x, params["w0"], 2, 1))
    x = lrelu(bn(conv(x, params["w1"], 2, 1), params["gamma1"], params["beta1"]))
    x = lrelu(bn(conv(x, params["w2"], 2, 1), params["gamma2"], params["beta2"]))
    x = lrelu(bn(conv(x, params["w3"], 2, 1), params["gamma3"], params["beta3"]))
    x = jax.nn.sigmoid(conv(x, params["w4"], 1, 0))
    return jnp.transpose(x, (0, 3, 1, 2))


if __name__ == "__main__":
    key = jax.random.PRNGKey(0)
    k_img, k_par = jax.random.split(key)

    # Spatial size must be 64 so the final 4x4 / stride-1 conv yields a 1x1 map;
    # feature_maps=16 keeps the model small.
    img = jax.random.normal(k_img, (2, 3, 64, 64), jnp.float32)
    params = init_params(k_par, img_channels=3, feature_maps=16)

    out = jax.jit(discriminator_forward)(params, img)
    out = jax.block_until_ready(out)

    assert out.shape == (2, 1, 1, 1), out.shape
    assert bool(jnp.all((out >= 0.0) & (out <= 1.0)))

    ref = jax.jit(_reference_forward)(params, img)
    ref = jax.block_until_ready(ref)
    assert bool(jnp.allclose(out, ref, atol=5e-2)), (out, ref)

    print("KERNEL_OK")
</pallas_src>

<mosaic_0001>
module attributes {stable_mosaic.version = 11 : i64} {
  func.func @_conv_fused_kernel(%arg0: i32, %arg1: memref<1024x128xbf16, #tpu.memory_space<vmem>>, %arg2: memref<128x128xbf16, #tpu.memory_space<vmem>>, %arg3: memref<1024x128xbf16, #tpu.memory_space<vmem>>) attributes {dimension_semantics = [#tpu.dimension_semantics<parallel>], iteration_bounds = array<i64: 2>, scalar_prefetch = 0 : i64, scratch_operands = 0 : i64, tpu.core_type = #tpu.core_type<tc>, window_params = [{transform_indices = @transform_0, window_bounds = array<i64: 1024, 128>}, {pipeline_mode = #tpu.pipeline_mode<synchronous>, transform_indices = @transform_1, window_bounds = array<i64: 128, 128>}, {transform_indices = @transform_2, window_bounds = array<i64: 1024, 128>}]} {
    %c0 = arith.constant 0 : index
    %c0_0 = arith.constant 0 : index
    %0 = vector.load %arg1[%c0, %c0_0] : memref<1024x128xbf16, #tpu.memory_space<vmem>>, vector<1024x128xbf16>
    %c0_1 = arith.constant 0 : index
    %c0_2 = arith.constant 0 : index
    %1 = vector.load %arg2[%c0_1, %c0_2] : memref<128x128xbf16, #tpu.memory_space<vmem>>, vector<128x128xbf16>
    %cst = arith.constant dense<0.000000e+00> : vector<1024x128xf32>
    %2 = tpu.matmul %0, %1, %cst {dimension_numbers = #tpu.dot_dimension_numbers<[1], [0], [0], [1], [0, 0, 1, 1], [], []>} : vector<1024x128xbf16>, vector<128x128xbf16>, vector<1024x128xf32> -> vector<1024x128xf32>
    %cst_3 = arith.constant 2.000000e-01 : f32
    %3 = vector.broadcast %cst_3 : f32 to vector<1024x128xf32>
    %4 = arith.mulf %3, %2 : vector<1024x128xf32>
    %5 = arith.maximumf %2, %4 : vector<1024x128xf32>
    %6 = arith.truncf %5 : vector<1024x128xf32> to vector<1024x128xbf16>
    %c0_4 = arith.constant 0 : index
    %c0_5 = arith.constant 0 : index
    %7 = vector.load %arg3[%c0_4, %c0_5] : memref<1024x128xbf16, #tpu.memory_space<vmem>>, vector<1024x128xbf16>
    tpu.vector_store %arg3[%c0_4, %c0_5], %6 {strides = array<i32>} : memref<1024x128xbf16, #tpu.memory_space<vmem>>, vector<1024x128xbf16>,
    return
  }
  func.func @transform_0(%arg0: i32) -> (i32, i32) {
    %c0_i32 = arith.constant 0 : i32
    %c0_i32_0 = arith.constant 0 : i32
    return %arg0, %c0_i32 : i32, i32
  }
  func.func @transform_1(%arg0: i32) -> (i32, i32) {
    %c0_i32 = arith.constant 0 : i32
    %c0_i32_0 = arith.constant 0 : i32
    %c0_i32_1 = arith.constant 0 : i32
    return %c0_i32, %c0_i32_0 : i32, i32
  }
  func.func @transform_2(%arg0: i32) -> (i32, i32) {
    %c0_i32 = arith.constant 0 : i32
    %c0_i32_0 = arith.constant 0 : i32
    return %arg0, %c0_i32 : i32, i32
  }
}

module attributes {stable_mosaic.version = 11 : i64} {
  func.func @_conv_fused_kernel(%arg0: i32, %arg1: memref<512x256xbf16, #tpu.memory_space<vmem>>, %arg2: memref<256x128xbf16, #tpu.memory_space<vmem>>, %arg3: memref<1x128xf32, #tpu.memory_space<vmem>>, %arg4: memref<1x128xf32, #tpu.memory_space<vmem>>, %arg5: memref<512x128xbf16, #tpu.memory_space<vmem>>) attributes {dimension_semantics = [#tpu.dimension_semantics<parallel>], iteration_bounds = array<i64: 1>, scalar_prefetch = 0 : i64, scratch_operands = 0 : i64, tpu.core_type = #tpu.core_type<tc>, window_params = [{transform_indices = @transform_0, window_bounds = array<i64: 512, 256>}, {pipeline_mode = #tpu.pipeline_mode<synchronous>, transform_indices = @transform_1, window_bounds = array<i64: 256, 128>}, {pipeline_mode = #tpu.pipeline_mode<synchronous>, transform_indices = @transform_2, window_bounds = array<i64: 1, 128>}, {pipeline_mode = #tpu.pipeline_mode<synchronous>, transform_indices = @transform_3, window_bounds = array<i64: 1, 128>}, {transform_indices = @transform_4, window_bounds = array<i64: 512, 128>}]} {
    %c0 = arith.constant 0 : index
    %c0_0 = arith.constant 0 : index
    %0 = vector.load %arg1[%c0, %c0_0] : memref<512x256xbf16, #tpu.memory_space<vmem>>, vector<512x256xbf16>
    %c0_1 = arith.constant 0 : index
    %c0_2 = arith.constant 0 : index
    %1 = vector.load %arg2[%c0_1, %c0_2] : memref<256x128xbf16, #tpu.memory_space<vmem>>, vector<256x128xbf16>
    %cst = arith.constant dense<0.000000e+00> : vector<512x128xf32>
    %2 = tpu.matmul %0, %1, %cst {dimension_numbers = #tpu.dot_dimension_numbers<[1], [0], [0], [1], [0, 0, 1, 1], [], []>} : vector<512x256xbf16>, vector<256x128xbf16>, vector<512x128xf32> -> vector<512x128xf32>
    %cst_3 = arith.constant dense<0.000000e+00> : vector<128xf32>
    %3 = vector.multi_reduction <add>, %2, %cst_3 [0] : vector<512x128xf32> to vector<128xf32>
    %4 = vector.shape_cast %3 : vector<128xf32> to vector<1x128xf32>
    %cst_4 = arith.constant 0.001953125 : f32
    %5 = vector.broadcast %cst_4 : f32 to vector<1x128xf32>
    %6 = arith.mulf %4, %5 : vector<1x128xf32>
    %7 = arith.mulf %2, %2 : vector<512x128xf32>
    %cst_5 = arith.constant dense<0.000000e+00> : vector<128xf32>
    %8 = vector.multi_reduction <add>, %7, %cst_5 [0] : vector<512x128xf32> to vector<128xf32>
    %9 = vector.shape_cast %8 : vector<128xf32> to vector<1x128xf32>
    %cst_6 = arith.constant 0.001953125 : f32
    %10 = vector.broadcast %cst_6 : f32 to vector<1x128xf32>
    %11 = arith.mulf %9, %10 : vector<1x128xf32>
    %12 = arith.mulf %6, %6 : vector<1x128xf32>
    %13 = arith.subf %11, %12 : vector<1x128xf32>
    %c0_7 = arith.constant 0 : index
    %c0_8 = arith.constant 0 : index
    %14 = vector.load %arg3[%c0_7, %c0_8] : memref<1x128xf32, #tpu.memory_space<vmem>>, vector<1x128xf32>
    %cst_9 = arith.constant 9.99999974E-6 : f32
    %15 = vector.broadcast %cst_9 : f32 to vector<1x128xf32>
    %16 = arith.addf %13, %15 : vector<1x128xf32>
    %17 = math.rsqrt %16 : vector<1x128xf32>
    %18 = arith.mulf %14, %17 : vector<1x128xf32>
    %c0_10 = arith.constant 0 : index
    %c0_11 = arith.constant 0 : index
    %19 = vector.load %arg4[%c0_10, %c0_11] : memref<1x128xf32, #tpu.memory_space<vmem>>, vector<1x128xf32>
    %20 = arith.mulf %6, %18 : vector<1x128xf32>
    %21 = arith.subf %19, %20 : vector<1x128xf32>
    %22 = vector.broadcast %18 : vector<1x128xf32> to vector<512x128xf32>
    %23 = arith.mulf %2, %22 : vector<512x128xf32>
    %24 = vector.broadcast %21 : vector<1x128xf32> to vector<512x128xf32>
    %25 = arith.addf %23, %24 : vector<512x128xf32>
    %cst_12 = arith.constant 2.000000e-01 : f32
    %26 = vector.broadcast %cst_12 : f32 to vector<512x128xf32>
    %27 = arith.mulf %26, %25 : vector<512x128xf32>
    %28 = arith.maximumf %25, %27 : vector<512x128xf32>
    %29 = arith.truncf %28 : vector<512x128xf32> to vector<512x128xbf16>
    %c0_13 = arith.constant 0 : index
    %c0_14 = arith.constant 0 : index
    %30 = vector.load %arg5[%c0_13, %c0_14] : memref<512x128xbf16, #tpu.memory_space<vmem>>, vector<512x128xbf16>
    tpu.vector_store %arg5[%c0_13, %c0_14], %29 {strides = array<i32>} : memref<512x128xbf16, #tpu.memory_space<vmem>>, vector<512x128xbf16>,
    return
  }
  func.func @transform_0(%arg0: i32) -> (i32, i32) {
    %c0_i32 = arith.constant 0 : i32
    %c0_i32_0 = arith.constant 0 : i32
    return %arg0, %c0_i32 : i32, i32
  }
  func.func @transform_1(%arg0: i32) -> (i32, i32) {
    %c0_i32 = arith.constant 0 : i32
    %c0_i32_0 = arith.constant 0 : i32
    %c0_i32_1 = arith.constant 0 : i32
    return %c0_i32, %c0_i32_0 : i32, i32
  }
  func.func @transform_2(%arg0: i32) -> (i32, i32) {
    %c0_i32 = arith.constant 0 : i32
    %c0_i32_0 = arith.constant 0 : i32
    %c0_i32_1 = arith.constant 0 : i32
    return %c0_i32, %c0_i32_0 : i32, i32
  }
  func.func @transform_3(%arg0: i32) -> (i32, i32) {
    %c0_i32 = arith.constant 0 : i32
    %c0_i32_0 = arith.constant 0 : i32
    %c0_i32_1 = arith.constant 0 : i32
    return %c0_i32, %c0_i32_0 : i32, i32
  }
  func.func @transform_4(%arg0: i32) -> (i32, i32) {
    %c0_i32 = arith.constant 0 : i32
    %c0_i32_0 = arith.constant 0 : i32
    return %arg0, %c0_i32 : i32, i32
  }
}

module attributes {stable_mosaic.version = 11 : i64} {
  func.func @_conv_fused_kernel(%arg0: i32, %arg1: memref<128x512xbf16, #tpu.memory_space<vmem>>, %arg2: memref<512x128xbf16, #tpu.memory_space<vmem>>, %arg3: memref<1x128xf32, #tpu.memory_space<vmem>>, %arg4: memref<1x128xf32, #tpu.memory_space<vmem>>, %arg5: memref<128x128xbf16, #tpu.memory_space<vmem>>) attributes {dimension_semantics = [#tpu.dimension_semantics<parallel>], iteration_bounds = array<i64: 1>, scalar_prefetch = 0 : i64, scratch_operands = 0 : i64, tpu.core_type = #tpu.core_type<tc>, window_params = [{transform_indices = @transform_0, window_bounds = array<i64: 128, 512>}, {pipeline_mode = #tpu.pipeline_mode<synchronous>, transform_indices = @transform_1, window_bounds = array<i64: 512, 128>}, {pipeline_mode = #tpu.pipeline_mode<synchronous>, transform_indices = @transform_2, window_bounds = array<i64: 1, 128>}, {pipeline_mode = #tpu.pipeline_mode<synchronous>, transform_indices = @transform_3, window_bounds = array<i64: 1, 128>}, {transform_indices = @transform_4, window_bounds = array<i64: 128, 128>}]} {
    %c0 = arith.constant 0 : index
    %c0_0 = arith.constant 0 : index
    %0 = vector.load %arg1[%c0, %c0_0] : memref<128x512xbf16, #tpu.memory_space<vmem>>, vector<128x512xbf16>
    %c0_1 = arith.constant 0 : index
    %c0_2 = arith.constant 0 : index
    %1 = vector.load %arg2[%c0_1, %c0_2] : memref<512x128xbf16, #tpu.memory_space<vmem>>, vector<512x128xbf16>
    %cst = arith.constant dense<0.000000e+00> : vector<128x128xf32>
    %2 = tpu.matmul %0, %1, %cst {dimension_numbers = #tpu.dot_dimension_numbers<[1], [0], [0], [1], [0, 0, 1, 1], [], []>} : vector<128x512xbf16>, vector<512x128xbf16>, vector<128x128xf32> -> vector<128x128xf32>
    %cst_3 = arith.constant dense<0.000000e+00> : vector<128xf32>
    %3 = vector.multi_reduction <add>, %2, %cst_3 [0] : vector<128x128xf32> to vector<128xf32>
    %4 = vector.shape_cast %3 : vector<128xf32> to vector<1x128xf32>
    %cst_4 = arith.constant 7.812500e-03 : f32
    %5 = vector.broadcast %cst_4 : f32 to vector<1x128xf32>
    %6 = arith.mulf %4, %5 : vector<1x128xf32>
    %7 = arith.mulf %2, %2 : vector<128x128xf32>
    %cst_5 = arith.constant dense<0.000000e+00> : vector<128xf32>
    %8 = vector.multi_reduction <add>, %7, %cst_5 [0] : vector<128x128xf32> to vector<128xf32>
    %9 = vector.shape_cast %8 : vector<128xf32> to vector<1x128xf32>
    %cst_6 = arith.constant 7.812500e-03 : f32
    %10 = vector.broadcast %cst_6 : f32 to vector<1x128xf32>
    %11 = arith.mulf %9, %10 : vector<1x128xf32>
    %12 = arith.mulf %6, %6 : vector<1x128xf32>
    %13 = arith.subf %11, %12 : vector<1x128xf32>
    %c0_7 = arith.constant 0 : index
    %c0_8 = arith.constant 0 : index
    %14 = vector.load %arg3[%c0_7, %c0_8] : memref<1x128xf32, #tpu.memory_space<vmem>>, vector<1x128xf32>
    %cst_9 = arith.constant 9.99999974E-6 : f32
    %15 = vector.broadcast %cst_9 : f32 to vector<1x128xf32>
    %16 = arith.addf %13, %15 : vector<1x128xf32>
    %17 = math.rsqrt %16 : vector<1x128xf32>
    %18 = arith.mulf %14, %17 : vector<1x128xf32>
    %c0_10 = arith.constant 0 : index
    %c0_11 = arith.constant 0 : index
    %19 = vector.load %arg4[%c0_10, %c0_11] : memref<1x128xf32, #tpu.memory_space<vmem>>, vector<1x128xf32>
    %20 = arith.mulf %6, %18 : vector<1x128xf32>
    %21 = arith.subf %19, %20 : vector<1x128xf32>
    %22 = vector.broadcast %18 : vector<1x128xf32> to vector<128x128xf32>
    %23 = arith.mulf %2, %22 : vector<128x128xf32>
    %24 = vector.broadcast %21 : vector<1x128xf32> to vector<128x128xf32>
    %25 = arith.addf %23, %24 : vector<128x128xf32>
    %cst_12 = arith.constant 2.000000e-01 : f32
    %26 = vector.broadcast %cst_12 : f32 to vector<128x128xf32>
    %27 = arith.mulf %26, %25 : vector<128x128xf32>
    %28 = arith.maximumf %25, %27 : vector<128x128xf32>
    %29 = arith.truncf %28 : vector<128x128xf32> to vector<128x128xbf16>
    %c0_13 = arith.constant 0 : index
    %c0_14 = arith.constant 0 : index
    %30 = vector.load %arg5[%c0_13, %c0_14] : memref<128x128xbf16, #tpu.memory_space<vmem>>, vector<128x128xbf16>
    tpu.vector_store %arg5[%c0_13, %c0_14], %29 {strides = array<i32>} : memref<128x128xbf16, #tpu.memory_space<vmem>>, vector<128x128xbf16>,
    return
  }
  func.func @transform_0(%arg0: i32) -> (i32, i32) {
    %c0_i32 = arith.constant 0 : i32
    %c0_i32_0 = arith.constant 0 : i32
    return %arg0, %c0_i32 : i32, i32
  }
  func.func @transform_1(%arg0: i32) -> (i32, i32) {
    %c0_i32 = arith.constant 0 : i32
    %c0_i32_0 = arith.constant 0 : i32
    %c0_i32_1 = arith.constant 0 : i32
    return %c0_i32, %c0_i32_0 : i32, i32
  }
  func.func @transform_2(%arg0: i32) -> (i32, i32) {
    %c0_i32 = arith.constant 0 : i32
    %c0_i32_0 = arith.constant 0 : i32
    %c0_i32_1 = arith.constant 0 : i32
    return %c0_i32, %c0_i32_0 : i32, i32
  }
  func.func @transform_3(%arg0: i32) -> (i32, i32) {
    %c0_i32 = arith.constant 0 : i32
    %c0_i32_0 = arith.constant 0 : i32
    %c0_i32_1 = arith.constant 0 : i32
    return %c0_i32, %c0_i32_0 : i32, i32
  }
  func.func @transform_4(%arg0: i32) -> (i32, i32) {
    %c0_i32 = arith.constant 0 : i32
    %c0_i32_0 = arith.constant 0 : i32
    return %arg0, %c0_i32 : i32, i32
  }
}

module attributes {stable_mosaic.version = 11 : i64} {
  func.func @_conv_fused_kernel(%arg0: i32, %arg1: memref<32x1024xbf16, #tpu.memory_space<vmem>>, %arg2: memref<1024x128xbf16, #tpu.memory_space<vmem>>, %arg3: memref<1x128xf32, #tpu.memory_space<vmem>>, %arg4: memref<1x128xf32, #tpu.memory_space<vmem>>, %arg5: memref<32x128xbf16, #tpu.memory_space<vmem>>) attributes {dimension_semantics = [#tpu.dimension_semantics<parallel>], iteration_bounds = array<i64: 1>, scalar_prefetch = 0 : i64, scratch_operands = 0 : i64, tpu.core_type = #tpu.core_type<tc>, window_params = [{transform_indices = @transform_0, window_bounds = array<i64: 32, 1024>}, {pipeline_mode = #tpu.pipeline_mode<synchronous>, transform_indices = @transform_1, window_bounds = array<i64: 1024, 128>}, {pipeline_mode = #tpu.pipeline_mode<synchronous>, transform_indices = @transform_2, window_bounds = array<i64: 1, 128>}, {pipeline_mode = #tpu.pipeline_mode<synchronous>, transform_indices = @transform_3, window_bounds = array<i64: 1, 128>}, {transform_indices = @transform_4, window_bounds = array<i64: 32, 128>}]} {
    %c0 = arith.constant 0 : index
    %c0_0 = arith.constant 0 : index
    %0 = vector.load %arg1[%c0, %c0_0] : memref<32x1024xbf16, #tpu.memory_space<vmem>>, vector<32x1024xbf16>
    %c0_1 = arith.constant 0 : index
    %c0_2 = arith.constant 0 : index
    %1 = vector.load %arg2[%c0_1, %c0_2] : memref<1024x128xbf16, #tpu.memory_space<vmem>>, vector<1024x128xbf16>
    %cst = arith.constant dense<0.000000e+00> : vector<32x128xf32>
    %2 = tpu.matmul %0, %1, %cst {dimension_numbers = #tpu.dot_dimension_numbers<[1], [0], [0], [1], [0, 0, 1, 1], [], []>} : vector<32x1024xbf16>, vector<1024x128xbf16>, vector<32x128xf32> -> vector<32x128xf32>
    %cst_3 = arith.constant dense<0.000000e+00> : vector<128xf32>
    %3 = vector.multi_reduction <add>, %2, %cst_3 [0] : vector<32x128xf32> to vector<128xf32>
    %4 = vector.shape_cast %3 : vector<128xf32> to vector<1x128xf32>
    %cst_4 = arith.constant 3.125000e-02 : f32
    %5 = vector.broadcast %cst_4 : f32 to vector<1x128xf32>
    %6 = arith.mulf %4, %5 : vector<1x128xf32>
    %7 = arith.mulf %2, %2 : vector<32x128xf32>
    %cst_5 = arith.constant dense<0.000000e+00> : vector<128xf32>
    %8 = vector.multi_reduction <add>, %7, %cst_5 [0] : vector<32x128xf32> to vector<128xf32>
    %9 = vector.shape_cast %8 : vector<128xf32> to vector<1x128xf32>
    %cst_6 = arith.constant 3.125000e-02 : f32
    %10 = vector.broadcast %cst_6 : f32 to vector<1x128xf32>
    %11 = arith.mulf %9, %10 : vector<1x128xf32>
    %12 = arith.mulf %6, %6 : vector<1x128xf32>
    %13 = arith.subf %11, %12 : vector<1x128xf32>
    %c0_7 = arith.constant 0 : index
    %c0_8 = arith.constant 0 : index
    %14 = vector.load %arg3[%c0_7, %c0_8] : memref<1x128xf32, #tpu.memory_space<vmem>>, vector<1x128xf32>
    %cst_9 = arith.constant 9.99999974E-6 : f32
    %15 = vector.broadcast %cst_9 : f32 to vector<1x128xf32>
    %16 = arith.addf %13, %15 : vector<1x128xf32>
    %17 = math.rsqrt %16 : vector<1x128xf32>
    %18 = arith.mulf %14, %17 : vector<1x128xf32>
    %c0_10 = arith.constant 0 : index
    %c0_11 = arith.constant 0 : index
    %19 = vector.load %arg4[%c0_10, %c0_11] : memref<1x128xf32, #tpu.memory_space<vmem>>, vector<1x128xf32>
    %20 = arith.mulf %6, %18 : vector<1x128xf32>
    %21 = arith.subf %19, %20 : vector<1x128xf32>
    %22 = vector.broadcast %18 : vector<1x128xf32> to vector<32x128xf32>
    %23 = arith.mulf %2, %22 : vector<32x128xf32>
    %24 = vector.broadcast %21 : vector<1x128xf32> to vector<32x128xf32>
    %25 = arith.addf %23, %24 : vector<32x128xf32>
    %cst_12 = arith.constant 2.000000e-01 : f32
    %26 = vector.broadcast %cst_12 : f32 to vector<32x128xf32>
    %27 = arith.mulf %26, %25 : vector<32x128xf32>
    %28 = arith.maximumf %25, %27 : vector<32x128xf32>
    %29 = arith.truncf %28 : vector<32x128xf32> to vector<32x128xbf16>
    %c0_13 = arith.constant 0 : index
    %c0_14 = arith.constant 0 : index
    %30 = vector.load %arg5[%c0_13, %c0_14] : memref<32x128xbf16, #tpu.memory_space<vmem>>, vector<32x128xbf16>
    tpu.vector_store %arg5[%c0_13, %c0_14], %29 {strides = array<i32>} : memref<32x128xbf16, #tpu.memory_space<vmem>>, vector<32x128xbf16>,
    return
  }
  func.func @transform_0(%arg0: i32) -> (i32, i32) {
    %c0_i32 = arith.constant 0 : i32
    %c0_i32_0 = arith.constant 0 : i32
    return %arg0, %c0_i32 : i32, i32
  }
  func.func @transform_1(%arg0: i32) -> (i32, i32) {
    %c0_i32 = arith.constant 0 : i32
    %c0_i32_0 = arith.constant 0 : i32
    %c0_i32_1 = arith.constant 0 : i32
    return %c0_i32, %c0_i32_0 : i32, i32
  }
  func.func @transform_2(%arg0: i32) -> (i32, i32) {
    %c0_i32 = arith.constant 0 : i32
    %c0_i32_0 = arith.constant 0 : i32
    %c0_i32_1 = arith.constant 0 : i32
    return %c0_i32, %c0_i32_0 : i32, i32
  }
  func.func @transform_3(%arg0: i32) -> (i32, i32) {
    %c0_i32 = arith.constant 0 : i32
    %c0_i32_0 = arith.constant 0 : i32
    %c0_i32_1 = arith.constant 0 : i32
    return %c0_i32, %c0_i32_0 : i32, i32
  }
  func.func @transform_4(%arg0: i32) -> (i32, i32) {
    %c0_i32 = arith.constant 0 : i32
    %c0_i32_0 = arith.constant 0 : i32
    return %arg0, %c0_i32 : i32, i32
  }
}

module attributes {stable_mosaic.version = 11 : i64} {
  func.func @_conv_fused_kernel(%arg0: i32, %arg1: memref<2x2048xbf16, #tpu.memory_space<vmem>>, %arg2: memref<2048x128xbf16, #tpu.memory_space<vmem>>, %arg3: memref<2x128xf32, #tpu.memory_space<vmem>>) attributes {dimension_semantics = [#tpu.dimension_semantics<parallel>], iteration_bounds = array<i64: 1>, scalar_prefetch = 0 : i64, scratch_operands = 0 : i64, tpu.core_type = #tpu.core_type<tc>, window_params = [{transform_indices = @transform_0, window_bounds = array<i64: 2, 2048>}, {pipeline_mode = #tpu.pipeline_mode<synchronous>, transform_indices = @transform_1, window_bounds = array<i64: 2048, 128>}, {transform_indices = @transform_2, window_bounds = array<i64: 2, 128>}]} {
    %c0 = arith.constant 0 : index
    %c0_0 = arith.constant 0 : index
    %0 = vector.load %arg1[%c0, %c0_0] : memref<2x2048xbf16, #tpu.memory_space<vmem>>, vector<2x2048xbf16>
    %c0_1 = arith.constant 0 : index
    %c0_2 = arith.constant 0 : index
    %1 = vector.load %arg2[%c0_1, %c0_2] : memref<2048x128xbf16, #tpu.memory_space<vmem>>, vector<2048x128xbf16>
    %cst = arith.constant dense<0.000000e+00> : vector<2x128xf32>
    %2 = tpu.matmul %0, %1, %cst {dimension_numbers = #tpu.dot_dimension_numbers<[1], [0], [0], [1], [0, 0, 1, 1], [], []>} : vector<2x2048xbf16>, vector<2048x128xbf16>, vector<2x128xf32> -> vector<2x128xf32>
    %cst_3 = arith.constant 5.000000e-01 : f32
    %3 = vector.broadcast %cst_3 : f32 to vector<2x128xf32>
    %4 = arith.mulf %3, %2 : vector<2x128xf32>
    %5 = math.tanh %4 : vector<2x128xf32>
    %cst_4 = arith.constant 1.000000e+00 : f32
    %6 = vector.broadcast %cst_4 : f32 to vector<2x128xf32>
    %7 = arith.addf %5, %6 : vector<2x128xf32>
    %cst_5 = arith.constant 5.000000e-01 : f32
    %8 = vector.broadcast %cst_5 : f32 to vector<2x128xf32>
    %9 = arith.mulf %8, %7 : vector<2x128xf32>
    %c0_6 = arith.constant 0 : index
    %c0_7 = arith.constant 0 : index
    %10 = vector.load %arg3[%c0_6, %c0_7] : memref<2x128xf32, #tpu.memory_space<vmem>>, vector<2x128xf32>
    tpu.vector_store %arg3[%c0_6, %c0_7], %9 {strides = array<i32>} : memref<2x128xf32, #tpu.memory_space<vmem>>, vector<2x128xf32>,
    return
  }
  func.func @transform_0(%arg0: i32) -> (i32, i32) {
    %c0_i32 = arith.constant 0 : i32
    %c0_i32_0 = arith.constant 0 : i32
    return %arg0, %c0_i32 : i32, i32
  }
  func.func @transform_1(%arg0: i32) -> (i32, i32) {
    %c0_i32 = arith.constant 0 : i32
    %c0_i32_0 = arith.constant 0 : i32
    %c0_i32_1 = arith.constant 0 : i32
    return %c0_i32, %c0_i32_0 : i32, i32
  }
  func.func @transform_2(%arg0: i32) -> (i32, i32) {
    %c0_i32 = arith.constant 0 : i32
    %c0_i32_0 = arith.constant 0 : i32
    return %arg0, %c0_i32 : i32, i32
  }
}

</mosaic_0001>

<llo_original>
// kernel: discriminator_forward.5
$region0: #{discriminator_forward.5}
  #allocation0 [shape = 'u32[]', space=smem, size = 0x4, offset = 0x4, fixed_abs, tag = 'smem constant byte address 0x4 - core index']
  #allocation1 [shape = 'u32[144,128]{1,0:T(1,128)}', space=vmem, size = 0x12000, scoped, tag = 'internal scratch']
  %s0 = inlined_call_operand.vmem [shape: bf16[2048,128], index: 0, kind: input, shape index: {}]
  %s1 = inlined_call_operand.vmem [shape: bf16[128,128], index: 1, kind: input, shape index: {}]
  %s2 = inlined_call_operand.vmem [shape: bf16[2048,128], index: 2, kind: output, shape index: {}]
  %s3 = sld [smem:[#allocation0]]
  $region41: #{discriminator_forward.5} parent=0
    _
  %s5 = ssub.s32 1, %s3
  %s6 = scalar_select 0, %s5, %s3
  loop: start=0, step=1, limit=4
  $region2: #{discriminator_forward.5} parent=0 // loop_pre_header
    _
  $region3: #{discriminator_forward.5} parent=0 // loop_header
    %s8 = sphi 0, %s12
    %p9 = scmp.ge.s32.totalorder %s8, 4
    %s18 = sphi 0, %s20
    %s21 = sphi 0, %s18
    %s22 = sphi 0, %s21
    %s38 = sphi 0, %s22
    %s42 = sphi 0, %s42
    %s44 = sphi 0, %s42
    %s45 = sphi 0, %s44
    %s59 = sphi 0, %s45
    %s65 = sphi 0, %s67
    %s68 = sphi 0, %s65
    %s69 = sphi 0, %s68
    %s85 = sphi 0, %s69
  $region4: #{discriminator_forward.5} parent=0 // loop_header_branch
    %11 = sbr.rel (%p9) target = $region8
  $region5: #{discriminator_forward.5} parent=0 // loop_body
    %s13 = ssub.s32 %s8, 1
    %s14 = ssub.s32 %s8, 2
    %s15 = sadd.s32 %s8, 1
    %s16 = ssub.s32 %s8, %s15
    %p17 = scmp.eq.s32.totalorder %s16, 0
    %s19 = sadd.s32 %s18, 1
    %s20 = scalar_select %p17, %s18, %s19
    %p23 = pneg %p17
    %p24 = scmp.eq.s32.totalorder %s8, 1
    %p25 = por %p23, %p24
    %p26 = scmp.ne.s32.totalorder %s18, %s21
    %p27 = scmp.eq.s32.totalorder %s8, 0
    %p28 = por %p26, %p27
    %p29 = scmp.ne.s32.totalorder %s18, %s21
    %p30 = scmp.eq.s32.totalorder %s13, 1
    %p31 = por %p29, %p30
    %p32 = scmp.ne.s32.totalorder %s21, %s22
    %p33 = scmp.eq.s32.totalorder %s13, 0
    %p34 = por %p32, %p33
    %p35 = scmp.ne.s32.totalorder %s21, %s22
    %p36 = scmp.eq.s32.totalorder %s14, 1
    %p37 = por %p35, %p36
    %p39 = scmp.ne.s32.totalorder %s22, %s38
    %p40 = scmp.eq.s32.totalorder %s14, 0
    %p41 = por %p39, %p40
    %s43 = sadd.s32 %s42, 1
    %p46 = scmp.eq.s32.totalorder %s8, 1
    %p47 = scmp.ne.s32.totalorder %s42, %s44
    %p48 = scmp.eq.s32.totalorder %s8, 0
    %p49 = por %p47, %p48
    %p50 = scmp.ne.s32.totalorder %s42, %s44
    %p51 = scmp.eq.s32.totalorder %s13, 1
    %p52 = por %p50, %p51
    %p53 = scmp.ne.s32.totalorder %s44, %s45
    %p54 = scmp.eq.s32.totalorder %s13, 0
    %p55 = por %p53, %p54
    %p56 = scmp.ne.s32.totalorder %s44, %s45
    %p57 = scmp.eq.s32.totalorder %s14, 1
    %p58 = por %p56, %p57
    %p60 = scmp.ne.s32.totalorder %s45, %s59
    %p61 = scmp.eq.s32.totalorder %s14, 0
    %p62 = por %p60, %p61
    %s63 = ssub.s32 %s8, %s15
    %p64 = scmp.eq.s32.totalorder %s63, 0
    %s66 = sadd.s32 %s65, 1
    %s67 = scalar_select %p64, %s65, %s66
    %p70 = pneg %p64
    %p71 = scmp.eq.s32.totalorder %s8, 1
    %p72 = por %p70, %p71
    %p73 = scmp.ne.s32.totalorder %s65, %s68
    %p74 = scmp.eq.s32.totalorder %s8, 0
    %p75 = por %p73, %p74
    %p76 = scmp.ne.s32.totalorder %s65, %s68
    %p77 = scmp.eq.s32.totalorder %s13, 1
    %p78 = por %p76, %p77
    %p79 = scmp.ne.s32.totalorder %s68, %s69
    %p80 = scmp.eq.s32.totalorder %s13, 0
    %p81 = por %p79, %p80
    %p82 = scmp.ne.s32.totalorder %s68, %s69
    %p83 = scmp.eq.s32.totalorder %s14, 1
    %p84 = por %p82, %p83
    %p86 = scmp.ne.s32.totalorder %s69, %s85
    %p87 = scmp.eq.s32.totalorder %s14, 0
    %p88 = por %p86, %p87
    %p89 = scmp.le.s32.totalorder 1, %s8
    %p90 = scmp.lt.s32.totalorder %s8, 3
    %p91 = pnand %p89, %p90
    %p92 = pneg %p91
    // Predicated region
    $region9: #{discriminator_forward.5} parent=5 // pred_check
      _
    $region10: #{discriminator_forward.5} parent=5 // pred_check_branch
      %94 = sbr.rel (%p91) target = $region12
    $region11: #{discriminator_forward.5} parent=5 // pred_region
      %s95 = ssub.s32 %s8, 1
      // Predicated region
      $region13: #{discriminator_forward.5} parent=11 // pred_check
        %p96 = pneg %p55
      $region14: #{discriminator_forward.5} parent=11 // pred_check_branch
        %98 = sbr.rel (%p96) target = $region16
      $region15: #{discriminator_forward.5} parent=11 // pred_region
        _
      $region16: #{discriminator_forward.5} parent=11 // pred_fallthru
        _
    $region12: #{discriminator_forward.5} parent=5 // pred_fallthru
      _
    %p99 = scmp.lt.s32.totalorder %s8, 2
    // Predicated region
    $region17: #{discriminator_forward.5} parent=5 // pred_check
      %p100 = pneg %p99
    $region18: #{discriminator_forward.5} parent=5 // pred_check_branch
      %102 = sbr.rel (%p100) target = $region20
    $region19: #{discriminator_forward.5} parent=5 // pred_region
      // Predicated region
      $region21: #{discriminator_forward.5} parent=19 // pred_check
        %p103 = pneg %p28
      $region22: #{discriminator_forward.5} parent=19 // pred_check_branch
        %105 = sbr.rel (%p103) target = $region24
      $region23: #{discriminator_forward.5} parent=19 // pred_region
        %s106 = smul.u32 128, %s8
        %p107 = scmp.lt.s32.totalorder %s106, 255
        %s108 = scalar_select %p107, %s106, 255
        %s109 = smul.addr %s108, 4
        %s110 = scalar_lea.vmem %s0, %s109
        %s111 = smul.u32 128, %s8
      $region24: #{discriminator_forward.5} parent=19 // pred_fallthru
        _
    $region20: #{discriminator_forward.5} parent=5 // pred_fallthru
      _
    %p112 = scmp.le.s32.totalorder 1, %s8
    %p113 = scmp.lt.s32.totalorder %s8, 3
    %p114 = pnand %p112, %p113
    %p115 = pneg %p114
    // Predicated region
    $region25: #{discriminator_forward.5} parent=5 // pred_check
      _
    $region26: #{discriminator_forward.5} parent=5 // pred_check_branch
      %117 = sbr.rel (%p114) target = $region28
    $region27: #{discriminator_forward.5} parent=5 // pred_region
      %s118 = ssub.s32 %s8, 1
      %s119 = smul.u32 128, %s13
      %p120 = scmp.lt.s32.totalorder %s119, 255
      %s121 = scalar_select %p120, %s119, 255
      %s122 = smul.addr %s121, 4
      %s123 = scalar_lea.vmem %s0, %s122
      %p124 = pneg %p34
      %p125 = pneg %p31
      %p126 = pneg %p55
      %p127 = pneg %p52
      %p128 = pneg %p81
      %p129 = pneg %p78
      %s130 = smul.u32 128, %s13
      %p131 = scmp.lt.s32.totalorder %s130, 255
      %s132 = scalar_select %p131, %s130, 255
      %s133 = smul.addr %s132, 4
      %s134 = scalar_lea.vmem %s2, %s133
      %s135 = smul.u32 128, %s13
      %p136 = scmp.lt.s32.totalorder %s135, 255
      %s137 = scalar_select %p136, %s135, 255
      %s138 = smul.addr %s137, 4
      %s139 = scalar_lea.vmem %s0, %s138
      %s140 = smul.u32 128, %s13
      %s141 = smul.u32 128, %s13
      %p142 = scmp.lt.s32.totalorder %s141, 255
      %s143 = scalar_select %p142, %s141, 255
      %s144 = smul.addr %s143, 4
      %s145 = scalar_lea.vmem %s2, %s144
      %s146 = smul.u32 128, %s13
      %v148 = vld [vmem:[%s139] sm:$0xf]
      %v149 = vld [vmem:[%s139 + $0x4] sm:$0xf]
      %v150 = vld [vmem:[%s139 + $0x8] sm:$0xf]
      %v151 = vld [vmem:[%s139 + $0xc] sm:$0xf]
      %v152 = vld [vmem:[%s139 + $0x10] sm:$0xf]
      %v153 = vld [vmem:[%s139 + $0x14] sm:$0xf]
      %v154 = vld [vmem:[%s139 + $0x18] sm:$0xf]
      %v155 = vld [vmem:[%s139 + $0x1c] sm:$0xf]
      %v156 = vld [vmem:[%s139 + $0x20] sm:$0xf]
      %v157 = vld [vmem:[%s139 + $0x24] sm:$0xf]
      %v158 = vld [vmem:[%s139 + $0x28] sm:$0xf]
      %v159 = vld [vmem:[%s139 + $0x2c] sm:$0xf]
      %v160 = vld [vmem:[%s139 + $0x30] sm:$0xf]
      %v161 = vld [vmem:[%s139 + $0x34] sm:$0xf]
      %v162 = vld [vmem:[%s139 + $0x38] sm:$0xf]
      %v163 = vld [vmem:[%s139 + $0x3c] sm:$0xf]
      %v164 = vld [vmem:[%s139 + $0x40] sm:$0xf]
      %v165 = vld [vmem:[%s139 + $0x44] sm:$0xf]
      %v166 = vld [vmem:[%s139 + $0x48] sm:$0xf]
      %v167 = vld [vmem:[%s139 + $0x4c] sm:$0xf]
      %v168 = vld [vmem:[%s139 + $0x50] sm:$0xf]
      %v169 = vld [vmem:[%s139 + $0x54] sm:$0xf]
      %v170 = vld [vmem:[%s139 + $0x58] sm:$0xf]
      %v171 = vld [vmem:[%s139 + $0x5c] sm:$0xf]
      %v172 = vld [vmem:[%s139 + $0x60] sm:$0xf]
      %v173 = vld [vmem:[%s139 + $0x64] sm:$0xf]
      %v174 = vld [vmem:[%s139 + $0x68] sm:$0xf]
      %v175 = vld [vmem:[%s139 + $0x6c] sm:$0xf]
      %v176 = vld [vmem:[%s139 + $0x70] sm:$0xf]
      %v177 = vld [vmem:[%s139 + $0x74] sm:$0xf]
      %v178 = vld [vmem:[%s139 + $0x78] sm:$0xf]
      %v179 = vld [vmem:[%s139 + $0x7c] sm:$0xf]
      %v180 = vld [vmem:[%s139 + $0x80] sm:$0xf]
      %v181 = vld [vmem:[%s139 + $0x84] sm:$0xf]
      %v182 = vld [vmem:[%s139 + $0x88] sm:$0xf]
      %v183 = vld [vmem:[%s139 + $0x8c] sm:$0xf]
      %v184 = vld [vmem:[%s139 + $0x90] sm:$0xf]
      %v185 = vld [vmem:[%s139 + $0x94] sm:$0xf]
      %v186 = vld [vmem:[%s139 + $0x98] sm:$0xf]
      %v187 = vld [vmem:[%s139 + $0x9c] sm:$0xf]
      %v188 = vld [vmem:[%s139 + $0xa0] sm:$0xf]
      %v189 = vld [vmem:[%s139 + $0xa4] sm:$0xf]
      %v190 = vld [vmem:[%s139 + $0xa8] sm:$0xf]
      %v191 = vld [vmem:[%s139 + $0xac] sm:$0xf]
      %v192 = vld [vmem:[%s139 + $0xb0] sm:$0xf]
      %v193 = vld [vmem:[%s139 + $0xb4] sm:$0xf]
      %v194 = vld [vmem:[%s139 + $0xb8] sm:$0xf]
      %v195 = vld [vmem:[%s139 + $0xbc] sm:$0xf]
      %v196 = vld [vmem:[%s139 + $0xc0] sm:$0xf]
      %v197 = vld [vmem:[%s139 + $0xc4] sm:$0xf]
      %v198 = vld [vmem:[%s139 + $0xc8] sm:$0xf]
      %v199 = vld [vmem:[%s139 + $0xcc] sm:$0xf]
      %v200 = vld [vmem:[%s139 + $0xd0] sm:$0xf]
      %v201 = vld [vmem:[%s139 + $0xd4] sm:$0xf]
      %v202 = vld [vmem:[%s139 + $0xd8] sm:$0xf]
      %v203 = vld [vmem:[%s139 + $0xdc] sm:$0xf]
      %v204 = vld [vmem:[%s139 + $0xe0] sm:$0xf]
      %v205 = vld [vmem:[%s139 + $0xe4] sm:$0xf]
      %v206 = vld [vmem:[%s139 + $0xe8] sm:$0xf]
      %v207 = vld [vmem:[%s139 + $0xec] sm:$0xf]
      %v208 = vld [vmem:[%s139 + $0xf0] sm:$0xf]
      %v209 = vld [vmem:[%s139 + $0xf4] sm:$0xf]
      %v210 = vld [vmem:[%s139 + $0xf8] sm:$0xf]
      %v211 = vld [vmem:[%s139 + $0xfc] sm:$0xf]
      %v212 = vld [vmem:[%s139 + $0x100] sm:$0xf]
      %v213 = vld [vmem:[%s139 + $0x104] sm:$0xf]
      %v214 = vld [vmem:[%s139 + $0x108] sm:$0xf]
      %v215 = vld [vmem:[%s139 + $0x10c] sm:$0xf]
      %v216 = vld [vmem:[%s139 + $0x110] sm:$0xf]
      %v217 = vld [vmem:[%s139 + $0x114] sm:$0xf]
      %v218 = vld [vmem:[%s139 + $0x118] sm:$0xf]
      %v219 = vld [vmem:[%s139 + $0x11c] sm:$0xf]
      %v220 = vld [vmem:[%s139 + $0x120] sm:$0xf]
      %v221 = vld [vmem:[%s139 + $0x124] sm:$0xf]
      %v222 = vld [vmem:[%s139 + $0x128] sm:$0xf]
      %v223 = vld [vmem:[%s139 + $0x12c] sm:$0xf]
      %v224 = vld [vmem:[%s139 + $0x130] sm:$0xf]
      %v225 = vld [vmem:[%s139 + $0x134] sm:$0xf]
      %v226 = vld [vmem:[%s139 + $0x138] sm:$0xf]
      %v227 = vld [vmem:[%s139 + $0x13c] sm:$0xf]
      %v228 = vld [vmem:[%s139 + $0x140] sm:$0xf]
      %v229 = vld [vmem:[%s139 + $0x144] sm:$0xf]
      %v230 = vld [vmem:[%s139 + $0x148] sm:$0xf]
      %v231 = vld [vmem:[%s139 + $0x14c] sm:$0xf]
      %v232 = vld [vmem:[%s139 + $0x150] sm:$0xf]
      %v233 = vld [vmem:[%s139 + $0x154] sm:$0xf]
      %v234 = vld [vmem:[%s139 + $0x158] sm:$0xf]
      %v235 = vld [vmem:[%s139 + $0x15c] sm:$0xf]
      %v236 = vld [vmem:[%s139 + $0x160] sm:$0xf]
      %v237 = vld [vmem:[%s139 + $0x164] sm:$0xf]
      %v238 = vld [vmem:[%s139 + $0x168] sm:$0xf]
      %v239 = vld [vmem:[%s139 + $0x16c] sm:$0xf]
      %v240 = vld [vmem:[%s139 + $0x170] sm:$0xf]
      %v241 = vld [vmem:[%s139 + $0x174] sm:$0xf]
      %v242 = vld [vmem:[%s139 + $0x178] sm:$0xf]
      %v243 = vld [vmem:[%s139 + $0x17c] sm:$0xf]
      %v244 = vld [vmem:[%s139 + $0x180] sm:$0xf]
      %v245 = vld [vmem:[%s139 + $0x184] sm:$0xf]
      %v246 = vld [vmem:[%s139 + $0x188] sm:$0xf]
      %v247 = vld [vmem:[%s139 + $0x18c] sm:$0xf]
      %v248 = vld [vmem:[%s139 + $0x190] sm:$0xf]
      %v249 = vld [vmem:[%s139 + $0x194] sm:$0xf]
      %v250 = vld [vmem:[%s139 + $0x198] sm:$0xf]
      %v251 = vld [vmem:[%s139 + $0x19c] sm:$0xf]
      %v252 = vld [vmem:[%s139 + $0x1a0] sm:$0xf]
      %v253 = vld [vmem:[%s139 + $0x1a4] sm:$0xf]
      %v254 = vld [vmem:[%s139 + $0x1a8] sm:$0xf]
      %v255 = vld [vmem:[%s139 + $0x1ac] sm:$0xf]
      %v256 = vld [vmem:[%s139 + $0x1b0] sm:$0xf]
      %v257 = vld [vmem:[%s139 + $0x1b4] sm:$0xf]
      %v258 = vld [vmem:[%s139 + $0x1b8] sm:$0xf]
      %v259 = vld [vmem:[%s139 + $0x1bc] sm:$0xf]
      %v260 = vld [vmem:[%s139 + $0x1c0] sm:$0xf]
      %v261 = vld [vmem:[%s139 + $0x1c4] sm:$0xf]
      %v262 = vld [vmem:[%s139 + $0x1c8] sm:$0xf]
      %v263 = vld [vmem:[%s139 + $0x1cc] sm:$0xf]
      %v264 = vld [vmem:[%s139 + $0x1d0] sm:$0xf]
      %v265 = vld [vmem:[%s139 + $0x1d4] sm:$0xf]
      %v266 = vld [vmem:[%s139 + $0x1d8] sm:$0xf]
      %v267 = vld [vmem:[%s139 + $0x1dc] sm:$0xf]
      %v268 = vld [vmem:[%s139 + $0x1e0] sm:$0xf]
      %v269 = vld [vmem:[%s139 + $0x1e4] sm:$0xf]
      %v270 = vld [vmem:[%s139 + $0x1e8] sm:$0xf]
      %v271 = vld [vmem:[%s139 + $0x1ec] sm:$0xf]
      %v272 = vld [vmem:[%s139 + $0x1f0] sm:$0xf]
      %v273 = vld [vmem:[%s139 + $0x1f4] sm:$0xf]
      %v274 = vld [vmem:[%s139 + $0x1f8] sm:$0xf]
      %v275 = vld [vmem:[%s139 + $0x1fc] sm:$0xf]
      %v276 = vld [vmem:[%s1] sm:$0xf]
      %v277 = vld [vmem:[%s1 + $0x4] sm:$0xf]
      %v278 = vld [vmem:[%s1 + $0x8] sm:$0xf]
      %v279 = vld [vmem:[%s1 + $0xc] sm:$0xf]
      %v280 = vld [vmem:[%s1 + $0x10] sm:$0xf]
      %v281 = vld [vmem:[%s1 + $0x14] sm:$0xf]
      %v282 = vld [vmem:[%s1 + $0x18] sm:$0xf]
      %v283 = vld [vmem:[%s1 + $0x1c] sm:$0xf]
      %v284 = vld [vmem:[%s1 + $0x20] sm:$0xf]
      %v285 = vld [vmem:[%s1 + $0x24] sm:$0xf]
      %v286 = vld [vmem:[%s1 + $0x28] sm:$0xf]
      %v287 = vld [vmem:[%s1 + $0x2c] sm:$0xf]
      %v288 = vld [vmem:[%s1 + $0x30] sm:$0xf]
      %v289 = vld [vmem:[%s1 + $0x34] sm:$0xf]
      %v290 = vld [vmem:[%s1 + $0x38] sm:$0xf]
      %v291 = vld [vmem:[%s1 + $0x3c] sm:$0xf]
      %v420 = vunpack.c.l.b16 %v148
      %v421 = vunpack.c.l.b16 %v149
      %v422 = vunpack.c.l.b16 %v150
      %v423 = vunpack.c.l.b16 %v151
      %v424 = vunpack.c.l.b16 %v152
      %v425 = vunpack.c.l.b16 %v153
      %v426 = vunpack.c.l.b16 %v154
      %v427 = vunpack.c.l.b16 %v155
      %v428 = vunpack.c.l.b16 %v156
      %v429 = vunpack.c.l.b16 %v157
      %v430 = vunpack.c.l.b16 %v158
      %v431 = vunpack.c.l.b16 %v159
      %v432 = vunpack.c.l.b16 %v160
      %v433 = vunpack.c.l.b16 %v161
      %v434 = vunpack.c.l.b16 %v162
      %v435 = vunpack.c.l.b16 %v163
      %v436 = vunpack.c.l.b16 %v164
      %v437 = vunpack.c.l.b16 %v165
      %v438 = vunpack.c.l.b16 %v166
      %v439 = vunpack.c.l.b16 %v167
      %v440 = vunpack.c.l.b16 %v168
      %v441 = vunpack.c.l.b16 %v169
      %v442 = vunpack.c.l.b16 %v170
      %v443 = vunpack.c.l.b16 %v171
      %v444 = vunpack.c.l.b16 %v172
      %v445 = vunpack.c.l.b16 %v173
      %v446 = vunpack.c.l.b16 %v174
      %v447 = vunpack.c.l.b16 %v175
      %v448 = vunpack.c.l.b16 %v176
      %v449 = vunpack.c.l.b16 %v177
      %v450 = vunpack.c.l.b16 %v178
      %v451 = vunpack.c.l.b16 %v179
      %v452 = vunpack.c.l.b16 %v180
      %v453 = vunpack.c.l.b16 %v181
      %v454 = vunpack.c.l.b16 %v182
      %v455 = vunpack.c.l.b16 %v183
      %v456 = vunpack.c.l.b16 %v184
      %v457 = vunpack.c.l.b16 %v185
      %v458 = vunpack.c.l.b16 %v186
      %v459 = vunpack.c.l.b16 %v187
      %v460 = vunpack.c.l.b16 %v188
      %v461 = vunpack.c.l.b16 %v189
      %v462 = vunpack.c.l.b16 %v190
      %v463 = vunpack.c.l.b16 %v191
      %v464 = vunpack.c.l.b16 %v192
      %v465 = vunpack.c.l.b16 %v193
      %v466 = vunpack.c.l.b16 %v194
      %v467 = vunpack.c.l.b16 %v195
      %v468 = vunpack.c.l.b16 %v196
      %v469 = vunpack.c.l.b16 %v197
      %v470 = vunpack.c.l.b16 %v198
      %v471 = vunpack.c.l.b16 %v199
      %v472 = vunpack.c.l.b16 %v200
      %v473 = vunpack.c.l.b16 %v201
      %v474 = vunpack.c.l.b16 %v202
      %v475 = vunpack.c.l.b16 %v203
      %v476 = vunpack.c.l.b16 %v204
      %v477 = vunpack.c.l.b16 %v205
      %v478 = vunpack.c.l.b16 %v206
      %v479 = vunpack.c.l.b16 %v207
      %v480 = vunpack.c.l.b16 %v208
      %v481 = vunpack.c.l.b16 %v209
      %v482 = vunpack.c.l.b16 %v210
      %v483 = vunpack.c.l.b16 %v211
      %v484 = vunpack.c.l.b16 %v212
      %v485 = vunpack.c.l.b16 %v213
      %v486 = vunpack.c.l.b16 %v214
      %v487 = vunpack.c.l.b16 %v215
      %v488 = vunpack.c.l.b16 %v216
      %v489 = vunpack.c.l.b16 %v217
      %v490 = vunpack.c.l.b16 %v218
      %v491 = vunpack.c.l.b16 %v219
      %v492 = vunpack.c.l.b16 %v220
      %v493 = vunpack.c.l.b16 %v221
      %v494 = vunpack.c.l.b16 %v222
      %v495 = vunpack.c.l.b16 %v223
      %v496 = vunpack.c.l.b16 %v224
      %v497 = vunpack.c.l.b16 %v225
      %v498 = vunpack.c.l.b16 %v226
      %v499 = vunpack.c.l.b16 %v227
      %v500 = vunpack.c.l.b16 %v228
      %v501 = vunpack.c.l.b16 %v229
      %v502 = vunpack.c.l.b16 %v230
      %v503 = vunpack.c.l.b16 %v231
      %v504 = vunpack.c.l.b16 %v232
      %v505 = vunpack.c.l.b16 %v233
      %v506 = vunpack.c.l.b16 %v234
      %v507 = vunpack.c.l.b16 %v235
      %v508 = vunpack.c.l.b16 %v236
      %v509 = vunpack.c.l.b16 %v237
      %v510 = vunpack.c.l.b16 %v238
      %v511 = vunpack.c.l.b16 %v239
      %v512 = vunpack.c.l.b16 %v240
      %v513 = vunpack.c.l.b16 %v241
      %v514 = vunpack.c.l.b16 %v242
      %v515 = vunpack.c.l.b16 %v243
      %v516 = vunpack.c.l.b16 %v244
      %v517 = vunpack.c.l.b16 %v245
      %v518 = vunpack.c.l.b16 %v246
      %v519 = vunpack.c.l.b16 %v247
      %v520 = vunpack.c.l.b16 %v248
      %v521 = vunpack.c.l.b16 %v249
      %v522 = vunpack.c.l.b16 %v250
      %v523 = vunpack.c.l.b16 %v251
      %v524 = vunpack.c.l.b16 %v252
      %v525 = vunpack.c.l.b16 %v253
      %v526 = vunpack.c.l.b16 %v254
      %v527 = vunpack.c.l.b16 %v255
      %v528 = vunpack.c.l.b16 %v256
      %v529 = vunpack.c.l.b16 %v257
      %v530 = vunpack.c.l.b16 %v258
      %v531 = vunpack.c.l.b16 %v259
      %v532 = vunpack.c.l.b16 %v260
      %v533 = vunpack.c.l.b16 %v261
      %v534 = vunpack.c.l.b16 %v262
      %v535 = vunpack.c.l.b16 %v263
      %v536 = vunpack.c.l.b16 %v264
      %v537 = vunpack.c.l.b16 %v265
      %v538 = vunpack.c.l.b16 %v266
      %v539 = vunpack.c.l.b16 %v267
      %v540 = vunpack.c.l.b16 %v268
      %v541 = vunpack.c.l.b16 %v269
      %v542 = vunpack.c.l.b16 %v270
      %v543 = vunpack.c.l.b16 %v271
      %v544 = vunpack.c.l.b16 %v272
      %v545 = vunpack.c.l.b16 %v273
      %v546 = vunpack.c.l.b16 %v274
      %v547 = vunpack.c.l.b16 %v275
      %v548 = vpack.c.b16 %v421, %v420
      %v549 = vpack.c.b16 %v423, %v422
      %v550 = vpack.c.b16 %v425, %v424
      %v551 = vpack.c.b16 %v427, %v426
      %v552 = vpack.c.b16 %v429, %v428
      %v553 = vpack.c.b16 %v431, %v430
      %v554 = vpack.c.b16 %v433, %v432
      %v555 = vpack.c.b16 %v435, %v434
      %v556 = vpack.c.b16 %v437, %v436
      %v557 = vpack.c.b16 %v439, %v438
      %v558 = vpack.c.b16 %v441, %v440
      %v559 = vpack.c.b16 %v443, %v442
      %v560 = vpack.c.b16 %v445, %v444
      %v561 = vpack.c.b16 %v447, %v446
      %v562 = vpack.c.b16 %v449, %v448
      %v563 = vpack.c.b16 %v451, %v450
      %v564 = vpack.c.b16 %v453, %v452
      %v565 = vpack.c.b16 %v455, %v454
      %v566 = vpack.c.b16 %v457, %v456
      %v567 = vpack.c.b16 %v459, %v458
      %v568 = vpack.c.b16 %v461, %v460
      %v569 = vpack.c.b16 %v463, %v462
      %v570 = vpack.c.b16 %v465, %v464
      %v571 = vpack.c.b16 %v467, %v466
      %v572 = vpack.c.b16 %v469, %v468
      %v573 = vpack.c.b16 %v471, %v470
      %v574 = vpack.c.b16 %v473, %v472
      %v575 = vpack.c.b16 %v475, %v474
      %v576 = vpack.c.b16 %v477, %v476
      %v577 = vpack.c.b16 %v479, %v478
      %v578 = vpack.c.b16 %v481, %v480
      %v579 = vpack.c.b16 %v483, %v482
      %v580 = vpack.c.b16 %v485, %v484
      %v581 = vpack.c.b16 %v487, %v486
      %v582 = vpack.c.b16 %v489, %v488
      %v583 = vpack.c.b16 %v491, %v490
      %v584 = vpack.c.b16 %v493, %v492
      %v585 = vpack.c.b16 %v495, %v494
      %v586 = vpack.c.b16 %v497, %v496
      %v587 = vpack.c.b16 %v499, %v498
      %v588 = vpack.c.b16 %v501, %v500
      %v589 = vpack.c.b16 %v503, %v502
      %v590 = vpack.c.b16 %v505, %v504
      %v591 = vpack.c.b16 %v507, %v506
      %v592 = vpack.c.b16 %v509, %v508
      %v593 = vpack.c.b16 %v511, %v510
      %v594 = vpack.c.b16 %v513, %v512
      %v595 = vpack.c.b16 %v515, %v514
      %v596 = vpack.c.b16 %v517, %v516
      %v597 = vpack.c.b16 %v519, %v518
      %v598 = vpack.c.b16 %v521, %v520
      %v599 = vpack.c.b16 %v523, %v522
      %v600 = vpack.c.b16 %v525, %v524
      %v601 = vpack.c.b16 %v527, %v526
      %v602 = vpack.c.b16 %v529, %v528
      %v603 = vpack.c.b16 %v531, %v530
      %v604 = vpack.c.b16 %v533, %v532
      %v605 = vpack.c.b16 %v535, %v534
      %v606 = vpack.c.b16 %v537, %v536
      %v607 = vpack.c.b16 %v539, %v538
      %v608 = vpack.c.b16 %v541, %v540
      %v609 = vpack.c.b16 %v543, %v542
      %v610 = vpack.c.b16 %v545, %v544
      %v611 = vpack.c.b16 %v547, %v546
      %v692 = vunpack.c.l.b16 %v276
      %v693 = vunpack.c.l.b16 %v277
      %v694 = vunpack.c.l.b16 %v278
      %v695 = vunpack.c.l.b16 %v279
      %v696 = vunpack.c.l.b16 %v280
      %v697 = vunpack.c.l.b16 %v281
      %v698 = vunpack.c.l.b16 %v282
      %v699 = vunpack.c.l.b16 %v283
      %v700 = vunpack.c.l.b16 %v284
      %v701 = vunpack.c.l.b16 %v285
      %v702 = vunpack.c.l.b16 %v286
      %v703 = vunpack.c.l.b16 %v287
      %v704 = vunpack.c.l.b16 %v288
      %v705 = vunpack.c.l.b16 %v289
      %v706 = vunpack.c.l.b16 %v290
      %v707 = vunpack.c.l.b16 %v291
      %v708 = vpack.c.b16 %v693, %v692
      %v709 = vpack.c.b16 %v695, %v694
      %v710 = vpack.c.b16 %v697, %v696
      %v711 = vpack.c.b16 %v699, %v698
      %v712 = vpack.c.b16 %v701, %v700
      %v713 = vpack.c.b16 %v703, %v702
      %v714 = vpack.c.b16 %v705, %v704
      %v715 = vpack.c.b16 %v707, %v706
      %724 = vmatprep.subr.bf16.mxu0 0
      %725 = vmatpush1.bf16.msra.mxu0 %v708
      %726 = vmatprep.subr.bf16.mxu0 0
      %727 = vmatpush1.bf16.msra.mxu0 %v709
      %728 = vmatprep.subr.bf16.mxu0 0
      %729 = vmatpush1.bf16.msra.mxu0 %v710
      %730 = vmatprep.subr.bf16.mxu0 0
      %731 = vmatpush1.bf16.msra.mxu0 %v711
      %732 = vmatprep.subr.bf16.mxu0 0
      %733 = vmatpush1.bf16.msra.mxu0 %v712
      %734 = vmatprep.subr.bf16.mxu0 0
      %735 = vmatpush1.bf16.msra.mxu0 %v713
      %736 = vmatprep.subr.bf16.mxu0 0
      %737 = vmatpush1.bf16.msra.mxu0 %v714
      %738 = vmatprep.subr.bf16.mxu0 0
      %739 = vmatpush1.bf16.msra.mxu0 %v715
      %740 = vmatprep.subr.bf16.mxu0 0
      %741 = vmatpush1.bf16.msra.mxu0 0
      %742 = vmatprep.subr.bf16.mxu0 0
      %743 = vmatpush1.bf16.msra.mxu0 0
      %744 = vmatprep.subr.bf16.mxu0 0
      %745 = vmatpush1.bf16.msra.mxu0 0
      %746 = vmatprep.subr.bf16.mxu0 0
      %747 = vmatpush1.bf16.msra.mxu0 0
      %748 = vmatprep.subr.bf16.mxu0 0
      %749 = vmatpush1.bf16.msra.mxu0 0
      %750 = vmatprep.subr.bf16.mxu0 0
      %751 = vmatpush1.bf16.msra.mxu0 0
      %752 = vmatprep.subr.bf16.mxu0 0
      %753 = vmatpush1.bf16.msra.mxu0 0
      %754 = vmatprep.subr.bf16.mxu0 0
      %755 = vmatpush1.bf16.msra.mxu0 0
      %756 = vmatprep.mubr.bf16.mxu0 0
      %757 = vmatmul.mubr.bf16.gmra.mrb[0].mxu0 %v548
      %v758 = vpop.f32.mrb[0].mxu0
      %v759 = vadd.f32 0.0, %v758
      %v760 = vpop.f32.mrb[0].mxu0
      %v761 = vpop.f32.mrb[0].mxu0
      %v762 = vadd.f32 0.0, %v761
      %v763 = vpop.f32.mrb[0].mxu0
      %764 = vmatprep.mubr.bf16.mxu0 0
      %765 = vmatmul.mubr.bf16.gmra.mrb[0].mxu0 %v549
      %v766 = vpop.f32.mrb[0].mxu0
      %v767 = vadd.f32 0.0, %v766
      %v768 = vpop.f32.mrb[0].mxu0
      %v769 = vpop.f32.mrb[0].mxu0
      %v770 = vadd.f32 0.0, %v769
      %v771 = vpop.f32.mrb[0].mxu0
      %772 = vmatprep.mubr.bf16.mxu0 0
      %773 = vmatmul.mubr.bf16.gmra.mrb[0].mxu0 %v550
      %v774 = vpop.f32.mrb[0].mxu0
      %v775 = vadd.f32 0.0, %v774
      %v776 = vpop.f32.mrb[0].mxu0
      %v777 = vpop.f32.mrb[0].mxu0
      %v778 = vadd.f32 0.0, %v777
      %v779 = vpop.f32.mrb[0].mxu0
      %780 = vmatprep.mubr.bf16.mxu0 0
      %781 = vmatmul.mubr.bf16.gmra.mrb[0].mxu0 %v551
      %v782 = vpop.f32.mrb[0].mxu0
      %v783 = vadd.f32 0.0, %v782
      %v784 = vpop.f32.mrb[0].mxu0
      %v785 = vpop.f32.mrb[0].mxu0
      %v786 = vadd.f32 0.0, %v785
      %v787 = vpop.f32.mrb[0].mxu0
      %788 = vmatprep.mubr.bf16.mxu0 0
      %789 = vmatmul.mubr.bf16.gmra.mrb[0].mxu0 %v552
      %v790 = vpop.f32.mrb[0].mxu0
      %v791 = vadd.f32 0.0, %v790
      %v792 = vpop.f32.mrb[0].mxu0
      %v793 = vpop.f32.mrb[0].mxu0
      %v794 = vadd.f32 0.0, %v793
      %v795 = vpop.f32.mrb[0].mxu0
      %796 = vmatprep.mubr.bf16.mxu0 0
      %797 = vmatmul.mubr.bf16.gmra.mrb[0].mxu0 %v553
      %v798 = vpop.f32.mrb[0].mxu0
      %v799 = vadd.f32 0.0, %v798
      %v800 = vpop.f32.mrb[0].mxu0
      %v801 = vpop.f32.mrb[0].mxu0
      %v802 = vadd.f32 0.0, %v801
      %v803 = vpop.f32.mrb[0].mxu0
      %804 = vmatprep.mubr.bf16.mxu0 0
      %805 = vmatmul.mubr.bf16.gmra.mrb[0].mxu0 %v554
      %v806 = vpop.f32.mrb[0].mxu0
      %v807 = vadd.f32 0.0, %v806
      %v808 = vpop.f32.mrb[0].mxu0
      %v809 = vpop.f32.mrb[0].mxu0
      %v810 = vadd.f32 0.0, %v809
      %v811 = vpop.f32.mrb[0].mxu0
      %812 = vmatprep.mubr.bf16.mxu0 0
      %813 = vmatmul.mubr.bf16.gmra.mrb[0].mxu0 %v555
      %v814 = vpop.f32.mrb[0].mxu0
      %v815 = vadd.f32 0.0, %v814
      %v816 = vpop.f32.mrb[0].mxu0
      %v817 = vpop.f32.mrb[0].mxu0
      %v818 = vadd.f32 0.0, %v817
      %v819 = vpop.f32.mrb[0].mxu0
      %820 = vmatprep.mubr.bf16.mxu0 0
      %821 = vmatmul.mubr.bf16.gmra.mrb[0].mxu0 %v556
      %v822 = vpop.f32.mrb[0].mxu0
      %v823 = vadd.f32 0.0, %v822
      %v824 = vpop.f32.mrb[0].mxu0
      %v825 = vpop.f32.mrb[0].mxu0
      %v826 = vadd.f32 0.0, %v825
      %v827 = vpop.f32.mrb[0].mxu0
      %828 = vmatprep.mubr.bf16.mxu0 0
      %829 = vmatmul.mubr.bf16.gmra.mrb[0].mxu0 %v557
      %v830 = vpop.f32.mrb[0].mxu0
      %v831 = vadd.f32 0.0, %v830
      %v832 = vpop.f32.mrb[0].mxu0
      %v833 = vpop.f32.mrb[0].mxu0
      %v834 = vadd.f32 0.0, %v833
      %v835 = vpop.f32.mrb[0].mxu0
      %836 = vmatprep.mubr.bf16.mxu0 0
      %837 = vmatmul.mubr.bf16.gmra.mrb[0].mxu0 %v558
      %v838 = vpop.f32.mrb[0].mxu0
      %v839 = vadd.f32 0.0, %v838
      %v840 = vpop.f32.mrb[0].mxu0
      %v841 = vpop.f32.mrb[0].mxu0
      %v842 = vadd.f32 0.0, %v841
      %v843 = vpop.f32.mrb[0].mxu0
      %844 = vmatprep.mubr.bf16.mxu0 0
      %845 = vmatmul.mubr.bf16.gmra.mrb[0].mxu0 %v559
      %v846 = vpop.f32.mrb[0].mxu0
      %v847 = vadd.f32 0.0, %v846
      %v848 = vpop.f32.mrb[0].mxu0
      %v849 = vpop.f32.mrb[0].mxu0
      %v850 = vadd.f32 0.0, %v849
      %v851 = vpop.f32.mrb[0].mxu0
      %852 = vmatprep.mubr.bf16.mxu0 0
      %853 = vmatmul.mubr.bf16.gmra.mrb[0].mxu0 %v560
      %v854 = vpop.f32.mrb[0].mxu0
      %v855 = vadd.f32 0.0, %v854
      %v856 = vpop.f32.mrb[0].mxu0
      %v857 = vpop.f32.mrb[0].mxu0
      %v858 = vadd.f32 0.0, %v857
      %v859 = vpop.f32.mrb[0].mxu0
      %860 = vmatprep.mubr.bf16.mxu0 0
      %861 = vmatmul.mubr.bf16.gmra.mrb[0].mxu0 %v561
      %v862 = vpop.f32.mrb[0].mxu0
      %v863 = vadd.f32 0.0, %v862
      %v864 = vpop.f32.mrb[0].mxu0
      %v865 = vpop.f32.mrb[0].mxu0
      %v866 = vadd.f32 0.0, %v865
      %v867 = vpop.f32.mrb[0].mxu0
      %868 = vmatprep.mubr.bf16.mxu0 0
      %869 = vmatmul.mubr.bf16.gmra.mrb[0].mxu0 %v562
      %v870 = vpop.f32.mrb[0].mxu0
      %v871 = vadd.f32 0.0, %v870
      %v872 = vpop.f32.mrb[0].mxu0
      %v873 = vpop.f32.mrb[0].mxu0
      %v874 = vadd.f32 0.0, %v873
      %v875 = vpop.f32.mrb[0].mxu0
      %876 = vmatprep.mubr.bf16.mxu0 0
      %877 = vmatmul.mubr.bf16.gmra.mrb[0].mxu0 %v563
      %v878 = vpop.f32.mrb[0].mxu0
      %v879 = vadd.f32 0.0, %v878
      %v880 = vpop.f32.mrb[0].mxu0
      %v881 = vpop.f32.mrb[0].mxu0
      %v882 = vadd.f32 0.0, %v881
      %v883 = vpop.f32.mrb[0].mxu0
      %884 = vmatprep.mubr.bf16.mxu0 0
      %885 = vmatmul.mubr.bf16.gmra.mrb[0].mxu0 %v564
      %v886 = vpop.f32.mrb[0].mxu0
      %v887 = vadd.f32 0.0, %v886
      %v888 = vpop.f32.mrb[0].mxu0
      %v889 = vpop.f32.mrb[0].mxu0
      %v890 = vadd.f32 0.0, %v889
      %v891 = vpop.f32.mrb[0].mxu0
      %892 = vmatprep.mubr.bf16.mxu0 0
      %893 = vmatmul.mubr.bf16.gmra.mrb[0].mxu0 %v565
      %v894 = vpop.f32.mrb[0].mxu0
      %v895 = vadd.f32 0.0, %v894
      %v896 = vpop.f32.mrb[0].mxu0
      %v897 = vpop.f32.mrb[0].mxu0
      %v898 = vadd.f32 0.0, %v897
      %v899 = vpop.f32.mrb[0].mxu0
      %900 = vmatprep.mubr.bf16.mxu0 0
      %901 = vmatmul.mubr.bf16.gmra.mrb[0].mxu0 %v566
      %v902 = vpop.f32.mrb[0].mxu0
      %v903 = vadd.f32 0.0, %v902
      %v904 = vpop.f32.mrb[0].mxu0
      %v905 = vpop.f32.mrb[0].mxu0
      %v906 = vadd.f32 0.0, %v905
      %v907 = vpop.f32.mrb[0].mxu0
      %908 = vmatprep.mubr.bf16.mxu0 0
      %909 = vmatmul.mubr.bf16.gmra.mrb[0].mxu0 %v567
      %v910 = vpop.f32.mrb[0].mxu0
      %v911 = vadd.f32 0.0, %v910
      %v912 = vpop.f32.mrb[0].mxu0
      %v913 = vpop.f32.mrb[0].mxu0
      %v914 = vadd.f32 0.0, %v913
      %v915 = vpop.f32.mrb[0].mxu0
      %916 = vmatprep.mubr.bf16.mxu0 0
      %917 = vmatmul.mubr.bf16.gmra.mrb[0].mxu0 %v568
      %v918 = vpop.f32.mrb[0].mxu0
      %v919 = vadd.f32 0.0, %v918
      %v920 = vpop.f32.mrb[0].mxu0
      %v921 = vpop.f32.mrb[0].mxu0
      %v922 = vadd.f32 0.0, %v921
      %v923 = vpop.f32.mrb[0].mxu0
      %924 = vmatprep.mubr.bf16.mxu0 0
      %925 = vmatmul.mubr.bf16.gmra.mrb[0].mxu0 %v569
      %v926 = vpop.f32.mrb[0].mxu0
      %v927 = vadd.f32 0.0, %v926
      %v928 = vpop.f32.mrb[0].mxu0
      %v929 = vpop.f32.mrb[0].mxu0
      %v930 = vadd.f32 0.0, %v929
      %v931 = vpop.f32.mrb[0].mxu0
      %932 = vmatprep.mubr.bf16.mxu0 0
      %933 = vmatmul.mubr.bf16.gmra.mrb[0].mxu0 %v570
      %v934 = vpop.f32.mrb[0].mxu0
      %v935 = vadd.f32 0.0, %v934
      %v936 = vpop.f32.mrb[0].mxu0
      %v937 = vpop.f32.mrb[0].mxu0
      %v938 = vadd.f32 0.0, %v937
      %v939 = vpop.f32.mrb[0].mxu0
      %940 = vmatprep.mubr.bf16.mxu0 0
      %941 = vmatmul.mubr.bf16.gmra.mrb[0].mxu0 %v571
      %v942 = vpop.f32.mrb[0].mxu0
      %v943 = vadd.f32 0.0, %v942
      %v944 = vpop.f32.mrb[0].mxu0
      %v945 = vpop.f32.mrb[0].mxu0
      %v946 = vadd.f32 0.0, %v945
      %v947 = vpop.f32.mrb[0].mxu0
      %948 = vmatprep.mubr.bf16.mxu0 0
      %949 = vmatmul.mubr.bf16.gmra.mrb[0].mxu0 %v572
      %v950 = vpop.f32.mrb[0].mxu0
      %v951 = vadd.f32 0.0, %v950
      %v952 = vpop.f32.mrb[0].mxu0
      %v953 = vpop.f32.mrb[0].mxu0
      %v954 = vadd.f32 0.0, %v953
      %v955 = vpop.f32.mrb[0].mxu0
      %956 = vmatprep.mubr.bf16.mxu0 0
      %957 = vmatmul.mubr.bf16.gmra.mrb[0].mxu0 %v573
      %v958 = vpop.f32.mrb[0].mxu0
      %v959 = vadd.f32 0.0, %v958
      %v960 = vpop.f32.mrb[0].mxu0
      %v961 = vpop.f32.mrb[0].mxu0
      %v962 = vadd.f32 0.0, %v961
      %v963 = vpop.f32.mrb[0].mxu0
      %964 = vmatprep.mubr.bf16.mxu0 0
      %965 = vmatmul.mubr.bf16.gmra.mrb[0].mxu0 %v574
      %v966 = vpop.f32.mrb[0].mxu0
      %v967 = vadd.f32 0.0, %v966
      %v968 = vpop.f32.mrb[0].mxu0
      %v969 = vpop.f32.mrb[0].mxu0
      %v970 = vadd.f32 0.0, %v969
      %v971 = vpop.f32.mrb[0].mxu0
      %972 = vmatprep.mubr.bf16.mxu0 0
      %973 = vmatmul.mubr.bf16.gmra.mrb[0].mxu0 %v575
      %v974 = vpop.f32.mrb[0].mxu0
      %v975 = vadd.f32 0.0, %v974
      %v976 = vpop.f32.mrb[0].mxu0
      %v977 = vpop.f32.mrb[0].mxu0
      %v978 = vadd.f32 0.0, %v977
      %v979 = vpop.f32.mrb[0].mxu0
      %980 = vmatprep.mubr.bf16.mxu0 0
      %981 = vmatmul.mubr.bf16.gmra.mrb[0].mxu0 %v576
      %v982 = vpop.f32.mrb[0].mxu0
      %v983 = vadd.f32 0.0, %v982
      %v984 = vpop.f32.mrb[0].mxu0
      %v985 = vpop.f32.mrb[0].mxu0
      %v986 = vadd.f32 0.0, %v985
      %v987 = vpop.f32.mrb[0].mxu0
      %988 = vmatprep.mubr.bf16.mxu0 0
      %989 = vmatmul.mubr.bf16.gmra.mrb[0].mxu0 %v577
      %v990 = vpop.f32.mrb[0].mxu0
      %v991 = vadd.f32 0.0, %v990
      %v992 = vpop.f32.mrb[0].mxu0
      %v993 = vpop.f32.mrb[0].mxu0
      %v994 = vadd.f32 0.0, %v993
      %v995 = vpop.f32.mrb[0].mxu0
      %996 = vmatprep.mubr.bf16.mxu0 0
      %997 = vmatmul.mubr.bf16.gmra.mrb[0].mxu0 %v578
      %v998 = vpop.f32.mrb[0].mxu0
      %v999 = vadd.f32 0.0, %v998
      %v1000 = vpop.f32.mrb[0].mxu0
      %v1001 = vpop.f32.mrb[0].mxu0
      %v1002 = vadd.f32 0.0, %v1001
      %v1003 = vpop.f32.mrb[0].mxu0
      %1004 = vmatprep.mubr.bf16.mxu0 0
      %1005 = vmatmul.mubr.bf16.gmra.mrb[0].mxu0 %v579
      %v1006 = vpop.f32.mrb[0].mxu0
      %v1007 = vadd.f32 0.0, %v1006
      %v1008 = vpop.f32.mrb[0].mxu0
      %v1009 = vpop.f32.mrb[0].mxu0
      %v1010 = vadd.f32 0.0, %v1009
      %v1011 = vpop.f32.mrb[0].mxu0
      %1012 = vmatprep.mubr.bf16.mxu0 0
      %1013 = vmatmul.mubr.bf16.gmra.mrb[0].mxu0 %v580
      %v1014 = vpop.f32.mrb[0].mxu0
      %v1015 = vadd.f32 0.0, %v1014
      %v1016 = vpop.f32.mrb[0].mxu0
      %v1017 = vpop.f32.mrb[0].mxu0
      %v1018 = vadd.f32 0.0, %v1017
      %v1019 = vpop.f32.mrb[0].mxu0
      %1020 = vmatprep.mubr.bf16.mxu0 0
      %1021 = vmatmul.mubr.bf16.gmra.mrb[0].mxu0 %v581
      %v1022 = vpop.f32.mrb[0].mxu0
      %v1023 = vadd.f32 0.0, %v1022
      %v1024 = vpop.f32.mrb[0].mxu0
      %v1025 = vpop.f32.mrb[0].mxu0
      %v1026 = vadd.f32 0.0, %v1025
      %v1027 = vpop.f32.mrb[0].mxu0
      %1028 = vmatprep.mubr.bf16.mxu0 0
      %1029 = vmatmul.mubr.bf16.gmra.mrb[0].mxu0 %v582
      %v1030 = vpop.f32.mrb[0].mxu0
      %v1031 = vadd.f32 0.0, %v1030
      %v1032 = vpop.f32.mrb[0].mxu0
      %v1033 = vpop.f32.mrb[0].mxu0
      %v1034 = vadd.f32 0.0, %v1033
      %v1035 = vpop.f32.mrb[0].mxu0
      %1036 = vmatprep.mubr.bf16.mxu0 0
      %1037 = vmatmul.mubr.bf16.gmra.mrb[0].mxu0 %v583
      %v1038 = vpop.f32.mrb[0].mxu0
      %v1039 = vadd.f32 0.0, %v1038
      %v1040 = vpop.f32.mrb[0].mxu0
      %v1041 = vpop.f32.mrb[0].mxu0
      %v1042 = vadd.f32 0.0, %v1041
      %v1043 = vpop.f32.mrb[0].mxu0
      %1044 = vmatprep.mubr.bf16.mxu0 0
      %1045 = vmatmul.mubr.bf16.gmra.mrb[0].mxu0 %v584
      %v1046 = vpop.f32.mrb[0].mxu0
      %v1047 = vadd.f32 0.0, %v1046
      %v1048 = vpop.f32.mrb[0].mxu0
      %v1049 = vpop.f32.mrb[0].mxu0
      %v1050 = vadd.f32 0.0, %v1049
      %v1051 = vpop.f32.mrb[0].mxu0
      %1052 = vmatprep.mubr.bf16.mxu0 0
      %1053 = vmatmul.mubr.bf16.gmra.mrb[0].mxu0 %v585
      %v1054 = vpop.f32.mrb[0].mxu0
      %v1055 = vadd.f32 0.0, %v1054
      %v1056 = vpop.f32.mrb[0].mxu0
      %v1057 = vpop.f32.mrb[0].mxu0
      %v1058 = vadd.f32 0.0, %v1057
      %v1059 = vpop.f32.mrb[0].mxu0
      %1060 = vmatprep.mubr.bf16.mxu0 0
      %1061 = vmatmul.mubr.bf16.gmra.mrb[0].mxu0 %v586
      %v1062 = vpop.f32.mrb[0].mxu0
      %v1063 = vadd.f32 0.0, %v1062
      %v1064 = vpop.f32.mrb[0].mxu0
      %v1065 = vpop.f32.mrb[0].mxu0
      %v1066 = vadd.f32 0.0, %v1065
      %v1067 = vpop.f32.mrb[0].mxu0
      %1068 = vmatprep.mubr.bf16.mxu0 0
      %1069 = vmatmul.mubr.bf16.gmra.mrb[0].mxu0 %v587
      %v1070 = vpop.f32.mrb[0].mxu0
      %v1071 = vadd.f32 0.0, %v1070
      %v1072 = vpop.f32.mrb[0].mxu0
      %v1073 = vpop.f32.mrb[0].mxu0
      %v1074 = vadd.f32 0.0, %v1073
      %v1075 = vpop.f32.mrb[0].mxu0
      %1076 = vmatprep.mubr.bf16.mxu0 0
      %1077 = vmatmul.mubr.bf16.gmra.mrb[0].mxu0 %v588
      %v1078 = vpop.f32.mrb[0].mxu0
      %v1079 = vadd.f32 0.0, %v1078
      %v1080 = vpop.f32.mrb[0].mxu0
      %v1081 = vpop.f32.mrb[0].mxu0
      %v1082 = vadd.f32 0.0, %v1081
      %v1083 = vpop.f32.mrb[0].mxu0
      %1084 = vmatprep.mubr.bf16.mxu0 0
      %1085 = vmatmul.mubr.bf16.gmra.mrb[0].mxu0 %v589
      %v1086 = vpop.f32.mrb[0].mxu0
      %v1087 = vadd.f32 0.0, %v1086
      %v1088 = vpop.f32.mrb[0].mxu0
      %v1089 = vpop.f32.mrb[0].mxu0
      %v1090 = vadd.f32 0.0, %v1089
      %v1091 = vpop.f32.mrb[0].mxu0
      %1092 = vmatprep.mubr.bf16.mxu0 0
      %1093 = vmatmul.mubr.bf16.gmra.mrb[0].mxu0 %v590
      %v1094 = vpop.f32.mrb[0].mxu0
      %v1095 = vadd.f32 0.0, %v1094
      %v1096 = vpop.f32.mrb[0].mxu0
      %v1097 = vpop.f32.mrb[0].mxu0
      %v1098 = vadd.f32 0.0, %v1097
      %v1099 = vpop.f32.mrb[0].mxu0
      %1100 = vmatprep.mubr.bf16.mxu0 0
      %1101 = vmatmul.mubr.bf16.gmra.mrb[0].mxu0 %v591
      %v1102 = vpop.f32.mrb[0].mxu0
      %v1103 = vadd.f32 0.0, %v1102
      %v1104 = vpop.f32.mrb[0].mxu0
      %v1105 = vpop.f32.mrb[0].mxu0
      %v1106 = vadd.f32 0.0, %v1105
      %v1107 = vpop.f32.mrb[0].mxu0
      %1108 = vmatprep.mubr.bf16.mxu0 0
      %1109 = vmatmul.mubr.bf16.gmra.mrb[0].mxu0 %v592
      %v1110 = vpop.f32.mrb[0].mxu0
      %v1111 = vadd.f32 0.0, %v1110
      %v1112 = vpop.f32.mrb[0].mxu0
      %v1113 = vpop.f32.mrb[0].mxu0
      %v1114 = vadd.f32 0.0, %v1113
      %v1115 = vpop.f32.mrb[0].mxu0
      %1116 = vmatprep.mubr.bf16.mxu0 0
      %1117 = vmatmul.mubr.bf16.gmra.mrb[0].mxu0 %v593
      %v1118 = vpop.f32.mrb[0].mxu0
      %v1119 = vadd.f32 0.0, %v1118
      %v1120 = vpop.f32.mrb[0].mxu0
      %v1121 = vpop.f32.mrb[0].mxu0
      %v1122 = vadd.f32 0.0, %v1121
      %v1123 = vpop.f32.mrb[0].mxu0
      %1124 = vmatprep.mubr.bf16.mxu0 0
      %1125 = vmatmul.mubr.bf16.gmra.mrb[0].mxu0 %v594
      %v1126 = vpop.f32.mrb[0].mxu0
      %v1127 = vadd.f32 0.0, %v1126
      %v1128 = vpop.f32.mrb[0].mxu0
      %v1129 = vpop.f32.mrb[0].mxu0
      %v1130 = vadd.f32 0.0, %v1129
      %v1131 = vpop.f32.mrb[0].mxu0
      %1132 = vmatprep.mubr.bf16.mxu0 0
      %1133 = vmatmul.mubr.bf16.gmra.mrb[0].mxu0 %v595
      %v1134 = vpop.f32.mrb[0].mxu0
      %v1135 = vadd.f32 0.0, %v1134
      %v1136 = vpop.f32.mrb[0].mxu0
      %v1137 = vpop.f32.mrb[0].mxu0
      %v1138 = vadd.f32 0.0, %v1137
      %v1139 = vpop.f32.mrb[0].mxu0
      %1140 = vmatprep.mubr.bf16.mxu0 0
      %1141 = vmatmul.mubr.bf16.gmra.mrb[0].mxu0 %v596
      %v1142 = vpop.f32.mrb[0].mxu0
      %v1143 = vadd.f32 0.0, %v1142
      %v1144 = vpop.f32.mrb[0].mxu0
      %v1145 = vpop.f32.mrb[0].mxu0
      %v1146 = vadd.f32 0.0, %v1145
      %v1147 = vpop.f32.mrb[0].mxu0
      %1148 = vmatprep.mubr.bf16.mxu0 0
      %1149 = vmatmul.mubr.bf16.gmra.mrb[0].mxu0 %v597
      %v1150 = vpop.f32.mrb[0].mxu0
      %v1151 = vadd.f32 0.0, %v1150
      %v1152 = vpop.f32.mrb[0].mxu0
      %v1153 = vpop.f32.mrb[0].mxu0
      %v1154 = vadd.f32 0.0, %v1153
      %v1155 = vpop.f32.mrb[0].mxu0
      %1156 = vmatprep.mubr.bf16.mxu0 0
      %1157 = vmatmul.mubr.bf16.gmra.mrb[0].mxu0 %v598
      %v1158 = vpop.f32.mrb[0].mxu0
      %v1159 = vadd.f32 0.0, %v1158
      %v1160 = vpop.f32.mrb[0].mxu0
      %v1161 = vpop.f32.mrb[0].mxu0
      %v1162 = vadd.f32 0.0, %v1161
      %v1163 = vpop.f32.mrb[0].mxu0
      %1164 = vmatprep.mubr.bf16.mxu0 0
      %1165 = vmatmul.mubr.bf16.gmra.mrb[0].mxu0 %v599
      %v1166 = vpop.f32.mrb[0].mxu0
      %v1167 = vadd.f32 0.0, %v1166
      %v1168 = vpop.f32.mrb[0].mxu0
      %v1169 = vpop.f32.mrb[0].mxu0
      %v1170 = vadd.f32 0.0, %v1169
      %v1171 = vpop.f32.mrb[0].mxu0
      %1172 = vmatprep.mubr.bf16.mxu0 0
      %1173 = vmatmul.mubr.bf16.gmra.mrb[0].mxu0 %v600
      %v1174 = vpop.f32.mrb[0].mxu0
      %v1175 = vadd.f32 0.0, %v1174
      %v1176 = vpop.f32.mrb[0].mxu0
      %v1177 = vpop.f32.mrb[0].mxu0
      %v1178 = vadd.f32 0.0, %v1177
      %v1179 = vpop.f32.mrb[0].mxu0
      %1180 = vmatprep.mubr.bf16.mxu0 0
      %1181 = vmatmul.mubr.bf16.gmra.mrb[0].mxu0 %v601
      %v1182 = vpop.f32.mrb[0].mxu0
      %v1183 = vadd.f32 0.0, %v1182
      %v1184 = vpop.f32.mrb[0].mxu0
      %v1185 = vpop.f32.mrb[0].mxu0
      %v1186 = vadd.f32 0.0, %v1185
      %v1187 = vpop.f32.mrb[0].mxu0
      %1188 = vmatprep.mubr.bf16.mxu0 0
      %1189 = vmatmul.mubr.bf16.gmra.mrb[0].mxu0 %v602
      %v1190 = vpop.f32.mrb[0].mxu0
      %v1191 = vadd.f32 0.0, %v1190
      %v1192 = vpop.f32.mrb[0].mxu0
      %v1193 = vpop.f32.mrb[0].mxu0
      %v1194 = vadd.f32 0.0, %v1193
      %v1195 = vpop.f32.mrb[0].mxu0
      %1196 = vmatprep.mubr.bf16.mxu0 0
      %1197 = vmatmul.mubr.bf16.gmra.mrb[0].mxu0 %v603
      %v1198 = vpop.f32.mrb[0].mxu0
      %v1199 = vadd.f32 0.0, %v1198
      %v1200 = vpop.f32.mrb[0].mxu0
      %v1201 = vpop.f32.mrb[0].mxu0
      %v1202 = vadd.f32 0.0, %v1201
      %v1203 = vpop.f32.mrb[0].mxu0
      %1204 = vmatprep.mubr.bf16.mxu0 0
      %1205 = vmatmul.mubr.bf16.gmra.mrb[0].mxu0 %v604
      %v1206 = vpop.f32.mrb[0].mxu0
      %v1207 = vadd.f32 0.0, %v1206
      %v1208 = vpop.f32.mrb[0].mxu0
      %v1209 = vpop.f32.mrb[0].mxu0
      %v1210 = vadd.f32 0.0, %v1209
      %v1211 = vpop.f32.mrb[0].mxu0
      %1212 = vmatprep.mubr.bf16.mxu0 0
      %1213 = vmatmul.mubr.bf16.gmra.mrb[0].mxu0 %v605
      %v1214 = vpop.f32.mrb[0].mxu0
      %v1215 = vadd.f32 0.0, %v1214
      %v1216 = vpop.f32.mrb[0].mxu0
      %v1217 = vpop.f32.mrb[0].mxu0
      %v1218 = vadd.f32 0.0, %v1217
      %v1219 = vpop.f32.mrb[0].mxu0
      %1220 = vmatprep.mubr.bf16.mxu0 0
      %1221 = vmatmul.mubr.bf16.gmra.mrb[0].mxu0 %v606
      %v1222 = vpop.f32.mrb[0].mxu0
      %v1223 = vadd.f32 0.0, %v1222
      %v1224 = vpop.f32.mrb[0].mxu0
      %v1225 = vpop.f32.mrb[0].mxu0
      %v1226 = vadd.f32 0.0, %v1225
      %v1227 = vpop.f32.mrb[0].mxu0
      %1228 = vmatprep.mubr.bf16.mxu0 0
      %1229 = vmatmul.mubr.bf16.gmra.mrb[0].mxu0 %v607
      %v1230 = vpop.f32.mrb[0].mxu0
      %v1231 = vadd.f32 0.0, %v1230
      %v1232 = vpop.f32.mrb[0].mxu0
      %v1233 = vpop.f32.mrb[0].mxu0
      %v1234 = vadd.f32 0.0, %v1233
      %v1235 = vpop.f32.mrb[0].mxu0
      %1236 = vmatprep.mubr.bf16.mxu0 0
      %1237 = vmatmul.mubr.bf16.gmra.mrb[0].mxu0 %v608
      %v1238 = vpop.f32.mrb[0].mxu0
      %v1239 = vadd.f32 0.0, %v1238
      %v1240 = vpop.f32.mrb[0].mxu0
      %v1241 = vpop.f32.mrb[0].mxu0
      %v1242 = vadd.f32 0.0, %v1241
      %v1243 = vpop.f32.mrb[0].mxu0
      %1244 = vmatprep.mubr.bf16.mxu0 0
      %1245 = vmatmul.mubr.bf16.gmra.mrb[0].mxu0 %v609
      %v1246 = vpop.f32.mrb[0].mxu0
      %v1247 = vadd.f32 0.0, %v1246
      %v1248 = vpop.f32.mrb[0].mxu0
      %v1249 = vpop.f32.mrb[0].mxu0
      %v1250 = vadd.f32 0.0, %v1249
      %v1251 = vpop.f32.mrb[0].mxu0
      %1252 = vmatprep.mubr.bf16.mxu0 0
      %1253 = vmatmul.mubr.bf16.gmra.mrb[0].mxu0 %v610
      %v1254 = vpop.f32.mrb[0].mxu0
      %v1255 = vadd.f32 0.0, %v1254
      %v1256 = vpop.f32.mrb[0].mxu0
      %v1257 = vpop.f32.mrb[0].mxu0
      %v1258 = vadd.f32 0.0, %v1257
      %v1259 = vpop.f32.mrb[0].mxu0
      %1260 = vmatprep.mubr.bf16.mxu0 0
      %1261 = vmatmul.mubr.bf16.gmra.mrb[0].mxu0 %v611
      %v1262 = vpop.f32.mrb[0].mxu0
      %v1263 = vadd.f32 0.0, %v1262
      %v1264 = vpop.f32.mrb[0].mxu0
      %v1265 = vpop.f32.mrb[0].mxu0
      %v1266 = vadd.f32 0.0, %v1265
      %v1267 = vpop.f32.mrb[0].mxu0
      %1268 = vdwg.mxu0
      %v1269 = vmul.f32 %v759, 0.2
      %v1270 = vmul.f32 %v762, 0.2
      %v1271 = vmul.f32 %v767, 0.2
      %v1272 = vmul.f32 %v770, 0.2
      %v1273 = vmul.f32 %v775, 0.2
      %v1274 = vmul.f32 %v778, 0.2
      %v1275 = vmul.f32 %v783, 0.2
      %v1276 = vmul.f32 %v786, 0.2
      %v1277 = vmul.f32 %v791, 0.2
      %v1278 = vmul.f32 %v794, 0.2
      %v1279 = vmul.f32 %v799, 0.2
      %v1280 = vmul.f32 %v802, 0.2
      %v1281 = vmul.f32 %v807, 0.2
      %v1282 = vmul.f32 %v810, 0.2
      %v1283 = vmul.f32 %v815, 0.2
      %v1284 = vmul.f32 %v818, 0.2
      %v1285 = vmul.f32 %v823, 0.2
      %v1286 = vmul.f32 %v826, 0.2
      %v1287 = vmul.f32 %v831, 0.2
      %v1288 = vmul.f32 %v834, 0.2
      %v1289 = vmul.f32 %v839, 0.2
      %v1290 = vmul.f32 %v842, 0.2
      %v1291 = vmul.f32 %v847, 0.2
      %v1292 = vmul.f32 %v850, 0.2
      %v1293 = vmul.f32 %v855, 0.2
      %v1294 = vmul.f32 %v858, 0.2
      %v1295 = vmul.f32 %v863, 0.2
      %v1296 = vmul.f32 %v866, 0.2
      %v1297 = vmul.f32 %v871, 0.2
      %v1298 = vmul.f32 %v874, 0.2
      %v1299 = vmul.f32 %v879, 0.2
      %v1300 = vmul.f32 %v882, 0.2
      %v1301 = vmul.f32 %v887, 0.2
      %v1302 = vmul.f32 %v890, 0.2
      %v1303 = vmul.f32 %v895, 0.2
      %v1304 = vmul.f32 %v898, 0.2
      %v1305 = vmul.f32 %v903, 0.2
      %v1306 = vmul.f32 %v906, 0.2
      %v1307 = vmul.f32 %v911, 0.2
      %v1308 = vmul.f32 %v914, 0.2
      %v1309 = vmul.f32 %v919, 0.2
      %v1310 = vmul.f32 %v922, 0.2
      %v1311 = vmul.f32 %v927, 0.2
      %v1312 = vmul.f32 %v930, 0.2
      %v1313 = vmul.f32 %v935, 0.2
      %v1314 = vmul.f32 %v938, 0.2
      %v1315 = vmul.f32 %v943, 0.2
      %v1316 = vmul.f32 %v946, 0.2
      %v1317 = vmul.f32 %v951, 0.2
      %v1318 = vmul.f32 %v954, 0.2
      %v1319 = vmul.f32 %v959, 0.2
      %v1320 = vmul.f32 %v962, 0.2
      %v1321 = vmul.f32 %v967, 0.2
      %v1322 = vmul.f32 %v970, 0.2
      %v1323 = vmul.f32 %v975, 0.2
      %v1324 = vmul.f32 %v978, 0.2
      %v1325 = vmul.f32 %v983, 0.2
      %v1326 = vmul.f32 %v986, 0.2
      %v1327 = vmul.f32 %v991, 0.2
      %v1328 = vmul.f32 %v994, 0.2
      %v1329 = vmul.f32 %v999, 0.2
      %v1330 = vmul.f32 %v1002, 0.2
      %v1331 = vmul.f32 %v1007, 0.2
      %v1332 = vmul.f32 %v1010, 0.2
      %v1333 = vmul.f32 %v1015, 0.2
      %v1334 = vmul.f32 %v1018, 0.2
      %v1335 = vmul.f32 %v1023, 0.2
      %v1336 = vmul.f32 %v1026, 0.2
      %v1337 = vmul.f32 %v1031, 0.2
      %v1338 = vmul.f32 %v1034, 0.2
      %v1339 = vmul.f32 %v1039, 0.2
      %v1340 = vmul.f32 %v1042, 0.2
      %v1341 = vmul.f32 %v1047, 0.2
      %v1342 = vmul.f32 %v1050, 0.2
      %v1343 = vmul.f32 %v1055, 0.2
      %v1344 = vmul.f32 %v1058, 0.2
      %v1345 = vmul.f32 %v1063, 0.2
      %v1346 = vmul.f32 %v1066, 0.2
      %v1347 = vmul.f32 %v1071, 0.2
      %v1348 = vmul.f32 %v1074, 0.2
      %v1349 = vmul.f32 %v1079, 0.2
      %v1350 = vmul.f32 %v1082, 0.2
      %v1351 = vmul.f32 %v1087, 0.2
      %v1352 = vmul.f32 %v1090, 0.2
      %v1353 = vmul.f32 %v1095, 0.2
      %v1354 = vmul.f32 %v1098, 0.2
      %v1355 = vmul.f32 %v1103, 0.2
      %v1356 = vmul.f32 %v1106, 0.2
      %v1357 = vmul.f32 %v1111, 0.2
      %v1358 = vmul.f32 %v1114, 0.2
      %v1359 = vmul.f32 %v1119, 0.2
      %v1360 = vmul.f32 %v1122, 0.2
      %v1361 = vmul.f32 %v1127, 0.2
      %v1362 = vmul.f32 %v1130, 0.2
      %v1363 = vmul.f32 %v1135, 0.2
      %v1364 = vmul.f32 %v1138, 0.2
      %v1365 = vmul.f32 %v1143, 0.2
      %v1366 = vmul.f32 %v1146, 0.2
      %v1367 = vmul.f32 %v1151, 0.2
      %v1368 = vmul.f32 %v1154, 0.2
      %v1369 = vmul.f32 %v1159, 0.2
      %v1370 = vmul.f32 %v1162, 0.2
      %v1371 = vmul.f32 %v1167, 0.2
      %v1372 = vmul.f32 %v1170, 0.2
      %v1373 = vmul.f32 %v1175, 0.2
      %v1374 = vmul.f32 %v1178, 0.2
      %v1375 = vmul.f32 %v1183, 0.2
      %v1376 = vmul.f32 %v1186, 0.2
      %v1377 = vmul.f32 %v1191, 0.2
      %v1378 = vmul.f32 %v1194, 0.2
      %v1379 = vmul.f32 %v1199, 0.2
      %v1380 = vmul.f32 %v1202, 0.2
      %v1381 = vmul.f32 %v1207, 0.2
      %v1382 = vmul.f32 %v1210, 0.2
      %v1383 = vmul.f32 %v1215, 0.2
      %v1384 = vmul.f32 %v1218, 0.2
      %v1385 = vmul.f32 %v1223, 0.2
      %v1386 = vmul.f32 %v1226, 0.2
      %v1387 = vmul.f32 %v1231, 0.2
      %v1388 = vmul.f32 %v1234, 0.2
      %v1389 = vmul.f32 %v1239, 0.2
      %v1390 = vmul.f32 %v1242, 0.2
      %v1391 = vmul.f32 %v1247, 0.2
      %v1392 = vmul.f32 %v1250, 0.2
      %v1393 = vmul.f32 %v1255, 0.2
      %v1394 = vmul.f32 %v1258, 0.2
      %v1395 = vmul.f32 %v1263, 0.2
      %v1396 = vmul.f32 %v1266, 0.2
      %v1397 = vmax.f32 %v759, %v1269
      %v1398 = vmax.f32 %v762, %v1270
      %v1399 = vmax.f32 %v767, %v1271
      %v1400 = vmax.f32 %v770, %v1272
      %v1401 = vmax.f32 %v775, %v1273
      %v1402 = vmax.f32 %v778, %v1274
      %v1403 = vmax.f32 %v783, %v1275
      %v1404 = vmax.f32 %v786, %v1276
      %v1405 = vmax.f32 %v791, %v1277
      %v1406 = vmax.f32 %v794, %v1278
      %v1407 = vmax.f32 %v799, %v1279
      %v1408 = vmax.f32 %v802, %v1280
      %v1409 = vmax.f32 %v807, %v1281
      %v1410 = vmax.f32 %v810, %v1282
      %v1411 = vmax.f32 %v815, %v1283
      %v1412 = vmax.f32 %v818, %v1284
      %v1413 = vmax.f32 %v823, %v1285
      %v1414 = vmax.f32 %v826, %v1286
      %v1415 = vmax.f32 %v831, %v1287
      %v1416 = vmax.f32 %v834, %v1288
      %v1417 = vmax.f32 %v839, %v1289
      %v1418 = vmax.f32 %v842, %v1290
      %v1419 = vmax.f32 %v847, %v1291
      %v1420 = vmax.f32 %v850, %v1292
      %v1421 = vmax.f32 %v855, %v1293
      %v1422 = vmax.f32 %v858, %v1294
      %v1423 = vmax.f32 %v863, %v1295
      %v1424 = vmax.f32 %v866, %v1296
      %v1425 = vmax.f32 %v871, %v1297
      %v1426 = vmax.f32 %v874, %v1298
      %v1427 = vmax.f32 %v879, %v1299
      %v1428 = vmax.f32 %v882, %v1300
      %v1429 = vmax.f32 %v887, %v1301
      %v1430 = vmax.f32 %v890, %v1302
      %v1431 = vmax.f32 %v895, %v1303
      %v1432 = vmax.f32 %v898, %v1304
      %v1433 = vmax.f32 %v903, %v1305
      %v1434 = vmax.f32 %v906, %v1306
      %v1435 = vmax.f32 %v911, %v1307
      %v1436 = vmax.f32 %v914, %v1308
      %v1437 = vmax.f32 %v919, %v1309
      %v1438 = vmax.f32 %v922, %v1310
      %v1439 = vmax.f32 %v927, %v1311
      %v1440 = vmax.f32 %v930, %v1312
      %v1441 = vmax.f32 %v935, %v1313
      %v1442 = vmax.f32 %v938, %v1314
      %v1443 = vmax.f32 %v943, %v1315
      %v1444 = vmax.f32 %v946, %v1316
      %v1445 = vmax.f32 %v951, %v1317
      %v1446 = vmax.f32 %v954, %v1318
      %v1447 = vmax.f32 %v959, %v1319
      %v1448 = vmax.f32 %v962, %v1320
      %v1449 = vmax.f32 %v967, %v1321
      %v1450 = vmax.f32 %v970, %v1322
      %v1451 = vmax.f32 %v975, %v1323
      %v1452 = vmax.f32 %v978, %v1324
      %v1453 = vmax.f32 %v983, %v1325
      %v1454 = vmax.f32 %v986, %v1326
      %v1455 = vmax.f32 %v991, %v1327
      %v1456 = vmax.f32 %v994, %v1328
      %v1457 = vmax.f32 %v999, %v1329
      %v1458 = vmax.f32 %v1002, %v1330
      %v1459 = vmax.f32 %v1007, %v1331
      %v1460 = vmax.f32 %v1010, %v1332
      %v1461 = vmax.f32 %v1015, %v1333
      %v1462 = vmax.f32 %v1018, %v1334
      %v1463 = vmax.f32 %v1023, %v1335
      %v1464 = vmax.f32 %v1026, %v1336
      %v1465 = vmax.f32 %v1031, %v1337
      %v1466 = vmax.f32 %v1034, %v1338
      %v1467 = vmax.f32 %v1039, %v1339
      %v1468 = vmax.f32 %v1042, %v1340
      %v1469 = vmax.f32 %v1047, %v1341
      %v1470 = vmax.f32 %v1050, %v1342
      %v1471 = vmax.f32 %v1055, %v1343
      %v1472 = vmax.f32 %v1058, %v1344
      %v1473 = vmax.f32 %v1063, %v1345
      %v1474 = vmax.f32 %v1066, %v1346
      %v1475 = vmax.f32 %v1071, %v1347
      %v1476 = vmax.f32 %v1074, %v1348
      %v1477 = vmax.f32 %v1079, %v1349
      %v1478 = vmax.f32 %v1082, %v1350
      %v1479 = vmax.f32 %v1087, %v1351
      %v1480 = vmax.f32 %v1090, %v1352
      %v1481 = vmax.f32 %v1095, %v1353
      %v1482 = vmax.f32 %v1098, %v1354
      %v1483 = vmax.f32 %v1103, %v1355
      %v1484 = vmax.f32 %v1106, %v1356
      %v1485 = vmax.f32 %v1111, %v1357
      %v1486 = vmax.f32 %v1114, %v1358
      %v1487 = vmax.f32 %v1119, %v1359
      %v1488 = vmax.f32 %v1122, %v1360
      %v1489 = vmax.f32 %v1127, %v1361
      %v1490 = vmax.f32 %v1130, %v1362
      %v1491 = vmax.f32 %v1135, %v1363
      %v1492 = vmax.f32 %v1138, %v1364
      %v1493 = vmax.f32 %v1143, %v1365
      %v1494 = vmax.f32 %v1146, %v1366
      %v1495 = vmax.f32 %v1151, %v1367
      %v1496 = vmax.f32 %v1154, %v1368
      %v1497 = vmax.f32 %v1159, %v1369
      %v1498 = vmax.f32 %v1162, %v1370
      %v1499 = vmax.f32 %v1167, %v1371
      %v1500 = vmax.f32 %v1170, %v1372
      %v1501 = vmax.f32 %v1175, %v1373
      %v1502 = vmax.f32 %v1178, %v1374
      %v1503 = vmax.f32 %v1183, %v1375
      %v1504 = vmax.f32 %v1186, %v1376
      %v1505 = vmax.f32 %v1191, %v1377
      %v1506 = vmax.f32 %v1194, %v1378
      %v1507 = vmax.f32 %v1199, %v1379
      %v1508 = vmax.f32 %v1202, %v1380
      %v1509 = vmax.f32 %v1207, %v1381
      %v1510 = vmax.f32 %v1210, %v1382
      %v1511 = vmax.f32 %v1215, %v1383
      %v1512 = vmax.f32 %v1218, %v1384
      %v1513 = vmax.f32 %v1223, %v1385
      %v1514 = vmax.f32 %v1226, %v1386
      %v1515 = vmax.f32 %v1231, %v1387
      %v1516 = vmax.f32 %v1234, %v1388
      %v1517 = vmax.f32 %v1239, %v1389
      %v1518 = vmax.f32 %v1242, %v1390
      %v1519 = vmax.f32 %v1247, %v1391
      %v1520 = vmax.f32 %v1250, %v1392
      %v1521 = vmax.f32 %v1255, %v1393
      %v1522 = vmax.f32 %v1258, %v1394
      %v1523 = vmax.f32 %v1263, %v1395
      %v1524 = vmax.f32 %v1266, %v1396
      %v1525 = vpack.c.bf16 %v1398, %v1397
      %v1526 = vpack.c.bf16 %v1400, %v1399
      %v1527 = vpack.c.bf16 %v1402, %v1401
      %v1528 = vpack.c.bf16 %v1404, %v1403
      %v1529 = vpack.c.bf16 %v1406, %v1405
      %v1530 = vpack.c.bf16 %v1408, %v1407
      %v1531 = vpack.c.bf16 %v1410, %v1409
      %v1532 = vpack.c.bf16 %v1412, %v1411
      %v1533 = vpack.c.bf16 %v1414, %v1413
      %v1534 = vpack.c.bf16 %v1416, %v1415
      %v1535 = vpack.c.bf16 %v1418, %v1417
      %v1536 = vpack.c.bf16 %v1420, %v1419
      %v1537 = vpack.c.bf16 %v1422, %v1421
      %v1538 = vpack.c.bf16 %v1424, %v1423
      %v1539 = vpack.c.bf16 %v1426, %v1425
      %v1540 = vpack.c.bf16 %v1428, %v1427
      %v1541 = vpack.c.bf16 %v1430, %v1429
      %v1542 = vpack.c.bf16 %v1432, %v1431
      %v1543 = vpack.c.bf16 %v1434, %v1433
      %v1544 = vpack.c.bf16 %v1436, %v1435
      %v1545 = vpack.c.bf16 %v1438, %v1437
      %v1546 = vpack.c.bf16 %v1440, %v1439
      %v1547 = vpack.c.bf16 %v1442, %v1441
      %v1548 = vpack.c.bf16 %v1444, %v1443
      %v1549 = vpack.c.bf16 %v1446, %v1445
      %v1550 = vpack.c.bf16 %v1448, %v1447
      %v1551 = vpack.c.bf16 %v1450, %v1449
      %v1552 = vpack.c.bf16 %v1452, %v1451
      %v1553 = vpack.c.bf16 %v1454, %v1453
      %v1554 = vpack.c.bf16 %v1456, %v1455
      %v1555 = vpack.c.bf16 %v1458, %v1457
      %v1556 = vpack.c.bf16 %v1460, %v1459
      %v1557 = vpack.c.bf16 %v1462, %v1461
      %v1558 = vpack.c.bf16 %v1464, %v1463
      %v1559 = vpack.c.bf16 %v1466, %v1465
      %v1560 = vpack.c.bf16 %v1468, %v1467
      %v1561 = vpack.c.bf16 %v1470, %v1469
      %v1562 = vpack.c.bf16 %v1472, %v1471
      %v1563 = vpack.c.bf16 %v1474, %v1473
      %v1564 = vpack.c.bf16 %v1476, %v1475
      %v1565 = vpack.c.bf16 %v1478, %v1477
      %v1566 = vpack.c.bf16 %v1480, %v1479
      %v1567 = vpack.c.bf16 %v1482, %v1481
      %v1568 = vpack.c.bf16 %v1484, %v1483
      %v1569 = vpack.c.bf16 %v1486, %v1485
      %v1570 = vpack.c.bf16 %v1488, %v1487
      %v1571 = vpack.c.bf16 %v1490, %v1489
      %v1572 = vpack.c.bf16 %v1492, %v1491
      %v1573 = vpack.c.bf16 %v1494, %v1493
      %v1574 = vpack.c.bf16 %v1496, %v1495
      %v1575 = vpack.c.bf16 %v1498, %v1497
      %v1576 = vpack.c.bf16 %v1500, %v1499
      %v1577 = vpack.c.bf16 %v1502, %v1501
      %v1578 = vpack.c.bf16 %v1504, %v1503
      %v1579 = vpack.c.bf16 %v1506, %v1505
      %v1580 = vpack.c.bf16 %v1508, %v1507
      %v1581 = vpack.c.bf16 %v1510, %v1509
      %v1582 = vpack.c.bf16 %v1512, %v1511
      %v1583 = vpack.c.bf16 %v1514, %v1513
      %v1584 = vpack.c.bf16 %v1516, %v1515
      %v1585 = vpack.c.bf16 %v1518, %v1517
      %v1586 = vpack.c.bf16 %v1520, %v1519
      %v1587 = vpack.c.bf16 %v1522, %v1521
      %v1588 = vpack.c.bf16 %v1524, %v1523
      %v1653 = vunpack.c.l.b16 %v1525
      %v1654 = vunpack.c.h.b16 %v1525
      %v1655 = vunpack.c.l.b16 %v1526
      %v1656 = vunpack.c.h.b16 %v1526
      %v1657 = vunpack.c.l.b16 %v1527
      %v1658 = vunpack.c.h.b16 %v1527
      %v1659 = vunpack.c.l.b16 %v1528
      %v1660 = vunpack.c.h.b16 %v1528
      %v1661 = vunpack.c.l.b16 %v1529
      %v1662 = vunpack.c.h.b16 %v1529
      %v1663 = vunpack.c.l.b16 %v1530
      %v1664 = vunpack.c.h.b16 %v1530
      %v1665 = vunpack.c.l.b16 %v1531
      %v1666 = vunpack.c.h.b16 %v1531
      %v1667 = vunpack.c.l.b16 %v1532
      %v1668 = vunpack.c.h.b16 %v1532
      %v1669 = vunpack.c.l.b16 %v1533
      %v1670 = vunpack.c.h.b16 %v1533
      %v1671 = vunpack.c.l.b16 %v1534
      %v1672 = vunpack.c.h.b16 %v1534
      %v1673 = vunpack.c.l.b16 %v1535
      %v1674 = vunpack.c.h.b16 %v1535
      %v1675 = vunpack.c.l.b16 %v1536
      %v1676 = vunpack.c.h.b16 %v1536
      %v1677 = vunpack.c.l.b16 %v1537
      %v1678 = vunpack.c.h.b16 %v1537
      %v1679 = vunpack.c.l.b16 %v1538
      %v1680 = vunpack.c.h.b16 %v1538
      %v1681 = vunpack.c.l.b16 %v1539
      %v1682 = vunpack.c.h.b16 %v1539
      %v1683 = vunpack.c.l.b16 %v1540
      %v1684 = vunpack.c.h.b16 %v1540
      %v1685 = vunpack.c.l.b16 %v1541
      %v1686 = vunpack.c.h.b16 %v1541
      %v1687 = vunpack.c.l.b16 %v1542
      %v1688 = vunpack.c.h.b16 %v1542
      %v1689 = vunpack.c.l.b16 %v1543
      %v1690 = vunpack.c.h.b16 %v1543
      %v1691 = vunpack.c.l.b16 %v1544
      %v1692 = vunpack.c.h.b16 %v1544
      %v1693 = vunpack.c.l.b16 %v1545
      %v1694 = vunpack.c.h.b16 %v1545
      %v1695 = vunpack.c.l.b16 %v1546
      %v1696 = vunpack.c.h.b16 %v1546
      %v1697 = vunpack.c.l.b16 %v1547
      %v1698 = vunpack.c.h.b16 %v1547
      %v1699 = vunpack.c.l.b16 %v1548
      %v1700 = vunpack.c.h.b16 %v1548
      %v1701 = vunpack.c.l.b16 %v1549
      %v1702 = vunpack.c.h.b16 %v1549
      %v1703 = vunpack.c.l.b16 %v1550
      %v1704 = vunpack.c.h.b16 %v1550
      %v1705 = vunpack.c.l.b16 %v1551
      %v1706 = vunpack.c.h.b16 %v1551
      %v1707 = vunpack.c.l.b16 %v1552
      %v1708 = vunpack.c.h.b16 %v1552
      %v1709 = vunpack.c.l.b16 %v1553
      %v1710 = vunpack.c.h.b16 %v1553
      %v1711 = vunpack.c.l.b16 %v1554
      %v1712 = vunpack.c.h.b16 %v1554
      %v1713 = vunpack.c.l.b16 %v1555
      %v1714 = vunpack.c.h.b16 %v1555
      %v1715 = vunpack.c.l.b16 %v1556
      %v1716 = vunpack.c.h.b16 %v1556
      %v1717 = vunpack.c.l.b16 %v1557
      %v1718 = vunpack.c.h.b16 %v1557
      %v1719 = vunpack.c.l.b16 %v1558
      %v1720 = vunpack.c.h.b16 %v1558
      %v1721 = vunpack.c.l.b16 %v1559
      %v1722 = vunpack.c.h.b16 %v1559
      %v1723 = vunpack.c.l.b16 %v1560
      %v1724 = vunpack.c.h.b16 %v1560
      %v1725 = vunpack.c.l.b16 %v1561
      %v1726 = vunpack.c.h.b16 %v1561
      %v1727 = vunpack.c.l.b16 %v1562
      %v1728 = vunpack.c.h.b16 %v1562
      %v1729 = vunpack.c.l.b16 %v1563
      %v1730 = vunpack.c.h.b16 %v1563
      %v1731 = vunpack.c.l.b16 %v1564
      %v1732 = vunpack.c.h.b16 %v1564
      %v1733 = vunpack.c.l.b16 %v1565
      %v1734 = vunpack.c.h.b16 %v1565
      %v1735 = vunpack.c.l.b16 %v1566
      %v1736 = vunpack.c.h.b16 %v1566
      %v1737 = vunpack.c.l.b16 %v1567
      %v1738 = vunpack.c.h.b16 %v1567
      %v1739 = vunpack.c.l.b16 %v1568
      %v1740 = vunpack.c.h.b16 %v1568
      %v1741 = vunpack.c.l.b16 %v1569
      %v1742 = vunpack.c.h.b16 %v1569
      %v1743 = vunpack.c.l.b16 %v1570
      %v1744 = vunpack.c.h.b16 %v1570
      %v1745 = vunpack.c.l.b16 %v1571
      %v1746 = vunpack.c.h.b16 %v1571
      %v1747 = vunpack.c.l.b16 %v1572
      %v1748 = vunpack.c.h.b16 %v1572
      %v1749 = vunpack.c.l.b16 %v1573
      %v1750 = vunpack.c.h.b16 %v1573
      %v1751 = vunpack.c.l.b16 %v1574
      %v1752 = vunpack.c.h.b16 %v1574
      %v1753 = vunpack.c.l.b16 %v1575
      %v1754 = vunpack.c.h.b16 %v1575
      %v1755 = vunpack.c.l.b16 %v1576
      %v1756 = vunpack.c.h.b16 %v1576
      %v1757 = vunpack.c.l.b16 %v1577
      %v1758 = vunpack.c.h.b16 %v1577
      %v1759 = vunpack.c.l.b16 %v1578
      %v1760 = vunpack.c.h.b16 %v1578
      %v1761 = vunpack.c.l.b16 %v1579
      %v1762 = vunpack.c.h.b16 %v1579
      %v1763 = vunpack.c.l.b16 %v1580
      %v1764 = vunpack.c.h.b16 %v1580
      %v1765 = vunpack.c.l.b16 %v1581
      %v1766 = vunpack.c.h.b16 %v1581
      %v1767 = vunpack.c.l.b16 %v1582
      %v1768 = vunpack.c.h.b16 %v1582
      %v1769 = vunpack.c.l.b16 %v1583
      %v1770 = vunpack.c.h.b16 %v1583
      %v1771 = vunpack.c.l.b16 %v1584
      %v1772 = vunpack.c.h.b16 %v1584
      %v1773 = vunpack.c.l.b16 %v1585
      %v1774 = vunpack.c.h.b16 %v1585
      %v1775 = vunpack.c.l.b16 %v1586
      %v1776 = vunpack.c.h.b16 %v1586
      %v1777 = vunpack.c.l.b16 %v1587
      %v1778 = vunpack.c.h.b16 %v1587
      %v1779 = vunpack.c.l.b16 %v1588
      %v1780 = vunpack.c.h.b16 %v1588
      %v1781 = vpack.c.b16 %v1653, %v1653
      %v1782 = vpack.c.b16 %v1654, %v1654
      %v1783 = vpack.c.b16 %v1655, %v1655
      %v1784 = vpack.c.b16 %v1656, %v1656
      %v1785 = vpack.c.b16 %v1657, %v1657
      %v1786 = vpack.c.b16 %v1658, %v1658
      %v1787 = vpack.c.b16 %v1659, %v1659
      %v1788 = vpack.c.b16 %v1660, %v1660
      %v1789 = vpack.c.b16 %v1661, %v1661
      %v1790 = vpack.c.b16 %v1662, %v1662
      %v1791 = vpack.c.b16 %v1663, %v1663
      %v1792 = vpack.c.b16 %v1664, %v1664
      %v1793 = vpack.c.b16 %v1665, %v1665
      %v1794 = vpack.c.b16 %v1666, %v1666
      %v1795 = vpack.c.b16 %v1667, %v1667
      %v1796 = vpack.c.b16 %v1668, %v1668
      %v1797 = vpack.c.b16 %v1669, %v1669
      %v1798 = vpack.c.b16 %v1670, %v1670
      %v1799 = vpack.c.b16 %v1671, %v1671
      %v1800 = vpack.c.b16 %v1672, %v1672
      %v1801 = vpack.c.b16 %v1673, %v1673
      %v1802 = vpack.c.b16 %v1674, %v1674
      %v1803 = vpack.c.b16 %v1675, %v1675
      %v1804 = vpack.c.b16 %v1676, %v1676
      %v1805 = vpack.c.b16 %v1677, %v1677
      %v1806 = vpack.c.b16 %v1678, %v1678
      %v1807 = vpack.c.b16 %v1679, %v1679
      %v1808 = vpack.c.b16 %v1680, %v1680
      %v1809 = vpack.c.b16 %v1681, %v1681
      %v1810 = vpack.c.b16 %v1682, %v1682
      %v1811 = vpack.c.b16 %v1683, %v1683
      %v1812 = vpack.c.b16 %v1684, %v1684
      %v1813 = vpack.c.b16 %v1685, %v1685
      %v1814 = vpack.c.b16 %v1686, %v1686
      %v1815 = vpack.c.b16 %v1687, %v1687
      %v1816 = vpack.c.b16 %v1688, %v1688
      %v1817 = vpack.c.b16 %v1689, %v1689
      %v1818 = vpack.c.b16 %v1690, %v1690
      %v1819 = vpack.c.b16 %v1691, %v1691
      %v1820 = vpack.c.b16 %v1692, %v1692
      %v1821 = vpack.c.b16 %v1693, %v1693
      %v1822 = vpack.c.b16 %v1694, %v1694
      %v1823 = vpack.c.b16 %v1695, %v1695
      %v1824 = vpack.c.b16 %v1696, %v1696
      %v1825 = vpack.c.b16 %v1697, %v1697
      %v1826 = vpack.c.b16 %v1698, %v1698
      %v1827 = vpack.c.b16 %v1699, %v1699
      %v1828 = vpack.c.b16 %v1700, %v1700
      %v1829 = vpack.c.b16 %v1701, %v1701
      %v1830 = vpack.c.b16 %v1702, %v1702
      %v1831 = vpack.c.b16 %v1703, %v1703
      %v1832 = vpack.c.b16 %v1704, %v1704
      %v1833 = vpack.c.b16 %v1705, %v1705
      %v1834 = vpack.c.b16 %v1706, %v1706
      %v1835 = vpack.c.b16 %v1707, %v1707
      %v1836 = vpack.c.b16 %v1708, %v1708
      %v1837 = vpack.c.b16 %v1709, %v1709
      %v1838 = vpack.c.b16 %v1710, %v1710
      %v1839 = vpack.c.b16 %v1711, %v1711
      %v1840 = vpack.c.b16 %v1712, %v1712
      %v1841 = vpack.c.b16 %v1713, %v1713
      %v1842 = vpack.c.b16 %v1714, %v1714
      %v1843 = vpack.c.b16 %v1715, %v1715
      %v1844 = vpack.c.b16 %v1716, %v1716
      %v1845 = vpack.c.b16 %v1717, %v1717
      %v1846 = vpack.c.b16 %v1718, %v1718
      %v1847 = vpack.c.b16 %v1719, %v1719
      %v1848 = vpack.c.b16 %v1720, %v1720
      %v1849 = vpack.c.b16 %v1721, %v1721
      %v1850 = vpack.c.b16 %v1722, %v1722
      %v1851 = vpack.c.b16 %v1723, %v1723
      %v1852 = vpack.c.b16 %v1724, %v1724
      %v1853 = vpack.c.b16 %v1725, %v1725
      %v1854 = vpack.c.b16 %v1726, %v1726
      %v1855 = vpack.c.b16 %v1727, %v1727
      %v1856 = vpack.c.b16 %v1728, %v1728
      %v1857 = vpack.c.b16 %v1729, %v1729
      %v1858 = vpack.c.b16 %v1730, %v1730
      %v1859 = vpack.c.b16 %v1731, %v1731
      %v1860 = vpack.c.b16 %v1732, %v1732
      %v1861 = vpack.c.b16 %v1733, %v1733
      %v1862 = vpack.c.b16 %v1734, %v1734
      %v1863 = vpack.c.b16 %v1735, %v1735
      %v1864 = vpack.c.b16 %v1736, %v1736
      %v1865 = vpack.c.b16 %v1737, %v1737
      %v1866 = vpack.c.b16 %v1738, %v1738
      %v1867 = vpack.c.b16 %v1739, %v1739
      %v1868 = vpack.c.b16 %v1740, %v1740
      %v1869 = vpack.c.b16 %v1741, %v1741
      %v1870 = vpack.c.b16 %v1742, %v1742
      %v1871 = vpack.c.b16 %v1743, %v1743
      %v1872 = vpack.c.b16 %v1744, %v1744
      %v1873 = vpack.c.b16 %v1745, %v1745
      %v1874 = vpack.c.b16 %v1746, %v1746
      %v1875 = vpack.c.b16 %v1747, %v1747
      %v1876 = vpack.c.b16 %v1748, %v1748
      %v1877 = vpack.c.b16 %v1749, %v1749
      %v1878 = vpack.c.b16 %v1750, %v1750
      %v1879 = vpack.c.b16 %v1751, %v1751
      %v1880 = vpack.c.b16 %v1752, %v1752
      %v1881 = vpack.c.b16 %v1753, %v1753
      %v1882 = vpack.c.b16 %v1754, %v1754
      %v1883 = vpack.c.b16 %v1755, %v1755
      %v1884 = vpack.c.b16 %v1756, %v1756
      %v1885 = vpack.c.b16 %v1757, %v1757
      %v1886 = vpack.c.b16 %v1758, %v1758
      %v1887 = vpack.c.b16 %v1759, %v1759
      %v1888 = vpack.c.b16 %v1760, %v1760
      %v1889 = vpack.c.b16 %v1761, %v1761
      %v1890 = vpack.c.b16 %v1762, %v1762
      %v1891 = vpack.c.b16 %v1763, %v1763
      %v1892 = vpack.c.b16 %v1764, %v1764
      %v1893 = vpack.c.b16 %v1765, %v1765
      %v1894 = vpack.c.b16 %v1766, %v1766
      %v1895 = vpack.c.b16 %v1767, %v1767
      %v1896 = vpack.c.b16 %v1768, %v1768
      %v1897 = vpack.c.b16 %v1769, %v1769
      %v1898 = vpack.c.b16 %v1770, %v1770
      %v1899 = vpack.c.b16 %v1771, %v1771
      %v1900 = vpack.c.b16 %v1772, %v1772
      %v1901 = vpack.c.b16 %v1773, %v1773
      %v1902 = vpack.c.b16 %v1774, %v1774
      %v1903 = vpack.c.b16 %v1775, %v1775
      %v1904 = vpack.c.b16 %v1776, %v1776
      %v1905 = vpack.c.b16 %v1777, %v1777
      %v1906 = vpack.c.b16 %v1778, %v1778
      %v1907 = vpack.c.b16 %v1779, %v1779
      %v1908 = vpack.c.b16 %v1780, %v1780
      %2037 = vst [vmem:[%s145] sm:$0xf] %v1781
      %2038 = vst [vmem:[%s145 + $0x4] sm:$0xf] %v1782
      %2039 = vst [vmem:[%s145 + $0x8] sm:$0xf] %v1783
      %2040 = vst [vmem:[%s145 + $0xc] sm:$0xf] %v1784
      %2041 = vst [vmem:[%s145 + $0x10] sm:$0xf] %v1785
      %2042 = vst [vmem:[%s145 + $0x14] sm:$0xf] %v1786
      %2043 = vst [vmem:[%s145 + $0x18] sm:$0xf] %v1787
      %2044 = vst [vmem:[%s145 + $0x1c] sm:$0xf] %v1788
      %2045 = vst [vmem:[%s145 + $0x20] sm:$0xf] %v1789
      %2046 = vst [vmem:[%s145 + $0x24] sm:$0xf] %v1790
      %2047 = vst [vmem:[%s145 + $0x28] sm:$0xf] %v1791
      %2048 = vst [vmem:[%s145 + $0x2c] sm:$0xf] %v1792
      %2049 = vst [vmem:[%s145 + $0x30] sm:$0xf] %v1793
      %2050 = vst [vmem:[%s145 + $0x34] sm:$0xf] %v1794
      %2051 = vst [vmem:[%s145 + $0x38] sm:$0xf] %v1795
      %2052 = vst [vmem:[%s145 + $0x3c] sm:$0xf] %v1796
      %2053 = vst [vmem:[%s145 + $0x40] sm:$0xf] %v1797
      %2054 = vst [vmem:[%s145 + $0x44] sm:$0xf] %v1798
      %2055 = vst [vmem:[%s145 + $0x48] sm:$0xf] %v1799
      %2056 = vst [vmem:[%s145 + $0x4c] sm:$0xf] %v1800
      %2057 = vst [vmem:[%s145 + $0x50] sm:$0xf] %v1801
      %2058 = vst [vmem:[%s145 + $0x54] sm:$0xf] %v1802
      %2059 = vst [vmem:[%s145 + $0x58] sm:$0xf] %v1803
      %2060 = vst [vmem:[%s145 + $0x5c] sm:$0xf] %v1804
      %2061 = vst [vmem:[%s145 + $0x60] sm:$0xf] %v1805
      %2062 = vst [vmem:[%s145 + $0x64] sm:$0xf] %v1806
      %2063 = vst [vmem:[%s145 + $0x68] sm:$0xf] %v1807
      %2064 = vst [vmem:[%s145 + $0x6c] sm:$0xf] %v1808
      %2065 = vst [vmem:[%s145 + $0x70] sm:$0xf] %v1809
      %2066 = vst [vmem:[%s145 + $0x74] sm:$0xf] %v1810
      %2067 = vst [vmem:[%s145 + $0x78] sm:$0xf] %v1811
      %2068 = vst [vmem:[%s145 + $0x7c] sm:$0xf] %v1812
      %2069 = vst [vmem:[%s145 + $0x80] sm:$0xf] %v1813
      %2070 = vst [vmem:[%s145 + $0x84] sm:$0xf] %v1814
      %2071 = vst [vmem:[%s145 + $0x88] sm:$0xf] %v1815
      %2072 = vst [vmem:[%s145 + $0x8c] sm:$0xf] %v1816
      %2073 = vst [vmem:[%s145 + $0x90] sm:$0xf] %v1817
      %2074 = vst [vmem:[%s145 + $0x94] sm:$0xf] %v1818
      %2075 = vst [vmem:[%s145 + $0x98] sm:$0xf] %v1819
      %2076 = vst [vmem:[%s145 + $0x9c] sm:$0xf] %v1820
      %2077 = vst [vmem:[%s145 + $0xa0] sm:$0xf] %v1821
      %2078 = vst [vmem:[%s145 + $0xa4] sm:$0xf] %v1822
      %2079 = vst [vmem:[%s145 + $0xa8] sm:$0xf] %v1823
      %2080 = vst [vmem:[%s145 + $0xac] sm:$0xf] %v1824
      %2081 = vst [vmem:[%s145 + $0xb0] sm:$0xf] %v1825
      %2082 = vst [vmem:[%s145 + $0xb4] sm:$0xf] %v1826
      %2083 = vst [vmem:[%s145 + $0xb8] sm:$0xf] %v1827
      %2084 = vst [vmem:[%s145 + $0xbc] sm:$0xf] %v1828
      %2085 = vst [vmem:[%s145 + $0xc0] sm:$0xf] %v1829
      %2086 = vst [vmem:[%s145 + $0xc4] sm:$0xf] %v1830
      %2087 = vst [vmem:[%s145 + $0xc8] sm:$0xf] %v1831
      %2088 = vst [vmem:[%s145 + $0xcc] sm:$0xf] %v1832
      %2089 = vst [vmem:[%s145 + $0xd0] sm:$0xf] %v1833
      %2090 = vst [vmem:[%s145 + $0xd4] sm:$0xf] %v1834
      %2091 = vst [vmem:[%s145 + $0xd8] sm:$0xf] %v1835
      %2092 = vst [vmem:[%s145 + $0xdc] sm:$0xf] %v1836
      %2093 = vst [vmem:[%s145 + $0xe0] sm:$0xf] %v1837
      %2094 = vst [vmem:[%s145 + $0xe4] sm:$0xf] %v1838
      %2095 = vst [vmem:[%s145 + $0xe8] sm:$0xf] %v1839
      %2096 = vst [vmem:[%s145 + $0xec] sm:$0xf] %v1840
      %2097 = vst [vmem:[%s145 + $0xf0] sm:$0xf] %v1841
      %2098 = vst [vmem:[%s145 + $0xf4] sm:$0xf] %v1842
      %2099 = vst [vmem:[%s145 + $0xf8] sm:$0xf] %v1843
      %2100 = vst [vmem:[%s145 + $0xfc] sm:$0xf] %v1844
      %2101 = vst [vmem:[%s145 + $0x100] sm:$0xf] %v1845
      %2102 = vst [vmem:[%s145 + $0x104] sm:$0xf] %v1846
      %2103 = vst [vmem:[%s145 + $0x108] sm:$0xf] %v1847
      %2104 = vst [vmem:[%s145 + $0x10c] sm:$0xf] %v1848
      %2105 = vst [vmem:[%s145 + $0x110] sm:$0xf] %v1849
      %2106 = vst [vmem:[%s145 + $0x114] sm:$0xf] %v1850
      %2107 = vst [vmem:[%s145 + $0x118] sm:$0xf] %v1851
      %2108 = vst [vmem:[%s145 + $0x11c] sm:$0xf] %v1852
      %2109 = vst [vmem:[%s145 + $0x120] sm:$0xf] %v1853
      %2110 = vst [vmem:[%s145 + $0x124] sm:$0xf] %v1854
      %2111 = vst [vmem:[%s145 + $0x128] sm:$0xf] %v1855
      %2112 = vst [vmem:[%s145 + $0x12c] sm:$0xf] %v1856
      %2113 = vst [vmem:[%s145 + $0x130] sm:$0xf] %v1857
      %2114 = vst [vmem:[%s145 + $0x134] sm:$0xf] %v1858
      %2115 = vst [vmem:[%s145 + $0x138] sm:$0xf] %v1859
      %2116 = vst [vmem:[%s145 + $0x13c] sm:$0xf] %v1860
      %2117 = vst [vmem:[%s145 + $0x140] sm:$0xf] %v1861
      %2118 = vst [vmem:[%s145 + $0x144] sm:$0xf] %v1862
      %2119 = vst [vmem:[%s145 + $0x148] sm:$0xf] %v1863
      %2120 = vst [vmem:[%s145 + $0x14c] sm:$0xf] %v1864
      %2121 = vst [vmem:[%s145 + $0x150] sm:$0xf] %v1865
      %2122 = vst [vmem:[%s145 + $0x154] sm:$0xf] %v1866
      %2123 = vst [vmem:[%s145 + $0x158] sm:$0xf] %v1867
      %2124 = vst [vmem:[%s145 + $0x15c] sm:$0xf] %v1868
      %2125 = vst [vmem:[%s145 + $0x160] sm:$0xf] %v1869
      %2126 = vst [vmem:[%s145 + $0x164] sm:$0xf] %v1870
      %2127 = vst [vmem:[%s145 + $0x168] sm:$0xf] %v1871
      %2128 = vst [vmem:[%s145 + $0x16c] sm:$0xf] %v1872
      %2129 = vst [vmem:[%s145 + $0x170] sm:$0xf] %v1873
      %2130 = vst [vmem:[%s145 + $0x174] sm:$0xf] %v1874
      %2131 = vst [vmem:[%s145 + $0x178] sm:$0xf] %v1875
      %2132 = vst [vmem:[%s145 + $0x17c] sm:$0xf] %v1876
      %2133 = vst [vmem:[%s145 + $0x180] sm:$0xf] %v1877
      %2134 = vst [vmem:[%s145 + $0x184] sm:$0xf] %v1878
      %2135 = vst [vmem:[%s145 + $0x188] sm:$0xf] %v1879
      %2136 = vst [vmem:[%s145 + $0x18c] sm:$0xf] %v1880
      %2137 = vst [vmem:[%s145 + $0x190] sm:$0xf] %v1881
      %2138 = vst [vmem:[%s145 + $0x194] sm:$0xf] %v1882
      %2139 = vst [vmem:[%s145 + $0x198] sm:$0xf] %v1883
      %2140 = vst [vmem:[%s145 + $0x19c] sm:$0xf] %v1884
      %2141 = vst [vmem:[%s145 + $0x1a0] sm:$0xf] %v1885
      %2142 = vst [vmem:[%s145 + $0x1a4] sm:$0xf] %v1886
      %2143 = vst [vmem:[%s145 + $0x1a8] sm:$0xf] %v1887
      %2144 = vst [vmem:[%s145 + $0x1ac] sm:$0xf] %v1888
      %2145 = vst [vmem:[%s145 + $0x1b0] sm:$0xf] %v1889
      %2146 = vst [vmem:[%s145 + $0x1b4] sm:$0xf] %v1890
      %2147 = vst [vmem:[%s145 + $0x1b8] sm:$0xf] %v1891
      %2148 = vst [vmem:[%s145 + $0x1bc] sm:$0xf] %v1892
      %2149 = vst [vmem:[%s145 + $0x1c0] sm:$0xf] %v1893
      %2150 = vst [vmem:[%s145 + $0x1c4] sm:$0xf] %v1894
      %2151 = vst [vmem:[%s145 + $0x1c8] sm:$0xf] %v1895
      %2152 = vst [vmem:[%s145 + $0x1cc] sm:$0xf] %v1896
      %2153 = vst [vmem:[%s145 + $0x1d0] sm:$0xf] %v1897
      %2154 = vst [vmem:[%s145 + $0x1d4] sm:$0xf] %v1898
      %2155 = vst [vmem:[%s145 + $0x1d8] sm:$0xf] %v1899
      %2156 = vst [vmem:[%s145 + $0x1dc] sm:$0xf] %v1900
      %2157 = vst [vmem:[%s145 + $0x1e0] sm:$0xf] %v1901
      %2158 = vst [vmem:[%s145 + $0x1e4] sm:$0xf] %v1902
      %2159 = vst [vmem:[%s145 + $0x1e8] sm:$0xf] %v1903
      %2160 = vst [vmem:[%s145 + $0x1ec] sm:$0xf] %v1904
      %2161 = vst [vmem:[%s145 + $0x1f0] sm:$0xf] %v1905
      %2162 = vst [vmem:[%s145 + $0x1f4] sm:$0xf] %v1906
      %2163 = vst [vmem:[%s145 + $0x1f8] sm:$0xf] %v1907
      %2164 = vst [vmem:[%s145 + $0x1fc] sm:$0xf] %v1908
      %s2165 = smul.u32 128, %s13
      %p2166 = scmp.lt.s32.totalorder %s2165, 255
      %s2167 = scalar_select %p2166, %s2165, 255
      %s2168 = smul.addr %s2167, 4
      %s2169 = scalar_lea.vmem %s2, %s2168
      // Predicated region
      $region29: #{discriminator_forward.5} parent=27 // pred_check
        %p2170 = pneg %p78
      $region30: #{discriminator_forward.5} parent=27 // pred_check_branch
        %2172 = sbr.rel (%p2170) target = $region32
      $region31: #{discriminator_forward.5} parent=27 // pred_region
        %s2173 = smul.u32 128, %s13
      $region32: #{discriminator_forward.5} parent=27 // pred_fallthru
        _
    $region28: #{discriminator_forward.5} parent=5 // pred_fallthru
      _
    %p2174 = scmp.le.s32.totalorder 2, %s8
    // Predicated region
    $region33: #{discriminator_forward.5} parent=5 // pred_check
      %p2175 = pneg %p2174
    $region34: #{discriminator_forward.5} parent=5 // pred_check_branch
      %2177 = sbr.rel (%p2175) target = $region36
    $region35: #{discriminator_forward.5} parent=5 // pred_region
      %s2178 = ssub.s32 %s8, 2
      // Predicated region
      $region37: #{discriminator_forward.5} parent=35 // pred_check
        %p2179 = pneg %p84
      $region38: #{discriminator_forward.5} parent=35 // pred_check_branch
        %2181 = sbr.rel (%p2179) target = $region40
      $region39: #{discriminator_forward.5} parent=35 // pred_region
        %s2182 = smul.u32 128, %s14
        %p2183 = scmp.lt.s32.totalorder %s2182, 255
        %s2184 = scalar_select %p2183, %s2182, 255
        %s2185 = smul.addr %s2184, 4
        %s2186 = scalar_lea.vmem %s2, %s2185
      $region40: #{discriminator_forward.5} parent=35 // pred_fallthru
        _
    $region36: #{discriminator_forward.5} parent=5 // pred_fallthru
      _
  $region6: #{discriminator_forward.5} parent=0 // loop_footer
    %s12 = sadd.s32 1, %s8
  $region7: #{discriminator_forward.5} parent=0 // loop_footer_branch
    %7 = sbr.rel target = $region3
  $region8: #{discriminator_forward.5} parent=0 // loop_exit
    _

// kernel: discriminator_forward.6
$region0: #{discriminator_forward.6}
  #allocation0 [shape = 'u32[]', space=smem, size = 0x4, offset = 0x4, fixed_abs, tag = 'smem constant byte address 0x4 - core index']
  #allocation1 [shape = 'u32[144,128]{1,0:T(1,128)}', space=vmem, size = 0x12000, scoped, tag = 'internal scratch']
  %s0 = inlined_call_operand.vmem [shape: bf16[512,256], index: 0, kind: input, shape index: {}]
  %s1 = inlined_call_operand.vmem [shape: bf16[256,128], index: 1, kind: input, shape index: {}]
  %s2 = inlined_call_operand.vmem [shape: f32[1,128], index: 2, kind: input, shape index: {}]
  %s3 = inlined_call_operand.vmem [shape: f32[1,128], index: 3, kind: input, shape index: {}]
  %s4 = inlined_call_operand.vmem [shape: bf16[512,128], index: 4, kind: output, shape index: {}]
  %s5 = sld [smem:[#allocation0]]
  $region26: #{discriminator_forward.6} parent=0
    _
  %s7 = ssub.s32 1, %s5
  %s8 = scalar_select 0, %s7, %s5
  // Predicated region
  $region2: #{discriminator_forward.6} parent=0 // pred_check
    _
  $region3: #{discriminator_forward.6} parent=0 // pred_check_branch
    %10 = sbr.rel (0) target = $region5
  $region4: #{discriminator_forward.6} parent=0 // pred_region
    _
  $region5: #{discriminator_forward.6} parent=0 // pred_fallthru
    _
  // Predicated region
  $region6: #{discriminator_forward.6} parent=0 // pred_check
    _
  $region7: #{discriminator_forward.6} parent=0 // pred_check_branch
    %12 = sbr.rel (0) target = $region9
  $region8: #{discriminator_forward.6} parent=0 // pred_region
    _
  $region9: #{discriminator_forward.6} parent=0 // pred_fallthru
    _
  // Predicated region
  $region10: #{discriminator_forward.6} parent=0 // pred_check
    _
  $region11: #{discriminator_forward.6} parent=0 // pred_check_branch
    %14 = sbr.rel (0) target = $region13
  $region12: #{discriminator_forward.6} parent=0 // pred_region
    _
  $region13: #{discriminator_forward.6} parent=0 // pred_fallthru
    _
  // Predicated region
  $region14: #{discriminator_forward.6} parent=0 // pred_check
    _
  $region15: #{discriminator_forward.6} parent=0 // pred_check_branch
    %16 = sbr.rel (0) target = $region17
  $region16: #{discriminator_forward.6} parent=0 // pred_region
    _
  $region17: #{discriminator_forward.6} parent=0 // pred_fallthru
    _
  %v18 = vld [vmem:[%s0] sm:$0xff]
  %v19 = vld [vmem:[%s0 + $0x8] sm:$0xff]
  %v20 = vld [vmem:[%s0 + $0x10] sm:$0xff]
  %v21 = vld [vmem:[%s0 + $0x18] sm:$0xff]
  %v22 = vld [vmem:[%s0 + $0x20] sm:$0xff]
  %v23 = vld [vmem:[%s0 + $0x28] sm:$0xff]
  %v24 = vld [vmem:[%s0 + $0x30] sm:$0xff]
  %v25 = vld [vmem:[%s0 + $0x38] sm:$0xff]
  %v26 = vld [vmem:[%s0 + $0x40] sm:$0xff]
  %v27 = vld [vmem:[%s0 + $0x48] sm:$0xff]
  %v28 = vld [vmem:[%s0 + $0x50] sm:$0xff]
  %v29 = vld [vmem:[%s0 + $0x58] sm:$0xff]
  %v30 = vld [vmem:[%s0 + $0x60] sm:$0xff]
  %v31 = vld [vmem:[%s0 + $0x68] sm:$0xff]
  %v32 = vld [vmem:[%s0 + $0x70] sm:$0xff]
  %v33 = vld [vmem:[%s0 + $0x78] sm:$0xff]
  %v34 = vld [vmem:[%s0 + $0x80] sm:$0xff]
  %v35 = vld [vmem:[%s0 + $0x88] sm:$0xff]
  %v36 = vld [vmem:[%s0 + $0x90] sm:$0xff]
  %v37 = vld [vmem:[%s0 + $0x98] sm:$0xff]
  %v38 = vld [vmem:[%s0 + $0xa0] sm:$0xff]
  %v39 = vld [vmem:[%s0 + $0xa8] sm:$0xff]
  %v40 = vld [vmem:[%s0 + $0xb0] sm:$0xff]
  %v41 = vld [vmem:[%s0 + $0xb8] sm:$0xff]
  %v42 = vld [vmem:[%s0 + $0xc0] sm:$0xff]
  %v43 = vld [vmem:[%s0 + $0xc8] sm:$0xff]
  %v44 = vld [vmem:[%s0 + $0xd0] sm:$0xff]
  %v45 = vld [vmem:[%s0 + $0xd8] sm:$0xff]
  %v46 = vld [vmem:[%s0 + $0xe0] sm:$0xff]
  %v47 = vld [vmem:[%s0 + $0xe8] sm:$0xff]
  %v48 = vld [vmem:[%s0 + $0xf0] sm:$0xff]
  %v49 = vld [vmem:[%s0 + $0xf8] sm:$0xff]
  %v50 = vld [vmem:[%s0 + $0x100] sm:$0xff]
  %v51 = vld [vmem:[%s0 + $0x108] sm:$0xff]
  %v52 = vld [vmem:[%s0 + $0x110] sm:$0xff]
  %v53 = vld [vmem:[%s0 + $0x118] sm:$0xff]
  %v54 = vld [vmem:[%s0 + $0x120] sm:$0xff]
  %v55 = vld [vmem:[%s0 + $0x128] sm:$0xff]
  %v56 = vld [vmem:[%s0 + $0x130] sm:$0xff]
  %v57 = vld [vmem:[%s0 + $0x138] sm:$0xff]
  %v58 = vld [vmem:[%s0 + $0x140] sm:$0xff]
  %v59 = vld [vmem:[%s0 + $0x148] sm:$0xff]
  %v60 = vld [vmem:[%s0 + $0x150] sm:$0xff]
  %v61 = vld [vmem:[%s0 + $0x158] sm:$0xff]
  %v62 = vld [vmem:[%s0 + $0x160] sm:$0xff]
  %v63 = vld [vmem:[%s0 + $0x168] sm:$0xff]
  %v64 = vld [vmem:[%s0 + $0x170] sm:$0xff]
  %v65 = vld [vmem:[%s0 + $0x178] sm:$0xff]
  %v66 = vld [vmem:[%s0 + $0x180] sm:$0xff]
  %v67 = vld [vmem:[%s0 + $0x188] sm:$0xff]
  %v68 = vld [vmem:[%s0 + $0x190] sm:$0xff]
  %v69 = vld [vmem:[%s0 + $0x198] sm:$0xff]
  %v70 = vld [vmem:[%s0 + $0x1a0] sm:$0xff]
  %v71 = vld [vmem:[%s0 + $0x1a8] sm:$0xff]
  %v72 = vld [vmem:[%s0 + $0x1b0] sm:$0xff]
  %v73 = vld [vmem:[%s0 + $0x1b8] sm:$0xff]
  %v74 = vld [vmem:[%s0 + $0x1c0] sm:$0xff]
  %v75 = vld [vmem:[%s0 + $0x1c8] sm:$0xff]
  %v76 = vld [vmem:[%s0 + $0x1d0] sm:$0xff]
  %v77 = vld [vmem:[%s0 + $0x1d8] sm:$0xff]
  %v78 = vld [vmem:[%s0 + $0x1e0] sm:$0xff]
  %v79 = vld [vmem:[%s0 + $0x1e8] sm:$0xff]
  %v80 = vld [vmem:[%s0 + $0x1f0] sm:$0xff]
  %v81 = vld [vmem:[%s0 + $0x1f8] sm:$0xff]
  %v82 = vld [vmem:[%s1] sm:$0xf]
  %v83 = vld [vmem:[%s1 + $0x4] sm:$0xf]
  %v84 = vld [vmem:[%s1 + $0x8] sm:$0xf]
  %v85 = vld [vmem:[%s1 + $0xc] sm:$0xf]
  %v86 = vld [vmem:[%s1 + $0x10] sm:$0xf]
  %v87 = vld [vmem:[%s1 + $0x14] sm:$0xf]
  %v88 = vld [vmem:[%s1 + $0x18] sm:$0xf]
  %v89 = vld [vmem:[%s1 + $0x1c] sm:$0xf]
  %v90 = vld [vmem:[%s1 + $0x20] sm:$0xf]
  %v91 = vld [vmem:[%s1 + $0x24] sm:$0xf]
  %v92 = vld [vmem:[%s1 + $0x28] sm:$0xf]
  %v93 = vld [vmem:[%s1 + $0x2c] sm:$0xf]
  %v94 = vld [vmem:[%s1 + $0x30] sm:$0xf]
  %v95 = vld [vmem:[%s1 + $0x34] sm:$0xf]
  %v96 = vld [vmem:[%s1 + $0x38] sm:$0xf]
  %v97 = vld [vmem:[%s1 + $0x3c] sm:$0xf]
  %v98 = vld [vmem:[%s1 + $0x40] sm:$0xf]
  %v99 = vld [vmem:[%s1 + $0x44] sm:$0xf]
  %v100 = vld [vmem:[%s1 + $0x48] sm:$0xf]
  %v101 = vld [vmem:[%s1 + $0x4c] sm:$0xf]
  %v102 = vld [vmem:[%s1 + $0x50] sm:$0xf]
  %v103 = vld [vmem:[%s1 + $0x54] sm:$0xf]
  %v104 = vld [vmem:[%s1 + $0x58] sm:$0xf]
  %v105 = vld [vmem:[%s1 + $0x5c] sm:$0xf]
  %v106 = vld [vmem:[%s1 + $0x60] sm:$0xf]
  %v107 = vld [vmem:[%s1 + $0x64] sm:$0xf]
  %v108 = vld [vmem:[%s1 + $0x68] sm:$0xf]
  %v109 = vld [vmem:[%s1 + $0x6c] sm:$0xf]
  %v110 = vld [vmem:[%s1 + $0x70] sm:$0xf]
  %v111 = vld [vmem:[%s1 + $0x74] sm:$0xf]
  %v112 = vld [vmem:[%s1 + $0x78] sm:$0xf]
  %v113 = vld [vmem:[%s1 + $0x7c] sm:$0xf]
  %v178 = vunpack.c.l.b16 %v18
  %v179 = vunpack.c.h.b16 %v18
  %v180 = vunpack.c.l.b16 %v19
  %v181 = vunpack.c.h.b16 %v19
  %v182 = vunpack.c.l.b16 %v20
  %v183 = vunpack.c.h.b16 %v20
  %v184 = vunpack.c.l.b16 %v21
  %v185 = vunpack.c.h.b16 %v21
  %v186 = vunpack.c.l.b16 %v22
  %v187 = vunpack.c.h.b16 %v22
  %v188 = vunpack.c.l.b16 %v23
  %v189 = vunpack.c.h.b16 %v23
  %v190 = vunpack.c.l.b16 %v24
  %v191 = vunpack.c.h.b16 %v24
  %v192 = vunpack.c.l.b16 %v25
  %v193 = vunpack.c.h.b16 %v25
  %v194 = vunpack.c.l.b16 %v26
  %v195 = vunpack.c.h.b16 %v26
  %v196 = vunpack.c.l.b16 %v27
  %v197 = vunpack.c.h.b16 %v27
  %v198 = vunpack.c.l.b16 %v28
  %v199 = vunpack.c.h.b16 %v28
  %v200 = vunpack.c.l.b16 %v29
  %v201 = vunpack.c.h.b16 %v29
  %v202 = vunpack.c.l.b16 %v30
  %v203 = vunpack.c.h.b16 %v30
  %v204 = vunpack.c.l.b16 %v31
  %v205 = vunpack.c.h.b16 %v31
  %v206 = vunpack.c.l.b16 %v32
  %v207 = vunpack.c.h.b16 %v32
  %v208 = vunpack.c.l.b16 %v33
  %v209 = vunpack.c.h.b16 %v33
  %v210 = vunpack.c.l.b16 %v34
  %v211 = vunpack.c.h.b16 %v34
  %v212 = vunpack.c.l.b16 %v35
  %v213 = vunpack.c.h.b16 %v35
  %v214 = vunpack.c.l.b16 %v36
  %v215 = vunpack.c.h.b16 %v36
  %v216 = vunpack.c.l.b16 %v37
  %v217 = vunpack.c.h.b16 %v37
  %v218 = vunpack.c.l.b16 %v38
  %v219 = vunpack.c.h.b16 %v38
  %v220 = vunpack.c.l.b16 %v39
  %v221 = vunpack.c.h.b16 %v39
  %v222 = vunpack.c.l.b16 %v40
  %v223 = vunpack.c.h.b16 %v40
  %v224 = vunpack.c.l.b16 %v41
  %v225 = vunpack.c.h.b16 %v41
  %v226 = vunpack.c.l.b16 %v42
  %v227 = vunpack.c.h.b16 %v42
  %v228 = vunpack.c.l.b16 %v43
  %v229 = vunpack.c.h.b16 %v43
  %v230 = vunpack.c.l.b16 %v44
  %v231 = vunpack.c.h.b16 %v44
  %v232 = vunpack.c.l.b16 %v45
  %v233 = vunpack.c.h.b16 %v45
  %v234 = vunpack.c.l.b16 %v46
  %v235 = vunpack.c.h.b16 %v46
  %v236 = vunpack.c.l.b16 %v47
  %v237 = vunpack.c.h.b16 %v47
  %v238 = vunpack.c.l.b16 %v48
  %v239 = vunpack.c.h.b16 %v48
  %v240 = vunpack.c.l.b16 %v49
  %v241 = vunpack.c.h.b16 %v49
  %v242 = vunpack.c.l.b16 %v50
  %v243 = vunpack.c.h.b16 %v50
  %v244 = vunpack.c.l.b16 %v51
  %v245 = vunpack.c.h.b16 %v51
  %v246 = vunpack.c.l.b16 %v52
  %v247 = vunpack.c.h.b16 %v52
  %v248 = vunpack.c.l.b16 %v53
  %v249 = vunpack.c.h.b16 %v53
  %v250 = vunpack.c.l.b16 %v54
  %v251 = vunpack.c.h.b16 %v54
  %v252 = vunpack.c.l.b16 %v55
  %v253 = vunpack.c.h.b16 %v55
  %v254 = vunpack.c.l.b16 %v56
  %v255 = vunpack.c.h.b16 %v56
  %v256 = vunpack.c.l.b16 %v57
  %v257 = vunpack.c.h.b16 %v57
  %v258 = vunpack.c.l.b16 %v58
  %v259 = vunpack.c.h.b16 %v58
  %v260 = vunpack.c.l.b16 %v59
  %v261 = vunpack.c.h.b16 %v59
  %v262 = vunpack.c.l.b16 %v60
  %v263 = vunpack.c.h.b16 %v60
  %v264 = vunpack.c.l.b16 %v61
  %v265 = vunpack.c.h.b16 %v61
  %v266 = vunpack.c.l.b16 %v62
  %v267 = vunpack.c.h.b16 %v62
  %v268 = vunpack.c.l.b16 %v63
  %v269 = vunpack.c.h.b16 %v63
  %v270 = vunpack.c.l.b16 %v64
  %v271 = vunpack.c.h.b16 %v64
  %v272 = vunpack.c.l.b16 %v65
  %v273 = vunpack.c.h.b16 %v65
  %v274 = vunpack.c.l.b16 %v66
  %v275 = vunpack.c.h.b16 %v66
  %v276 = vunpack.c.l.b16 %v67
  %v277 = vunpack.c.h.b16 %v67
  %v278 = vunpack.c.l.b16 %v68
  %v279 = vunpack.c.h.b16 %v68
  %v280 = vunpack.c.l.b16 %v69
  %v281 = vunpack.c.h.b16 %v69
  %v282 = vunpack.c.l.b16 %v70
  %v283 = vunpack.c.h.b16 %v70
  %v284 = vunpack.c.l.b16 %v71
  %v285 = vunpack.c.h.b16 %v71
  %v286 = vunpack.c.l.b16 %v72
  %v287 = vunpack.c.h.b16 %v72
  %v288 = vunpack.c.l.b16 %v73
  %v289 = vunpack.c.h.b16 %v73
  %v290 = vunpack.c.l.b16 %v74
  %v291 = vunpack.c.h.b16 %v74
  %v292 = vunpack.c.l.b16 %v75
  %v293 = vunpack.c.h.b16 %v75
  %v294 = vunpack.c.l.b16 %v76
  %v295 = vunpack.c.h.b16 %v76
  %v296 = vunpack.c.l.b16 %v77
  %v297 = vunpack.c.h.b16 %v77
  %v298 = vunpack.c.l.b16 %v78
  %v299 = vunpack.c.h.b16 %v78
  %v300 = vunpack.c.l.b16 %v79
  %v301 = vunpack.c.h.b16 %v79
  %v302 = vunpack.c.l.b16 %v80
  %v303 = vunpack.c.h.b16 %v80
  %v304 = vunpack.c.l.b16 %v81
  %v305 = vunpack.c.h.b16 %v81
  %v306 = vpack.c.b16 %v180, %v178
  %v307 = vpack.c.b16 %v181, %v179
  %v308 = vpack.c.b16 %v184, %v182
  %v309 = vpack.c.b16 %v185, %v183
  %v310 = vpack.c.b16 %v188, %v186
  %v311 = vpack.c.b16 %v189, %v187
  %v312 = vpack.c.b16 %v192, %v190
  %v313 = vpack.c.b16 %v193, %v191
  %v314 = vpack.c.b16 %v196, %v194
  %v315 = vpack.c.b16 %v197, %v195
  %v316 = vpack.c.b16 %v200, %v198
  %v317 = vpack.c.b16 %v201, %v199
  %v318 = vpack.c.b16 %v204, %v202
  %v319 = vpack.c.b16 %v205, %v203
  %v320 = vpack.c.b16 %v208, %v206
  %v321 = vpack.c.b16 %v209, %v207
  %v322 = vpack.c.b16 %v212, %v210
  %v323 = vpack.c.b16 %v213, %v211
  %v324 = vpack.c.b16 %v216, %v214
  %v325 = vpack.c.b16 %v217, %v215
  %v326 = vpack.c.b16 %v220, %v218
  %v327 = vpack.c.b16 %v221, %v219
  %v328 = vpack.c.b16 %v224, %v222
  %v329 = vpack.c.b16 %v225, %v223
  %v330 = vpack.c.b16 %v228, %v226
  %v331 = vpack.c.b16 %v229, %v227
  %v332 = vpack.c.b16 %v232, %v230
  %v333 = vpack.c.b16 %v233, %v231
  %v334 = vpack.c.b16 %v236, %v234
  %v335 = vpack.c.b16 %v237, %v235
  %v336 = vpack.c.b16 %v240, %v238
  %v337 = vpack.c.b16 %v241, %v239
  %v338 = vpack.c.b16 %v244, %v242
  %v339 = vpack.c.b16 %v245, %v243
  %v340 = vpack.c.b16 %v248, %v246
  %v341 = vpack.c.b16 %v249, %v247
  %v342 = vpack.c.b16 %v252, %v250
  %v343 = vpack.c.b16 %v253, %v251
  %v344 = vpack.c.b16 %v256, %v254
  %v345 = vpack.c.b16 %v257, %v255
  %v346 = vpack.c.b16 %v260, %v258
  %v347 = vpack.c.b16 %v261, %v259
  %v348 = vpack.c.b16 %v264, %v262
  %v349 = vpack.c.b16 %v265, %v263
  %v350 = vpack.c.b16 %v268, %v266
  %v351 = vpack.c.b16 %v269, %v267
  %v352 = vpack.c.b16 %v272, %v270
  %v353 = vpack.c.b16 %v273, %v271
  %v354 = vpack.c.b16 %v276, %v274
  %v355 = vpack.c.b16 %v277, %v275
  %v356 = vpack.c.b16 %v280, %v278
  %v357 = vpack.c.b16 %v281, %v279
  %v358 = vpack.c.b16 %v284, %v282
  %v359 = vpack.c.b16 %v285, %v283
  %v360 = vpack.c.b16 %v288, %v286
  %v361 = vpack.c.b16 %v289, %v287
  %v362 = vpack.c.b16 %v292, %v290
  %v363 = vpack.c.b16 %v293, %v291
  %v364 = vpack.c.b16 %v296, %v294
  %v365 = vpack.c.b16 %v297, %v295
  %v366 = vpack.c.b16 %v300, %v298
  %v367 = vpack.c.b16 %v301, %v299
  %v368 = vpack.c.b16 %v304, %v302
  %v369 = vpack.c.b16 %v305, %v303
  %v466 = vunpack.c.l.b16 %v82
  %v467 = vunpack.c.l.b16 %v83
  %v468 = vunpack.c.l.b16 %v84
  %v469 = vunpack.c.l.b16 %v85
  %v470 = vunpack.c.l.b16 %v86
  %v471 = vunpack.c.l.b16 %v87
  %v472 = vunpack.c.l.b16 %v88
  %v473 = vunpack.c.l.b16 %v89
  %v474 = vunpack.c.l.b16 %v90
  %v475 = vunpack.c.l.b16 %v91
  %v476 = vunpack.c.l.b16 %v92
  %v477 = vunpack.c.l.b16 %v93
  %v478 = vunpack.c.l.b16 %v94
  %v479 = vunpack.c.l.b16 %v95
  %v480 = vunpack.c.l.b16 %v96
  %v481 = vunpack.c.l.b16 %v97
  %v482 = vunpack.c.l.b16 %v98
  %v483 = vunpack.c.l.b16 %v99
  %v484 = vunpack.c.l.b16 %v100
  %v485 = vunpack.c.l.b16 %v101
  %v486 = vunpack.c.l.b16 %v102
  %v487 = vunpack.c.l.b16 %v103
  %v488 = vunpack.c.l.b16 %v104
  %v489 = vunpack.c.l.b16 %v105
  %v490 = vunpack.c.l.b16 %v106
  %v491 = vunpack.c.l.b16 %v107
  %v492 = vunpack.c.l.b16 %v108
  %v493 = vunpack.c.l.b16 %v109
  %v494 = vunpack.c.l.b16 %v110
  %v495 = vunpack.c.l.b16 %v111
  %v496 = vunpack.c.l.b16 %v112
  %v497 = vunpack.c.l.b16 %v113
  %v498 = vpack.c.b16 %v467, %v466
  %v499 = vpack.c.b16 %v469, %v468
  %v500 = vpack.c.b16 %v471, %v470
  %v501 = vpack.c.b16 %v473, %v472
  %v502 = vpack.c.b16 %v475, %v474
  %v503 = vpack.c.b16 %v477, %v476
  %v504 = vpack.c.b16 %v479, %v478
  %v505 = vpack.c.b16 %v481, %v480
  %v506 = vpack.c.b16 %v483, %v482
  %v507 = vpack.c.b16 %v485, %v484
  %v508 = vpack.c.b16 %v487, %v486
  %v509 = vpack.c.b16 %v489, %v488
  %v510 = vpack.c.b16 %v491, %v490
  %v511 = vpack.c.b16 %v493, %v492
  %v512 = vpack.c.b16 %v495, %v494
  %v513 = vpack.c.b16 %v497, %v496
  %530 = vmatprep.subr.bf16.mxu0 0
  %531 = vmatpush1.bf16.msra.mxu0 %v498
  %532 = vmatprep.subr.bf16.mxu0 0
  %533 = vmatpush1.bf16.msra.mxu0 %v499
  %534 = vmatprep.subr.bf16.mxu0 0
  %535 = vmatpush1.bf16.msra.mxu0 %v500
  %536 = vmatprep.subr.bf16.mxu0 0
  %537 = vmatpush1.bf16.msra.mxu0 %v501
  %538 = vmatprep.subr.bf16.mxu0 0
  %539 = vmatpush1.bf16.msra.mxu0 %v502
  %540 = vmatprep.subr.bf16.mxu0 0
  %541 = vmatpush1.bf16.msra.mxu0 %v503
  %542 = vmatprep.subr.bf16.mxu0 0
  %543 = vmatpush1.bf16.msra.mxu0 %v504
  %544 = vmatprep.subr.bf16.mxu0 0
  %545 = vmatpush1.bf16.msra.mxu0 %v505
  %546 = vmatprep.subr.bf16.mxu0 0
  %547 = vmatpush1.bf16.msra.mxu0 %v506
  %548 = vmatprep.subr.bf16.mxu0 0
  %549 = vmatpush1.bf16.msra.mxu0 %v507
  %550 = vmatprep.subr.bf16.mxu0 0
  %551 = vmatpush1.bf16.msra.mxu0 %v508
  %552 = vmatprep.subr.bf16.mxu0 0
  %553 = vmatpush1.bf16.msra.mxu0 %v509
  %554 = vmatprep.subr.bf16.mxu0 0
  %555 = vmatpush1.bf16.msra.mxu0 %v510
  %556 = vmatprep.subr.bf16.mxu0 0
  %557 = vmatpush1.bf16.msra.mxu0 %v511
  %558 = vmatprep.subr.bf16.mxu0 0
  %559 = vmatpush1.bf16.msra.mxu0 %v512
  %560 = vmatprep.subr.bf16.mxu0 0
  %561 = vmatpush1.bf16.msra.mxu0 %v513
  %562 = vmatprep.mubr.bf16.mxu0 %v307
  %563 = vmatmul.mubr.bf16.gmra.mrb[0].mxu0 %v306
  %v564 = vpop.f32.mrb[0].mxu0
  %v565 = vadd.f32 0.0, %v564
  %v566 = vpop.f32.mrb[0].mxu0
  %v567 = vpop.f32.mrb[0].mxu0
  %v568 = vadd.f32 0.0, %v567
  %v569 = vpop.f32.mrb[0].mxu0
  %570 = vmatprep.mubr.bf16.mxu0 %v309
  %571 = vmatmul.mubr.bf16.gmra.mrb[0].mxu0 %v308
  %v572 = vpop.f32.mrb[0].mxu0
  %v573 = vadd.f32 0.0, %v572
  %v574 = vpop.f32.mrb[0].mxu0
  %v575 = vpop.f32.mrb[0].mxu0
  %v576 = vadd.f32 0.0, %v575
  %v577 = vpop.f32.mrb[0].mxu0
  %578 = vmatprep.mubr.bf16.mxu0 %v311
  %579 = vmatmul.mubr.bf16.gmra.mrb[0].mxu0 %v310
  %v580 = vpop.f32.mrb[0].mxu0
  %v581 = vadd.f32 0.0, %v580
  %v582 = vpop.f32.mrb[0].mxu0
  %v583 = vpop.f32.mrb[0].mxu0
  %v584 = vadd.f32 0.0, %v583
  %v585 = vpop.f32.mrb[0].mxu0
  %586 = vmatprep.mubr.bf16.mxu0 %v313
  %587 = vmatmul.mubr.bf16.gmra.mrb[0].mxu0 %v312
  %v588 = vpop.f32.mrb[0].mxu0
  %v589 = vadd.f32 0.0, %v588
  %v590 = vpop.f32.mrb[0].mxu0
  %v591 = vpop.f32.mrb[0].mxu0
  %v592 = vadd.f32 0.0, %v591
  %v593 = vpop.f32.mrb[0].mxu0
  %594 = vmatprep.mubr.bf16.mxu0 %v315
  %595 = vmatmul.mubr.bf16.gmra.mrb[0].mxu0 %v314
  %v596 = vpop.f32.mrb[0].mxu0
  %v597 = vadd.f32 0.0, %v596
  %v598 = vpop.f32.mrb[0].mxu0
  %v599 = vpop.f32.mrb[0].mxu0
  %v600 = vadd.f32 0.0, %v599
  %v601 = vpop.f32.mrb[0].mxu0
  %602 = vmatprep.mubr.bf16.mxu0 %v317
  %603 = vmatmul.mubr.bf16.gmra.mrb[0].mxu0 %v316
  %v604 = vpop.f32.mrb[0].mxu0
  %v605 = vadd.f32 0.0, %v604
  %v606 = vpop.f32.mrb[0].mxu0
  %v607 = vpop.f32.mrb[0].mxu0
  %v608 = vadd.f32 0.0, %v607
  %v609 = vpop.f32.mrb[0].mxu0
  %610 = vmatprep.mubr.bf16.mxu0 %v319
  %611 = vmatmul.mubr.bf16.gmra.mrb[0].mxu0 %v318
  %v612 = vpop.f32.mrb[0].mxu0
  %v613 = vadd.f32 0.0, %v612
  %v614 = vpop.f32.mrb[0].mxu0
  %v615 = vpop.f32.mrb[0].mxu0
  %v616 = vadd.f32 0.0, %v615
  %v617 = vpop.f32.mrb[0].mxu0
  %618 = vmatprep.mubr.bf16.mxu0 %v321
  %619 = vmatmul.mubr.bf16.gmra.mrb[0].mxu0 %v320
  %v620 = vpop.f32.mrb[0].mxu0
  %v621 = vadd.f32 0.0, %v620
  %v622 = vpop.f32.mrb[0].mxu0
  %v623 = vpop.f32.mrb[0].mxu0
  %v624 = vadd.f32 0.0, %v623
  %v625 = vpop.f32.mrb[0].mxu0
  %626 = vmatprep.mubr.bf16.mxu0 %v323
  %627 = vmatmul.mubr.bf16.gmra.mrb[0].mxu0 %v322
  %v628 = vpop.f32.mrb[0].mxu0
  %v629 = vadd.f32 0.0, %v628
  %v630 = vpop.f32.mrb[0].mxu0
  %v631 = vpop.f32.mrb[0].mxu0
  %v632 = vadd.f32 0.0, %v631
  %v633 = vpop.f32.mrb[0].mxu0
  %634 = vmatprep.mubr.bf16.mxu0 %v325
  %635 = vmatmul.mubr.bf16.gmra.mrb[0].mxu0 %v324
  %v636 = vpop.f32.mrb[0].mxu0
  %v637 = vadd.f32 0.0, %v636
  %v638 = vpop.f32.mrb[0].mxu0
  %v639 = vpop.f32.mrb[0].mxu0
  %v640 = vadd.f32 0.0, %v639
  %v641 = vpop.f32.mrb[0].mxu0
  %642 = vmatprep.mubr.bf16.mxu0 %v327
  %643 = vmatmul.mubr.bf16.gmra.mrb[0].mxu0 %v326
  %v644 = vpop.f32.mrb[0].mxu0
  %v645 = vadd.f32 0.0, %v644
  %v646 = vpop.f32.mrb[0].mxu0
  %v647 = vpop.f32.mrb[0].mxu0
  %v648 = vadd.f32 0.0, %v647
  %v649 = vpop.f32.mrb[0].mxu0
  %650 = vmatprep.mubr.bf16.mxu0 %v329
  %651 = vmatmul.mubr.bf16.gmra.mrb[0].mxu0 %v328
  %v652 = vpop.f32.mrb[0].mxu0
  %v653 = vadd.f32 0.0, %v652
  %v654 = vpop.f32.mrb[0].mxu0
  %v655 = vpop.f32.mrb[0].mxu0
  %v656 = vadd.f32 0.0, %v655
  %v657 = vpop.f32.mrb[0].mxu0
  %658 = vmatprep.mubr.bf16.mxu0 %v331
  %659 = vmatmul.mubr.bf16.gmra.mrb[0].mxu0 %v330
  %v660 = vpop.f32.mrb[0].mxu0
  %v661 = vadd.f32 0.0, %v660
  %v662 = vpop.f32.mrb[0].mxu0
  %v663 = vpop.f32.mrb[0].mxu0
  %v664 = vadd.f32 0.0, %v663
  %v665 = vpop.f32.mrb[0].mxu0
  %666 = vmatprep.mubr.bf16.mxu0 %v333
  %667 = vmatmul.mubr.bf16.gmra.mrb[0].mxu0 %v332
  %v668 = vpop.f32.mrb[0].mxu0
  %v669 = vadd.f32 0.0, %v668
  %v670 = vpop.f32.mrb[0].mxu0
  %v671 = vpop.f32.mrb[0].mxu0
  %v672 = vadd.f32 0.0, %v671
  %v673 = vpop.f32.mrb[0].mxu0
  %674 = vmatprep.mubr.bf16.mxu0 %v335
  %675 = vmatmul.mubr.bf16.gmra.mrb[0].mxu0 %v334
  %v676 = vpop.f32.mrb[0].mxu0
  %v677 = vadd.f32 0.0, %v676
  %v678 = vpop.f32.mrb[0].mxu0
  %v679 = vpop.f32.mrb[0].mxu0
  %v680 = vadd.f32 0.0, %v679
  %v681 = vpop.f32.mrb[0].mxu0
  %682 = vmatprep.mubr.bf16.mxu0 %v337
  %683 = vmatmul.mubr.bf16.gmra.mrb[0].mxu0 %v336
  %v684 = vpop.f32.mrb[0].mxu0
  %v685 = vadd.f32 0.0, %v684
  %v686 = vpop.f32.mrb[0].mxu0
  %v687 = vpop.f32.mrb[0].mxu0
  %v688 = vadd.f32 0.0, %v687
  %v689 = vpop.f32.mrb[0].mxu0
  %690 = vmatprep.mubr.bf16.mxu0 %v339
  %691 = vmatmul.mubr.bf16.gmra.mrb[0].mxu0 %v338
  %v692 = vpop.f32.mrb[0].mxu0
  %v693 = vadd.f32 0.0, %v692
  %v694 = vpop.f32.mrb[0].mxu0
  %v695 = vpop.f32.mrb[0].mxu0
  %v696 = vadd.f32 0.0, %v695
  %v697 = vpop.f32.mrb[0].mxu0
  %698 = vmatprep.mubr.bf16.mxu0 %v341
  %699 = vmatmul.mubr.bf16.gmra.mrb[0].mxu0 %v340
  %v700 = vpop.f32.mrb[0].mxu0
  %v701 = vadd.f32 0.0, %v700
  %v702 = vpop.f32.mrb[0].mxu0
  %v703 = vpop.f32.mrb[0].mxu0
  %v704 = vadd.f32 0.0, %v703
  %v705 = vpop.f32.mrb[0].mxu0
  %706 = vmatprep.mubr.bf16.mxu0 %v343
  %707 = vmatmul.mubr.bf16.gmra.mrb[0].mxu0 %v342
  %v708 = vpop.f32.mrb[0].mxu0
  %v709 = vadd.f32 0.0, %v708
  %v710 = vpop.f32.mrb[0].mxu0
  %v711 = vpop.f32.mrb[0].mxu0
  %v712 = vadd.f32 0.0, %v711
  %v713 = vpop.f32.mrb[0].mxu0
  %714 = vmatprep.mubr.bf16.mxu0 %v345
  %715 = vmatmul.mubr.bf16.gmra.mrb[0].mxu0 %v344
  %v716 = vpop.f32.mrb[0].mxu0
  %v717 = vadd.f32 0.0, %v716
  %v718 = vpop.f32.mrb[0].mxu0
  %v719 = vpop.f32.mrb[0].mxu0
  %v720 = vadd.f32 0.0, %v719
  %v721 = vpop.f32.mrb[0].mxu0
  %722 = vmatprep.mubr.bf16.mxu0 %v347
  %723 = vmatmul.mubr.bf16.gmra.mrb[0].mxu0 %v346
  %v724 = vpop.f32.mrb[0].mxu0
  %v725 = vadd.f32 0.0, %v724
  %v726 = vpop.f32.mrb[0].mxu0
  %v727 = vpop.f32.mrb[0].mxu0
  %v728 = vadd.f32 0.0, %v727
  %v729 = vpop.f32.mrb[0].mxu0
  %730 = vmatprep.mubr.bf16.mxu0 %v349
  %731 = vmatmul.mubr.bf16.gmra.mrb[0].mxu0 %v348
  %v732 = vpop.f32.mrb[0].mxu0
  %v733 = vadd.f32 0.0, %v732
  %v734 = vpop.f32.mrb[0].mxu0
  %v735 = vpop.f32.mrb[0].mxu0
  %v736 = vadd.f32 0.0, %v735
  %v737 = vpop.f32.mrb[0].mxu0
  %738 = vmatprep.mubr.bf16.mxu0 %v351
  %739 = vmatmul.mubr.bf16.gmra.mrb[0].mxu0 %v350
  %v740 = vpop.f32.mrb[0].mxu0
  %v741 = vadd.f32 0.0, %v740
  %v742 = vpop.f32.mrb[0].mxu0
  %v743 = vpop.f32.mrb[0].mxu0
  %v744 = vadd.f32 0.0, %v743
  %v745 = vpop.f32.mrb[0].mxu0
  %746 = vmatprep.mubr.bf16.mxu0 %v353
  %747 = vmatmul.mubr.bf16.gmra.mrb[0].mxu0 %v352
  %v748 = vpop.f32.mrb[0].mxu0
  %v749 = vadd.f32 0.0, %v748
  %v750 = vpop.f32.mrb[0].mxu0
  %v751 = vpop.f32.mrb[0].mxu0
  %v752 = vadd.f32 0.0, %v751
  %v753 = vpop.f32.mrb[0].mxu0
  %754 = vmatprep.mubr.bf16.mxu0 %v355
  %755 = vmatmul.mubr.bf16.gmra.mrb[0].mxu0 %v354
  %v756 = vpop.f32.mrb[0].mxu0
  %v757 = vadd.f32 0.0, %v756
  %v758 = vpop.f32.mrb[0].mxu0
  %v759 = vpop.f32.mrb[0].mxu0
  %v760 = vadd.f32 0.0, %v759
  %v761 = vpop.f32.mrb[0].mxu0
  %762 = vmatprep.mubr.bf16.mxu0 %v357
  %763 = vmatmul.mubr.bf16.gmra.mrb[0].mxu0 %v356
  %v764 = vpop.f32.mrb[0].mxu0
  %v765 = vadd.f32 0.0, %v764
  %v766 = vpop.f32.mrb[0].mxu0
  %v767 = vpop.f32.mrb[0].mxu0
  %v768 = vadd.f32 0.0, %v767
  %v769 = vpop.f32.mrb[0].mxu0
  %770 = vmatprep.mubr.bf16.mxu0 %v359
  %771 = vmatmul.mubr.bf16.gmra.mrb[0].mxu0 %v358
  %v772 = vpop.f32.mrb[0].mxu0
  %v773 = vadd.f32 0.0, %v772
  %v774 = vpop.f32.mrb[0].mxu0
  %v775 = vpop.f32.mrb[0].mxu0
  %v776 = vadd.f32 0.0, %v775
  %v777 = vpop.f32.mrb[0].mxu0
  %778 = vmatprep.mubr.bf16.mxu0 %v361
  %779 = vmatmul.mubr.bf16.gmra.mrb[0].mxu0 %v360
  %v780 = vpop.f32.mrb[0].mxu0
  %v781 = vadd.f32 0.0, %v780
  %v782 = vpop.f32.mrb[0].mxu0
  %v783 = vpop.f32.mrb[0].mxu0
  %v784 = vadd.f32 0.0, %v783
  %v785 = vpop.f32.mrb[0].mxu0
  %786 = vmatprep.mubr.bf16.mxu0 %v363
  %787 = vmatmul.mubr.bf16.gmra.mrb[0].mxu0 %v362
  %v788 = vpop.f32.mrb[0].mxu0
  %v789 = vadd.f32 0.0, %v788
  %v790 = vpop.f32.mrb[0].mxu0
  %v791 = vpop.f32.mrb[0].mxu0
  %v792 = vadd.f32 0.0, %v791
  %v793 = vpop.f32.mrb[0].mxu0
  %794 = vmatprep.mubr.bf16.mxu0 %v365
  %795 = vmatmul.mubr.bf16.gmra.mrb[0].mxu0 %v364
  %v796 = vpop.f32.mrb[0].mxu0
  %v797 = vadd.f32 0.0, %v796
  %v798 = vpop.f32.mrb[0].mxu0
  %v799 = vpop.f32.mrb[0].mxu0
  %v800 = vadd.f32 0.0, %v799
  %v801 = vpop.f32.mrb[0].mxu0
  %802 = vmatprep.mubr.bf16.mxu0 %v367
  %803 = vmatmul.mubr.bf16.gmra.mrb[0].mxu0 %v366
  %v804 = vpop.f32.mrb[0].mxu0
  %v805 = vadd.f32 0.0, %v804
  %v806 = vpop.f32.mrb[0].mxu0
  %v807 = vpop.f32.mrb[0].mxu0
  %v808 = vadd.f32 0.0, %v807
  %v809 = vpop.f32.mrb[0].mxu0
  %810 = vmatprep.mubr.bf16.mxu0 %v369
  %811 = vmatmul.mubr.bf16.gmra.mrb[0].mxu0 %v368
  %v812 = vpop.f32.mrb[0].mxu0
  %v813 = vadd.f32 0.0, %v812
  %v814 = vpop.f32.mrb[0].mxu0
  %v815 = vpop.f32.mrb[0].mxu0
  %v816 = vadd.f32 0.0, %v815
  %v817 = vpop.f32.mrb[0].mxu0
  %818 = vdwg.mxu0
  %v819 = vadd.f32 %v565, %v568
  %v820 = vadd.f32 %v819, %v573
  %v821 = vadd.f32 %v820, %v576
  %v822 = vadd.f32 %v821, %v581
  %v823 = vadd.f32 %v822, %v584
  %v824 = vadd.f32 %v823, %v589
  %v825 = vadd.f32 %v824, %v592
  %v826 = vadd.f32 %v825, %v597
  %v827 = vadd.f32 %v826, %v600
  %v828 = vadd.f32 %v827, %v605
  %v829 = vadd.f32 %v828, %v608
  %v830 = vadd.f32 %v829, %v613
  %v831 = vadd.f32 %v830, %v616
  %v832 = vadd.f32 %v831, %v621
  %v833 = vadd.f32 %v832, %v624
  %v834 = vadd.f32 %v833, %v629
  %v835 = vadd.f32 %v834, %v632
  %v836 = vadd.f32 %v835, %v637
  %v837 = vadd.f32 %v836, %v640
  %v838 = vadd.f32 %v837, %v645
  %v839 = vadd.f32 %v838, %v648
  %v840 = vadd.f32 %v839, %v653
  %v841 = vadd.f32 %v840, %v656
  %v842 = vadd.f32 %v841, %v661
  %v843 = vadd.f32 %v842, %v664
  %v844 = vadd.f32 %v843, %v669
  %v845 = vadd.f32 %v844, %v672
  %v846 = vadd.f32 %v845, %v677
  %v847 = vadd.f32 %v846, %v680
  %v848 = vadd.f32 %v847, %v685
  %v849 = vadd.f32 %v848, %v688
  %v850 = vadd.f32 %v849, %v693
  %v851 = vadd.f32 %v850, %v696
  %v852 = vadd.f32 %v851, %v701
  %v853 = vadd.f32 %v852, %v704
  %v854 = vadd.f32 %v853, %v709
  %v855 = vadd.f32 %v854, %v712
  %v856 = vadd.f32 %v855, %v717
  %v857 = vadd.f32 %v856, %v720
  %v858 = vadd.f32 %v857, %v725
  %v859 = vadd.f32 %v858, %v728
  %v860 = vadd.f32 %v859, %v733
  %v861 = vadd.f32 %v860, %v736
  %v862 = vadd.f32 %v861, %v741
  %v863 = vadd.f32 %v862, %v744
  %v864 = vadd.f32 %v863, %v749
  %v865 = vadd.f32 %v864, %v752
  %v866 = vadd.f32 %v865, %v757
  %v867 = vadd.f32 %v866, %v760
  %v868 = vadd.f32 %v867, %v765
  %v869 = vadd.f32 %v868, %v768
  %v870 = vadd.f32 %v869, %v773
  %v871 = vadd.f32 %v870, %v776
  %v872 = vadd.f32 %v871, %v781
  %v873 = vadd.f32 %v872, %v784
  %v874 = vadd.f32 %v873, %v789
  %v875 = vadd.f32 %v874, %v792
  %v876 = vadd.f32 %v875, %v797
  %v877 = vadd.f32 %v876, %v800
  %v878 = vadd.f32 %v877, %v805
  %v879 = vadd.f32 %v878, %v808
  %v880 = vadd.f32 %v879, %v813
  %v881 = vadd.f32 %v880, %v816
  %v882 = vrot.slane %v881, 4
  %v883 = vadd.f32 %v881, %v882
  %v884 = vrot.slane %v883, 2
  %v885 = vadd.f32 %v883, %v884
  %v886 = vrot.slane %v885, 1
  %v887 = vadd.f32 %v885, %v886
  %v888 = vmul.f32 %v887, 0.001953125
  %v889 = vmul.f32 %v565, %v565
  %v890 = vmul.f32 %v568, %v568
  %v891 = vmul.f32 %v573, %v573
  %v892 = vmul.f32 %v576, %v576
  %v893 = vmul.f32 %v581, %v581
  %v894 = vmul.f32 %v584, %v584
  %v895 = vmul.f32 %v589, %v589
  %v896 = vmul.f32 %v592, %v592
  %v897 = vmul.f32 %v597, %v597
  %v898 = vmul.f32 %v600, %v600
  %v899 = vmul.f32 %v605, %v605
  %v900 = vmul.f32 %v608, %v608
  %v901 = vmul.f32 %v613, %v613
  %v902 = vmul.f32 %v616, %v616
  %v903 = vmul.f32 %v621, %v621
  %v904 = vmul.f32 %v624, %v624
  %v905 = vmul.f32 %v629, %v629
  %v906 = vmul.f32 %v632, %v632
  %v907 = vmul.f32 %v637, %v637
  %v908 = vmul.f32 %v640, %v640
  %v909 = vmul.f32 %v645, %v645
  %v910 = vmul.f32 %v648, %v648
  %v911 = vmul.f32 %v653, %v653
  %v912 = vmul.f32 %v656, %v656
  %v913 = vmul.f32 %v661, %v661
  %v914 = vmul.f32 %v664, %v664
  %v915 = vmul.f32 %v669, %v669
  %v916 = vmul.f32 %v672, %v672
  %v917 = vmul.f32 %v677, %v677
  %v918 = vmul.f32 %v680, %v680
  %v919 = vmul.f32 %v685, %v685
  %v920 = vmul.f32 %v688, %v688
  %v921 = vmul.f32 %v693, %v693
  %v922 = vmul.f32 %v696, %v696
  %v923 = vmul.f32 %v701, %v701
  %v924 = vmul.f32 %v704, %v704
  %v925 = vmul.f32 %v709, %v709
  %v926 = vmul.f32 %v712, %v712
  %v927 = vmul.f32 %v717, %v717
  %v928 = vmul.f32 %v720, %v720
  %v929 = vmul.f32 %v725, %v725
  %v930 = vmul.f32 %v728, %v728
  %v931 = vmul.f32 %v733, %v733
  %v932 = vmul.f32 %v736, %v736
  %v933 = vmul.f32 %v741, %v741
  %v934 = vmul.f32 %v744, %v744
  %v935 = vmul.f32 %v749, %v749
  %v936 = vmul.f32 %v752, %v752
  %v937 = vmul.f32 %v757, %v757
  %v938 = vmul.f32 %v760, %v760
  %v939 = vmul.f32 %v765, %v765
  %v940 = vmul.f32 %v768, %v768
  %v941 = vmul.f32 %v773, %v773
  %v942 = vmul.f32 %v776, %v776
  %v943 = vmul.f32 %v781, %v781
  %v944 = vmul.f32 %v784, %v784
  %v945 = vmul.f32 %v789, %v789
  %v946 = vmul.f32 %v792, %v792
  %v947 = vmul.f32 %v797, %v797
  %v948 = vmul.f32 %v800, %v800
  %v949 = vmul.f32 %v805, %v805
  %v950 = vmul.f32 %v808, %v808
  %v951 = vmul.f32 %v813, %v813
  %v952 = vmul.f32 %v816, %v816
  %v953 = vadd.f32 %v889, %v890
  %v954 = vadd.f32 %v953, %v891
  %v955 = vadd.f32 %v954, %v892
  %v956 = vadd.f32 %v955, %v893
  %v957 = vadd.f32 %v956, %v894
  %v958 = vadd.f32 %v957, %v895
  %v959 = vadd.f32 %v958, %v896
  %v960 = vadd.f32 %v959, %v897
  %v961 = vadd.f32 %v960, %v898
  %v962 = vadd.f32 %v961, %v899
  %v963 = vadd.f32 %v962, %v900
  %v964 = vadd.f32 %v963, %v901
  %v965 = vadd.f32 %v964, %v902
  %v966 = vadd.f32 %v965, %v903
  %v967 = vadd.f32 %v966, %v904
  %v968 = vadd.f32 %v967, %v905
  %v969 = vadd.f32 %v968, %v906
  %v970 = vadd.f32 %v969, %v907
  %v971 = vadd.f32 %v970, %v908
  %v972 = vadd.f32 %v971, %v909
  %v973 = vadd.f32 %v972, %v910
  %v974 = vadd.f32 %v973, %v911
  %v975 = vadd.f32 %v974, %v912
  %v976 = vadd.f32 %v975, %v913
  %v977 = vadd.f32 %v976, %v914
  %v978 = vadd.f32 %v977, %v915
  %v979 = vadd.f32 %v978, %v916
  %v980 = vadd.f32 %v979, %v917
  %v981 = vadd.f32 %v980, %v918
  %v982 = vadd.f32 %v981, %v919
  %v983 = vadd.f32 %v982, %v920
  %v984 = vadd.f32 %v983, %v921
  %v985 = vadd.f32 %v984, %v922
  %v986 = vadd.f32 %v985, %v923
  %v987 = vadd.f32 %v986, %v924
  %v988 = vadd.f32 %v987, %v925
  %v989 = vadd.f32 %v988, %v926
  %v990 = vadd.f32 %v989, %v927
  %v991 = vadd.f32 %v990, %v928
  %v992 = vadd.f32 %v991, %v929
  %v993 = vadd.f32 %v992, %v930
  %v994 = vadd.f32 %v993, %v931
  %v995 = vadd.f32 %v994, %v932
  %v996 = vadd.f32 %v995, %v933
  %v997 = vadd.f32 %v996, %v934
  %v998 = vadd.f32 %v997, %v935
  %v999 = vadd.f32 %v998, %v936
  %v1000 = vadd.f32 %v999, %v937
  %v1001 = vadd.f32 %v1000, %v938
  %v1002 = vadd.f32 %v1001, %v939
  %v1003 = vadd.f32 %v1002, %v940
  %v1004 = vadd.f32 %v1003, %v941
  %v1005 = vadd.f32 %v1004, %v942
  %v1006 = vadd.f32 %v1005, %v943
  %v1007 = vadd.f32 %v1006, %v944
  %v1008 = vadd.f32 %v1007, %v945
  %v1009 = vadd.f32 %v1008, %v946
  %v1010 = vadd.f32 %v1009, %v947
  %v1011 = vadd.f32 %v1010, %v948
  %v1012 = vadd.f32 %v1011, %v949
  %v1013 = vadd.f32 %v1012, %v950
  %v1014 = vadd.f32 %v1013, %v951
  %v1015 = vadd.f32 %v1014, %v952
  %v1016 = vrot.slane %v1015, 4
  %v1017 = vadd.f32 %v1015, %v1016
  %v1018 = vrot.slane %v1017, 2
  %v1019 = vadd.f32 %v1017, %v1018
  %v1020 = vrot.slane %v1019, 1
  %v1021 = vadd.f32 %v1019, %v1020
  %v1022 = vmul.f32 %v1021, 0.001953125
  %v1023 = vmul.f32 %v888, %v888
  %v1024 = vsub.f32 %v1022, %v1023
  %v1025 = vld [vmem:[%s2] sm:$0x1]
  %v1026 = vadd.f32 %v1024, 1e-05
  %v1027 = vrsqrt.pop %v1026
  %v1028 = vmul.f32 %v1025, %v1027
  %v1029 = vld [vmem:[%s3] sm:$0x1]
  %v1030 = vmul.f32 %v888, %v1028
  %v1031 = vsub.f32 %v1029, %v1030
  %v1033 = vlaneseq
  %v1034 = vshrl.u32 %v1033, 7
  %v1035 = vsub.s32 0, %v1034
  %v1036 = vrot.slane %v1028, %v1035
  %v1038 = vmul.f32 %v565, %v1036
  %v1039 = vmul.f32 %v568, %v1036
  %v1040 = vmul.f32 %v573, %v1036
  %v1041 = vmul.f32 %v576, %v1036
  %v1042 = vmul.f32 %v581, %v1036
  %v1043 = vmul.f32 %v584, %v1036
  %v1044 = vmul.f32 %v589, %v1036
  %v1045 = vmul.f32 %v592, %v1036
  %v1046 = vmul.f32 %v597, %v1036
  %v1047 = vmul.f32 %v600, %v1036
  %v1048 = vmul.f32 %v605, %v1036
  %v1049 = vmul.f32 %v608, %v1036
  %v1050 = vmul.f32 %v613, %v1036
  %v1051 = vmul.f32 %v616, %v1036
  %v1052 = vmul.f32 %v621, %v1036
  %v1053 = vmul.f32 %v624, %v1036
  %v1054 = vmul.f32 %v629, %v1036
  %v1055 = vmul.f32 %v632, %v1036
  %v1056 = vmul.f32 %v637, %v1036
  %v1057 = vmul.f32 %v640, %v1036
  %v1058 = vmul.f32 %v645, %v1036
  %v1059 = vmul.f32 %v648, %v1036
  %v1060 = vmul.f32 %v653, %v1036
  %v1061 = vmul.f32 %v656, %v1036
  %v1062 = vmul.f32 %v661, %v1036
  %v1063 = vmul.f32 %v664, %v1036
  %v1064 = vmul.f32 %v669, %v1036
  %v1065 = vmul.f32 %v672, %v1036
  %v1066 = vmul.f32 %v677, %v1036
  %v1067 = vmul.f32 %v680, %v1036
  %v1068 = vmul.f32 %v685, %v1036
  %v1069 = vmul.f32 %v688, %v1036
  %v1070 = vmul.f32 %v693, %v1036
  %v1071 = vmul.f32 %v696, %v1036
  %v1072 = vmul.f32 %v701, %v1036
  %v1073 = vmul.f32 %v704, %v1036
  %v1074 = vmul.f32 %v709, %v1036
  %v1075 = vmul.f32 %v712, %v1036
  %v1076 = vmul.f32 %v717, %v1036
  %v1077 = vmul.f32 %v720, %v1036
  %v1078 = vmul.f32 %v725, %v1036
  %v1079 = vmul.f32 %v728, %v1036
  %v1080 = vmul.f32 %v733, %v1036
  %v1081 = vmul.f32 %v736, %v1036
  %v1082 = vmul.f32 %v741, %v1036
  %v1083 = vmul.f32 %v744, %v1036
  %v1084 = vmul.f32 %v749, %v1036
  %v1085 = vmul.f32 %v752, %v1036
  %v1086 = vmul.f32 %v757, %v1036
  %v1087 = vmul.f32 %v760, %v1036
  %v1088 = vmul.f32 %v765, %v1036
  %v1089 = vmul.f32 %v768, %v1036
  %v1090 = vmul.f32 %v773, %v1036
  %v1091 = vmul.f32 %v776, %v1036
  %v1092 = vmul.f32 %v781, %v1036
  %v1093 = vmul.f32 %v784, %v1036
  %v1094 = vmul.f32 %v789, %v1036
  %v1095 = vmul.f32 %v792, %v1036
  %v1096 = vmul.f32 %v797, %v1036
  %v1097 = vmul.f32 %v800, %v1036
  %v1098 = vmul.f32 %v805, %v1036
  %v1099 = vmul.f32 %v808, %v1036
  %v1100 = vmul.f32 %v813, %v1036
  %v1101 = vmul.f32 %v816, %v1036
  %v1103 = vlaneseq
  %v1104 = vshrl.u32 %v1103, 7
  %v1105 = vsub.s32 0, %v1104
  %v1106 = vrot.slane %v1031, %v1105
  %v1108 = vadd.f32 %v1038, %v1106
  %v1109 = vadd.f32 %v1039, %v1106
  %v1110 = vadd.f32 %v1040, %v1106
  %v1111 = vadd.f32 %v1041, %v1106
  %v1112 = vadd.f32 %v1042, %v1106
  %v1113 = vadd.f32 %v1043, %v1106
  %v1114 = vadd.f32 %v1044, %v1106
  %v1115 = vadd.f32 %v1045, %v1106
  %v1116 = vadd.f32 %v1046, %v1106
  %v1117 = vadd.f32 %v1047, %v1106
  %v1118 = vadd.f32 %v1048, %v1106
  %v1119 = vadd.f32 %v1049, %v1106
  %v1120 = vadd.f32 %v1050, %v1106
  %v1121 = vadd.f32 %v1051, %v1106
  %v1122 = vadd.f32 %v1052, %v1106
  %v1123 = vadd.f32 %v1053, %v1106
  %v1124 = vadd.f32 %v1054, %v1106
  %v1125 = vadd.f32 %v1055, %v1106
  %v1126 = vadd.f32 %v1056, %v1106
  %v1127 = vadd.f32 %v1057, %v1106
  %v1128 = vadd.f32 %v1058, %v1106
  %v1129 = vadd.f32 %v1059, %v1106
  %v1130 = vadd.f32 %v1060, %v1106
  %v1131 = vadd.f32 %v1061, %v1106
  %v1132 = vadd.f32 %v1062, %v1106
  %v1133 = vadd.f32 %v1063, %v1106
  %v1134 = vadd.f32 %v1064, %v1106
  %v1135 = vadd.f32 %v1065, %v1106
  %v1136 = vadd.f32 %v1066, %v1106
  %v1137 = vadd.f32 %v1067, %v1106
  %v1138 = vadd.f32 %v1068, %v1106
  %v1139 = vadd.f32 %v1069, %v1106
  %v1140 = vadd.f32 %v1070, %v1106
  %v1141 = vadd.f32 %v1071, %v1106
  %v1142 = vadd.f32 %v1072, %v1106
  %v1143 = vadd.f32 %v1073, %v1106
  %v1144 = vadd.f32 %v1074, %v1106
  %v1145 = vadd.f32 %v1075, %v1106
  %v1146 = vadd.f32 %v1076, %v1106
  %v1147 = vadd.f32 %v1077, %v1106
  %v1148 = vadd.f32 %v1078, %v1106
  %v1149 = vadd.f32 %v1079, %v1106
  %v1150 = vadd.f32 %v1080, %v1106
  %v1151 = vadd.f32 %v1081, %v1106
  %v1152 = vadd.f32 %v1082, %v1106
  %v1153 = vadd.f32 %v1083, %v1106
  %v1154 = vadd.f32 %v1084, %v1106
  %v1155 = vadd.f32 %v1085, %v1106
  %v1156 = vadd.f32 %v1086, %v1106
  %v1157 = vadd.f32 %v1087, %v1106
  %v1158 = vadd.f32 %v1088, %v1106
  %v1159 = vadd.f32 %v1089, %v1106
  %v1160 = vadd.f32 %v1090, %v1106
  %v1161 = vadd.f32 %v1091, %v1106
  %v1162 = vadd.f32 %v1092, %v1106
  %v1163 = vadd.f32 %v1093, %v1106
  %v1164 = vadd.f32 %v1094, %v1106
  %v1165 = vadd.f32 %v1095, %v1106
  %v1166 = vadd.f32 %v1096, %v1106
  %v1167 = vadd.f32 %v1097, %v1106
  %v1168 = vadd.f32 %v1098, %v1106
  %v1169 = vadd.f32 %v1099, %v1106
  %v1170 = vadd.f32 %v1100, %v1106
  %v1171 = vadd.f32 %v1101, %v1106
  %v1172 = vmul.f32 %v1108, 0.2
  %v1173 = vmul.f32 %v1109, 0.2
  %v1174 = vmul.f32 %v1110, 0.2
  %v1175 = vmul.f32 %v1111, 0.2
  %v1176 = vmul.f32 %v1112, 0.2
  %v1177 = vmul.f32 %v1113, 0.2
  %v1178 = vmul.f32 %v1114, 0.2
  %v1179 = vmul.f32 %v1115, 0.2
  %v1180 = vmul.f32 %v1116, 0.2
  %v1181 = vmul.f32 %v1117, 0.2
  %v1182 = vmul.f32 %v1118, 0.2
  %v1183 = vmul.f32 %v1119, 0.2
  %v1184 = vmul.f32 %v1120, 0.2
  %v1185 = vmul.f32 %v1121, 0.2
  %v1186 = vmul.f32 %v1122, 0.2
  %v1187 = vmul.f32 %v1123, 0.2
  %v1188 = vmul.f32 %v1124, 0.2
  %v1189 = vmul.f32 %v1125, 0.2
  %v1190 = vmul.f32 %v1126, 0.2
  %v1191 = vmul.f32 %v1127, 0.2
  %v1192 = vmul.f32 %v1128, 0.2
  %v1193 = vmul.f32 %v1129, 0.2
  %v1194 = vmul.f32 %v1130, 0.2
  %v1195 = vmul.f32 %v1131, 0.2
  %v1196 = vmul.f32 %v1132, 0.2
  %v1197 = vmul.f32 %v1133, 0.2
  %v1198 = vmul.f32 %v1134, 0.2
  %v1199 = vmul.f32 %v1135, 0.2
  %v1200 = vmul.f32 %v1136, 0.2
  %v1201 = vmul.f32 %v1137, 0.2
  %v1202 = vmul.f32 %v1138, 0.2
  %v1203 = vmul.f32 %v1139, 0.2
  %v1204 = vmul.f32 %v1140, 0.2
  %v1205 = vmul.f32 %v1141, 0.2
  %v1206 = vmul.f32 %v1142, 0.2
  %v1207 = vmul.f32 %v1143, 0.2
  %v1208 = vmul.f32 %v1144, 0.2
  %v1209 = vmul.f32 %v1145, 0.2
  %v1210 = vmul.f32 %v1146, 0.2
  %v1211 = vmul.f32 %v1147, 0.2
  %v1212 = vmul.f32 %v1148, 0.2
  %v1213 = vmul.f32 %v1149, 0.2
  %v1214 = vmul.f32 %v1150, 0.2
  %v1215 = vmul.f32 %v1151, 0.2
  %v1216 = vmul.f32 %v1152, 0.2
  %v1217 = vmul.f32 %v1153, 0.2
  %v1218 = vmul.f32 %v1154, 0.2
  %v1219 = vmul.f32 %v1155, 0.2
  %v1220 = vmul.f32 %v1156, 0.2
  %v1221 = vmul.f32 %v1157, 0.2
  %v1222 = vmul.f32 %v1158, 0.2
  %v1223 = vmul.f32 %v1159, 0.2
  %v1224 = vmul.f32 %v1160, 0.2
  %v1225 = vmul.f32 %v1161, 0.2
  %v1226 = vmul.f32 %v1162, 0.2
  %v1227 = vmul.f32 %v1163, 0.2
  %v1228 = vmul.f32 %v1164, 0.2
  %v1229 = vmul.f32 %v1165, 0.2
  %v1230 = vmul.f32 %v1166, 0.2
  %v1231 = vmul.f32 %v1167, 0.2
  %v1232 = vmul.f32 %v1168, 0.2
  %v1233 = vmul.f32 %v1169, 0.2
  %v1234 = vmul.f32 %v1170, 0.2
  %v1235 = vmul.f32 %v1171, 0.2
  %v1236 = vmax.f32 %v1108, %v1172
  %v1237 = vmax.f32 %v1109, %v1173
  %v1238 = vmax.f32 %v1110, %v1174
  %v1239 = vmax.f32 %v1111, %v1175
  %v1240 = vmax.f32 %v1112, %v1176
  %v1241 = vmax.f32 %v1113, %v1177
  %v1242 = vmax.f32 %v1114, %v1178
  %v1243 = vmax.f32 %v1115, %v1179
  %v1244 = vmax.f32 %v1116, %v1180
  %v1245 = vmax.f32 %v1117, %v1181
  %v1246 = vmax.f32 %v1118, %v1182
  %v1247 = vmax.f32 %v1119, %v1183
  %v1248 = vmax.f32 %v1120, %v1184
  %v1249 = vmax.f32 %v1121, %v1185
  %v1250 = vmax.f32 %v1122, %v1186
  %v1251 = vmax.f32 %v1123, %v1187
  %v1252 = vmax.f32 %v1124, %v1188
  %v1253 = vmax.f32 %v1125, %v1189
  %v1254 = vmax.f32 %v1126, %v1190
  %v1255 = vmax.f32 %v1127, %v1191
  %v1256 = vmax.f32 %v1128, %v1192
  %v1257 = vmax.f32 %v1129, %v1193
  %v1258 = vmax.f32 %v1130, %v1194
  %v1259 = vmax.f32 %v1131, %v1195
  %v1260 = vmax.f32 %v1132, %v1196
  %v1261 = vmax.f32 %v1133, %v1197
  %v1262 = vmax.f32 %v1134, %v1198
  %v1263 = vmax.f32 %v1135, %v1199
  %v1264 = vmax.f32 %v1136, %v1200
  %v1265 = vmax.f32 %v1137, %v1201
  %v1266 = vmax.f32 %v1138, %v1202
  %v1267 = vmax.f32 %v1139, %v1203
  %v1268 = vmax.f32 %v1140, %v1204
  %v1269 = vmax.f32 %v1141, %v1205
  %v1270 = vmax.f32 %v1142, %v1206
  %v1271 = vmax.f32 %v1143, %v1207
  %v1272 = vmax.f32 %v1144, %v1208
  %v1273 = vmax.f32 %v1145, %v1209
  %v1274 = vmax.f32 %v1146, %v1210
  %v1275 = vmax.f32 %v1147, %v1211
  %v1276 = vmax.f32 %v1148, %v1212
  %v1277 = vmax.f32 %v1149, %v1213
  %v1278 = vmax.f32 %v1150, %v1214
  %v1279 = vmax.f32 %v1151, %v1215
  %v1280 = vmax.f32 %v1152, %v1216
  %v1281 = vmax.f32 %v1153, %v1217
  %v1282 = vmax.f32 %v1154, %v1218
  %v1283 = vmax.f32 %v1155, %v1219
  %v1284 = vmax.f32 %v1156, %v1220
  %v1285 = vmax.f32 %v1157, %v1221
  %v1286 = vmax.f32 %v1158, %v1222
  %v1287 = vmax.f32 %v1159, %v1223
  %v1288 = vmax.f32 %v1160, %v1224
  %v1289 = vmax.f32 %v1161, %v1225
  %v1290 = vmax.f32 %v1162, %v1226
  %v1291 = vmax.f32 %v1163, %v1227
  %v1292 = vmax.f32 %v1164, %v1228
  %v1293 = vmax.f32 %v1165, %v1229
  %v1294 = vmax.f32 %v1166, %v1230
  %v1295 = vmax.f32 %v1167, %v1231
  %v1296 = vmax.f32 %v1168, %v1232
  %v1297 = vmax.f32 %v1169, %v1233
  %v1298 = vmax.f32 %v1170, %v1234
  %v1299 = vmax.f32 %v1171, %v1235
  %v1300 = vpack.c.bf16 %v1237, %v1236
  %v1301 = vpack.c.bf16 %v1239, %v1238
  %v1302 = vpack.c.bf16 %v1241, %v1240
  %v1303 = vpack.c.bf16 %v1243, %v1242
  %v1304 = vpack.c.bf16 %v1245, %v1244
  %v1305 = vpack.c.bf16 %v1247, %v1246
  %v1306 = vpack.c.bf16 %v1249, %v1248
  %v1307 = vpack.c.bf16 %v1251, %v1250
  %v1308 = vpack.c.bf16 %v1253, %v1252
  %v1309 = vpack.c.bf16 %v1255, %v1254
  %v1310 = vpack.c.bf16 %v1257, %v1256
  %v1311 = vpack.c.bf16 %v1259, %v1258
  %v1312 = vpack.c.bf16 %v1261, %v1260
  %v1313 = vpack.c.bf16 %v1263, %v1262
  %v1314 = vpack.c.bf16 %v1265, %v1264
  %v1315 = vpack.c.bf16 %v1267, %v1266
  %v1316 = vpack.c.bf16 %v1269, %v1268
  %v1317 = vpack.c.bf16 %v1271, %v1270
  %v1318 = vpack.c.bf16 %v1273, %v1272
  %v1319 = vpack.c.bf16 %v1275, %v1274
  %v1320 = vpack.c.bf16 %v1277, %v1276
  %v1321 = vpack.c.bf16 %v1279, %v1278
  %v1322 = vpack.c.bf16 %v1281, %v1280
  %v1323 = vpack.c.bf16 %v1283, %v1282
  %v1324 = vpack.c.bf16 %v1285, %v1284
  %v1325 = vpack.c.bf16 %v1287, %v1286
  %v1326 = vpack.c.bf16 %v1289, %v1288
  %v1327 = vpack.c.bf16 %v1291, %v1290
  %v1328 = vpack.c.bf16 %v1293, %v1292
  %v1329 = vpack.c.bf16 %v1295, %v1294
  %v1330 = vpack.c.bf16 %v1297, %v1296
  %v1331 = vpack.c.bf16 %v1299, %v1298
  %v1364 = vunpack.c.l.b16 %v1300
  %v1365 = vunpack.c.h.b16 %v1300
  %v1366 = vunpack.c.l.b16 %v1301
  %v1367 = vunpack.c.h.b16 %v1301
  %v1368 = vunpack.c.l.b16 %v1302
  %v1369 = vunpack.c.h.b16 %v1302
  %v1370 = vunpack.c.l.b16 %v1303
  %v1371 = vunpack.c.h.b16 %v1303
  %v1372 = vunpack.c.l.b16 %v1304
  %v1373 = vunpack.c.h.b16 %v1304
  %v1374 = vunpack.c.l.b16 %v1305
  %v1375 = vunpack.c.h.b16 %v1305
  %v1376 = vunpack.c.l.b16 %v1306
  %v1377 = vunpack.c.h.b16 %v1306
  %v1378 = vunpack.c.l.b16 %v1307
  %v1379 = vunpack.c.h.b16 %v1307
  %v1380 = vunpack.c.l.b16 %v1308
  %v1381 = vunpack.c.h.b16 %v1308
  %v1382 = vunpack.c.l.b16 %v1309
  %v1383 = vunpack.c.h.b16 %v1309
  %v1384 = vunpack.c.l.b16 %v1310
  %v1385 = vunpack.c.h.b16 %v1310
  %v1386 = vunpack.c.l.b16 %v1311
  %v1387 = vunpack.c.h.b16 %v1311
  %v1388 = vunpack.c.l.b16 %v1312
  %v1389 = vunpack.c.h.b16 %v1312
  %v1390 = vunpack.c.l.b16 %v1313
  %v1391 = vunpack.c.h.b16 %v1313
  %v1392 = vunpack.c.l.b16 %v1314
  %v1393 = vunpack.c.h.b16 %v1314
  %v1394 = vunpack.c.l.b16 %v1315
  %v1395 = vunpack.c.h.b16 %v1315
  %v1396 = vunpack.c.l.b16 %v1316
  %v1397 = vunpack.c.h.b16 %v1316
  %v1398 = vunpack.c.l.b16 %v1317
  %v1399 = vunpack.c.h.b16 %v1317
  %v1400 = vunpack.c.l.b16 %v1318
  %v1401 = vunpack.c.h.b16 %v1318
  %v1402 = vunpack.c.l.b16 %v1319
  %v1403 = vunpack.c.h.b16 %v1319
  %v1404 = vunpack.c.l.b16 %v1320
  %v1405 = vunpack.c.h.b16 %v1320
  %v1406 = vunpack.c.l.b16 %v1321
  %v1407 = vunpack.c.h.b16 %v1321
  %v1408 = vunpack.c.l.b16 %v1322
  %v1409 = vunpack.c.h.b16 %v1322
  %v1410 = vunpack.c.l.b16 %v1323
  %v1411 = vunpack.c.h.b16 %v1323
  %v1412 = vunpack.c.l.b16 %v1324
  %v1413 = vunpack.c.h.b16 %v1324
  %v1414 = vunpack.c.l.b16 %v1325
  %v1415 = vunpack.c.h.b16 %v1325
  %v1416 = vunpack.c.l.b16 %v1326
  %v1417 = vunpack.c.h.b16 %v1326
  %v1418 = vunpack.c.l.b16 %v1327
  %v1419 = vunpack.c.h.b16 %v1327
  %v1420 = vunpack.c.l.b16 %v1328
  %v1421 = vunpack.c.h.b16 %v1328
  %v1422 = vunpack.c.l.b16 %v1329
  %v1423 = vunpack.c.h.b16 %v1329
  %v1424 = vunpack.c.l.b16 %v1330
  %v1425 = vunpack.c.h.b16 %v1330
  %v1426 = vunpack.c.l.b16 %v1331
  %v1427 = vunpack.c.h.b16 %v1331
  %v1428 = vpack.c.b16 %v1364, %v1364
  %v1429 = vpack.c.b16 %v1365, %v1365
  %v1430 = vpack.c.b16 %v1366, %v1366
  %v1431 = vpack.c.b16 %v1367, %v1367
  %v1432 = vpack.c.b16 %v1368, %v1368
  %v1433 = vpack.c.b16 %v1369, %v1369
  %v1434 = vpack.c.b16 %v1370, %v1370
  %v1435 = vpack.c.b16 %v1371, %v1371
  %v1436 = vpack.c.b16 %v1372, %v1372
  %v1437 = vpack.c.b16 %v1373, %v1373
  %v1438 = vpack.c.b16 %v1374, %v1374
  %v1439 = vpack.c.b16 %v1375, %v1375
  %v1440 = vpack.c.b16 %v1376, %v1376
  %v1441 = vpack.c.b16 %v1377, %v1377
  %v1442 = vpack.c.b16 %v1378, %v1378
  %v1443 = vpack.c.b16 %v1379, %v1379
  %v1444 = vpack.c.b16 %v1380, %v1380
  %v1445 = vpack.c.b16 %v1381, %v1381
  %v1446 = vpack.c.b16 %v1382, %v1382
  %v1447 = vpack.c.b16 %v1383, %v1383
  %v1448 = vpack.c.b16 %v1384, %v1384
  %v1449 = vpack.c.b16 %v1385, %v1385
  %v1450 = vpack.c.b16 %v1386, %v1386
  %v1451 = vpack.c.b16 %v1387, %v1387
  %v1452 = vpack.c.b16 %v1388, %v1388
  %v1453 = vpack.c.b16 %v1389, %v1389
  %v1454 = vpack.c.b16 %v1390, %v1390
  %v1455 = vpack.c.b16 %v1391, %v1391
  %v1456 = vpack.c.b16 %v1392, %v1392
  %v1457 = vpack.c.b16 %v1393, %v1393
  %v1458 = vpack.c.b16 %v1394, %v1394
  %v1459 = vpack.c.b16 %v1395, %v1395
  %v1460 = vpack.c.b16 %v1396, %v1396
  %v1461 = vpack.c.b16 %v1397, %v1397
  %v1462 = vpack.c.b16 %v1398, %v1398
  %v1463 = vpack.c.b16 %v1399, %v1399
  %v1464 = vpack.c.b16 %v1400, %v1400
  %v1465 = vpack.c.b16 %v1401, %v1401
  %v1466 = vpack.c.b16 %v1402, %v1402
  %v1467 = vpack.c.b16 %v1403, %v1403
  %v1468 = vpack.c.b16 %v1404, %v1404
  %v1469 = vpack.c.b16 %v1405, %v1405
  %v1470 = vpack.c.b16 %v1406, %v1406
  %v1471 = vpack.c.b16 %v1407, %v1407
  %v1472 = vpack.c.b16 %v1408, %v1408
  %v1473 = vpack.c.b16 %v1409, %v1409
  %v1474 = vpack.c.b16 %v1410, %v1410
  %v1475 = vpack.c.b16 %v1411, %v1411
  %v1476 = vpack.c.b16 %v1412, %v1412
  %v1477 = vpack.c.b16 %v1413, %v1413
  %v1478 = vpack.c.b16 %v1414, %v1414
  %v1479 = vpack.c.b16 %v1415, %v1415
  %v1480 = vpack.c.b16 %v1416, %v1416
  %v1481 = vpack.c.b16 %v1417, %v1417
  %v1482 = vpack.c.b16 %v1418, %v1418
  %v1483 = vpack.c.b16 %v1419, %v1419
  %v1484 = vpack.c.b16 %v1420, %v1420
  %v1485 = vpack.c.b16 %v1421, %v1421
  %v1486 = vpack.c.b16 %v1422, %v1422
  %v1487 = vpack.c.b16 %v1423, %v1423
  %v1488 = vpack.c.b16 %v1424, %v1424
  %v1489 = vpack.c.b16 %v1425, %v1425
  %v1490 = vpack.c.b16 %v1426, %v1426
  %v1491 = vpack.c.b16 %v1427, %v1427
  %1556 = vst [vmem:[%s4] sm:$0xf] %v1428
  %1557 = vst [vmem:[%s4 + $0x4] sm:$0xf] %v1429
  %1558 = vst [vmem:[%s4 + $0x8] sm:$0xf] %v1430
  %1559 = vst [vmem:[%s4 + $0xc] sm:$0xf] %v1431
  %1560 = vst [vmem:[%s4 + $0x10] sm:$0xf] %v1432
  %1561 = vst [vmem:[%s4 + $0x14] sm:$0xf] %v1433
  %1562 = vst [vmem:[%s4 + $0x18] sm:$0xf] %v1434
  %1563 = vst [vmem:[%s4 + $0x1c] sm:$0xf] %v1435
  %1564 = vst [vmem:[%s4 + $0x20] sm:$0xf] %v1436
  %1565 = vst [vmem:[%s4 + $0x24] sm:$0xf] %v1437
  %1566 = vst [vmem:[%s4 + $0x28] sm:$0xf] %v1438
  %1567 = vst [vmem:[%s4 + $0x2c] sm:$0xf] %v1439
  %1568 = vst [vmem:[%s4 + $0x30] sm:$0xf] %v1440
  %1569 = vst [vmem:[%s4 + $0x34] sm:$0xf] %v1441
  %1570 = vst [vmem:[%s4 + $0x38] sm:$0xf] %v1442
  %1571 = vst [vmem:[%s4 + $0x3c] sm:$0xf] %v1443
  %1572 = vst [vmem:[%s4 + $0x40] sm:$0xf] %v1444
  %1573 = vst [vmem:[%s4 + $0x44] sm:$0xf] %v1445
  %1574 = vst [vmem:[%s4 + $0x48] sm:$0xf] %v1446
  %1575 = vst [vmem:[%s4 + $0x4c] sm:$0xf] %v1447
  %1576 = vst [vmem:[%s4 + $0x50] sm:$0xf] %v1448
  %1577 = vst [vmem:[%s4 + $0x54] sm:$0xf] %v1449
  %1578 = vst [vmem:[%s4 + $0x58] sm:$0xf] %v1450
  %1579 = vst [vmem:[%s4 + $0x5c] sm:$0xf] %v1451
  %1580 = vst [vmem:[%s4 + $0x60] sm:$0xf] %v1452
  %1581 = vst [vmem:[%s4 + $0x64] sm:$0xf] %v1453
  %1582 = vst [vmem:[%s4 + $0x68] sm:$0xf] %v1454
  %1583 = vst [vmem:[%s4 + $0x6c] sm:$0xf] %v1455
  %1584 = vst [vmem:[%s4 + $0x70] sm:$0xf] %v1456
  %1585 = vst [vmem:[%s4 + $0x74] sm:$0xf] %v1457
  %1586 = vst [vmem:[%s4 + $0x78] sm:$0xf] %v1458
  %1587 = vst [vmem:[%s4 + $0x7c] sm:$0xf] %v1459
  %1588 = vst [vmem:[%s4 + $0x80] sm:$0xf] %v1460
  %1589 = vst [vmem:[%s4 + $0x84] sm:$0xf] %v1461
  %1590 = vst [vmem:[%s4 + $0x88] sm:$0xf] %v1462
  %1591 = vst [vmem:[%s4 + $0x8c] sm:$0xf] %v1463
  %1592 = vst [vmem:[%s4 + $0x90] sm:$0xf] %v1464
  %1593 = vst [vmem:[%s4 + $0x94] sm:$0xf] %v1465
  %1594 = vst [vmem:[%s4 + $0x98] sm:$0xf] %v1466
  %1595 = vst [vmem:[%s4 + $0x9c] sm:$0xf] %v1467
  %1596 = vst [vmem:[%s4 + $0xa0] sm:$0xf] %v1468
  %1597 = vst [vmem:[%s4 + $0xa4] sm:$0xf] %v1469
  %1598 = vst [vmem:[%s4 + $0xa8] sm:$0xf] %v1470
  %1599 = vst [vmem:[%s4 + $0xac] sm:$0xf] %v1471
  %1600 = vst [vmem:[%s4 + $0xb0] sm:$0xf] %v1472
  %1601 = vst [vmem:[%s4 + $0xb4] sm:$0xf] %v1473
  %1602 = vst [vmem:[%s4 + $0xb8] sm:$0xf] %v1474
  %1603 = vst [vmem:[%s4 + $0xbc] sm:$0xf] %v1475
  %1604 = vst [vmem:[%s4 + $0xc0] sm:$0xf] %v1476
  %1605 = vst [vmem:[%s4 + $0xc4] sm:$0xf] %v1477
  %1606 = vst [vmem:[%s4 + $0xc8] sm:$0xf] %v1478
  %1607 = vst [vmem:[%s4 + $0xcc] sm:$0xf] %v1479
  %1608 = vst [vmem:[%s4 + $0xd0] sm:$0xf] %v1480
  %1609 = vst [vmem:[%s4 + $0xd4] sm:$0xf] %v1481
  %1610 = vst [vmem:[%s4 + $0xd8] sm:$0xf] %v1482
  %1611 = vst [vmem:[%s4 + $0xdc] sm:$0xf] %v1483
  %1612 = vst [vmem:[%s4 + $0xe0] sm:$0xf] %v1484
  %1613 = vst [vmem:[%s4 + $0xe4] sm:$0xf] %v1485
  %1614 = vst [vmem:[%s4 + $0xe8] sm:$0xf] %v1486
  %1615 = vst [vmem:[%s4 + $0xec] sm:$0xf] %v1487
  %1616 = vst [vmem:[%s4 + $0xf0] sm:$0xf] %v1488
  %1617 = vst [vmem:[%s4 + $0xf4] sm:$0xf] %v1489
  %1618 = vst [vmem:[%s4 + $0xf8] sm:$0xf] %v1490
  %1619 = vst [vmem:[%s4 + $0xfc] sm:$0xf] %v1491
  // Predicated region
  $region18: #{discriminator_forward.6} parent=0 // pred_check
    _
  $region19: #{discriminator_forward.6} parent=0 // pred_check_branch
    %1621 = sbr.rel (0) target = $region21
  $region20: #{discriminator_forward.6} parent=0 // pred_region
    _
  $region21: #{discriminator_forward.6} parent=0 // pred_fallthru
    _
  // Predicated region
  $region22: #{discriminator_forward.6} parent=0 // pred_check
    _
  $region23: #{discriminator_forward.6} parent=0 // pred_check_branch
    %1623 = sbr.rel (0) target = $region25
  $region24: #{discriminator_forward.6} parent=0 // pred_region
    _
  $region25: #{discriminator_forward.6} parent=0 // pred_fallthru
    _

// kernel: discriminator_forward.7
$region0: #{discriminator_forward.7}
  #allocation0 [shape = 'u32[]', space=smem, size = 0x4, offset = 0x4, fixed_abs, tag = 'smem constant byte address 0x4 - core index']
  #allocation1 [shape = 'u32[144,128]{1,0:T(1,128)}', space=vmem, size = 0x12000, scoped, tag = 'internal scratch']
  %s0 = inlined_call_operand.vmem [shape: bf16[128,512], index: 0, kind: input, shape index: {}]
  %s1 = inlined_call_operand.vmem [shape: bf16[512,128], index: 1, kind: input, shape index: {}]
  %s2 = inlined_call_operand.vmem [shape: f32[1,128], index: 2, kind: input, shape index: {}]
  %s3 = inlined_call_operand.vmem [shape: f32[1,128], index: 3, kind: input, shape index: {}]
  %s4 = inlined_call_operand.vmem [shape: bf16[128,128], index: 4, kind: output, shape index: {}]
  %s5 = sld [smem:[#allocation0]]
  $region26: #{discriminator_forward.7} parent=0
    _
  %s7 = ssub.s32 1, %s5
  %s8 = scalar_select 0, %s7, %s5
  // Predicated region
  $region2: #{discriminator_forward.7} parent=0 // pred_check
    _
  $region3: #{discriminator_forward.7} parent=0 // pred_check_branch
    %10 = sbr.rel (0) target = $region5
  $region4: #{discriminator_forward.7} parent=0 // pred_region
    _
  $region5: #{discriminator_forward.7} parent=0 // pred_fallthru
    _
  // Predicated region
  $region6: #{discriminator_forward.7} parent=0 // pred_check
    _
  $region7: #{discriminator_forward.7} parent=0 // pred_check_branch
    %12 = sbr.rel (0) target = $region9
  $region8: #{discriminator_forward.7} parent=0 // pred_region
    _
  $region9: #{discriminator_forward.7} parent=0 // pred_fallthru
    _
  // Predicated region
  $region10: #{discriminator_forward.7} parent=0 // pred_check
    _
  $region11: #{discriminator_forward.7} parent=0 // pred_check_branch
    %14 = sbr.rel (0) target = $region13
  $region12: #{discriminator_forward.7} parent=0 // pred_region
    _
  $region13: #{discriminator_forward.7} parent=0 // pred_fallthru
    _
  // Predicated region
  $region14: #{discriminator_forward.7} parent=0 // pred_check
    _
  $region15: #{discriminator_forward.7} parent=0 // pred_check_branch
    %16 = sbr.rel (0) target = $region17
  $region16: #{discriminator_forward.7} parent=0 // pred_region
    _
  $region17: #{discriminator_forward.7} parent=0 // pred_fallthru
    _
  %v18 = vld [vmem:[%s0] sm:$0xff]
  %v19 = vld [vmem:[%s0 + $0x8] sm:$0xff]
  %v20 = vld [vmem:[%s0 + $0x10] sm:$0xff]
  %v21 = vld [vmem:[%s0 + $0x18] sm:$0xff]
  %v22 = vld [vmem:[%s0 + $0x20] sm:$0xff]
  %v23 = vld [vmem:[%s0 + $0x28] sm:$0xff]
  %v24 = vld [vmem:[%s0 + $0x30] sm:$0xff]
  %v25 = vld [vmem:[%s0 + $0x38] sm:$0xff]
  %v26 = vld [vmem:[%s0 + $0x40] sm:$0xff]
  %v27 = vld [vmem:[%s0 + $0x48] sm:$0xff]
  %v28 = vld [vmem:[%s0 + $0x50] sm:$0xff]
  %v29 = vld [vmem:[%s0 + $0x58] sm:$0xff]
  %v30 = vld [vmem:[%s0 + $0x60] sm:$0xff]
  %v31 = vld [vmem:[%s0 + $0x68] sm:$0xff]
  %v32 = vld [vmem:[%s0 + $0x70] sm:$0xff]
  %v33 = vld [vmem:[%s0 + $0x78] sm:$0xff]
  %v34 = vld [vmem:[%s0 + $0x80] sm:$0xff]
  %v35 = vld [vmem:[%s0 + $0x88] sm:$0xff]
  %v36 = vld [vmem:[%s0 + $0x90] sm:$0xff]
  %v37 = vld [vmem:[%s0 + $0x98] sm:$0xff]
  %v38 = vld [vmem:[%s0 + $0xa0] sm:$0xff]
  %v39 = vld [vmem:[%s0 + $0xa8] sm:$0xff]
  %v40 = vld [vmem:[%s0 + $0xb0] sm:$0xff]
  %v41 = vld [vmem:[%s0 + $0xb8] sm:$0xff]
  %v42 = vld [vmem:[%s0 + $0xc0] sm:$0xff]
  %v43 = vld [vmem:[%s0 + $0xc8] sm:$0xff]
  %v44 = vld [vmem:[%s0 + $0xd0] sm:$0xff]
  %v45 = vld [vmem:[%s0 + $0xd8] sm:$0xff]
  %v46 = vld [vmem:[%s0 + $0xe0] sm:$0xff]
  %v47 = vld [vmem:[%s0 + $0xe8] sm:$0xff]
  %v48 = vld [vmem:[%s0 + $0xf0] sm:$0xff]
  %v49 = vld [vmem:[%s0 + $0xf8] sm:$0xff]
  %v50 = vld [vmem:[%s1] sm:$0xf]
  %v51 = vld [vmem:[%s1 + $0x4] sm:$0xf]
  %v52 = vld [vmem:[%s1 + $0x8] sm:$0xf]
  %v53 = vld [vmem:[%s1 + $0xc] sm:$0xf]
  %v54 = vld [vmem:[%s1 + $0x10] sm:$0xf]
  %v55 = vld [vmem:[%s1 + $0x14] sm:$0xf]
  %v56 = vld [vmem:[%s1 + $0x18] sm:$0xf]
  %v57 = vld [vmem:[%s1 + $0x1c] sm:$0xf]
  %v58 = vld [vmem:[%s1 + $0x20] sm:$0xf]
  %v59 = vld [vmem:[%s1 + $0x24] sm:$0xf]
  %v60 = vld [vmem:[%s1 + $0x28] sm:$0xf]
  %v61 = vld [vmem:[%s1 + $0x2c] sm:$0xf]
  %v62 = vld [vmem:[%s1 + $0x30] sm:$0xf]
  %v63 = vld [vmem:[%s1 + $0x34] sm:$0xf]
  %v64 = vld [vmem:[%s1 + $0x38] sm:$0xf]
  %v65 = vld [vmem:[%s1 + $0x3c] sm:$0xf]
  %v66 = vld [vmem:[%s1 + $0x40] sm:$0xf]
  %v67 = vld [vmem:[%s1 + $0x44] sm:$0xf]
  %v68 = vld [vmem:[%s1 + $0x48] sm:$0xf]
  %v69 = vld [vmem:[%s1 + $0x4c] sm:$0xf]
  %v70 = vld [vmem:[%s1 + $0x50] sm:$0xf]
  %v71 = vld [vmem:[%s1 + $0x54] sm:$0xf]
  %v72 = vld [vmem:[%s1 + $0x58] sm:$0xf]
  %v73 = vld [vmem:[%s1 + $0x5c] sm:$0xf]
  %v74 = vld [vmem:[%s1 + $0x60] sm:$0xf]
  %v75 = vld [vmem:[%s1 + $0x64] sm:$0xf]
  %v76 = vld [vmem:[%s1 + $0x68] sm:$0xf]
  %v77 = vld [vmem:[%s1 + $0x6c] sm:$0xf]
  %v78 = vld [vmem:[%s1 + $0x70] sm:$0xf]
  %v79 = vld [vmem:[%s1 + $0x74] sm:$0xf]
  %v80 = vld [vmem:[%s1 + $0x78] sm:$0xf]
  %v81 = vld [vmem:[%s1 + $0x7c] sm:$0xf]
  %v82 = vld [vmem:[%s1 + $0x80] sm:$0xf]
  %v83 = vld [vmem:[%s1 + $0x84] sm:$0xf]
  %v84 = vld [vmem:[%s1 + $0x88] sm:$0xf]
  %v85 = vld [vmem:[%s1 + $0x8c] sm:$0xf]
  %v86 = vld [vmem:[%s1 + $0x90] sm:$0xf]
  %v87 = vld [vmem:[%s1 + $0x94] sm:$0xf]
  %v88 = vld [vmem:[%s1 + $0x98] sm:$0xf]
  %v89 = vld [vmem:[%s1 + $0x9c] sm:$0xf]
  %v90 = vld [vmem:[%s1 + $0xa0] sm:$0xf]
  %v91 = vld [vmem:[%s1 + $0xa4] sm:$0xf]
  %v92 = vld [vmem:[%s1 + $0xa8] sm:$0xf]
  %v93 = vld [vmem:[%s1 + $0xac] sm:$0xf]
  %v94 = vld [vmem:[%s1 + $0xb0] sm:$0xf]
  %v95 = vld [vmem:[%s1 + $0xb4] sm:$0xf]
  %v96 = vld [vmem:[%s1 + $0xb8] sm:$0xf]
  %v97 = vld [vmem:[%s1 + $0xbc] sm:$0xf]
  %v98 = vld [vmem:[%s1 + $0xc0] sm:$0xf]
  %v99 = vld [vmem:[%s1 + $0xc4] sm:$0xf]
  %v100 = vld [vmem:[%s1 + $0xc8] sm:$0xf]
  %v101 = vld [vmem:[%s1 + $0xcc] sm:$0xf]
  %v102 = vld [vmem:[%s1 + $0xd0] sm:$0xf]
  %v103 = vld [vmem:[%s1 + $0xd4] sm:$0xf]
  %v104 = vld [vmem:[%s1 + $0xd8] sm:$0xf]
  %v105 = vld [vmem:[%s1 + $0xdc] sm:$0xf]
  %v106 = vld [vmem:[%s1 + $0xe0] sm:$0xf]
  %v107 = vld [vmem:[%s1 + $0xe4] sm:$0xf]
  %v108 = vld [vmem:[%s1 + $0xe8] sm:$0xf]
  %v109 = vld [vmem:[%s1 + $0xec] sm:$0xf]
  %v110 = vld [vmem:[%s1 + $0xf0] sm:$0xf]
  %v111 = vld [vmem:[%s1 + $0xf4] sm:$0xf]
  %v112 = vld [vmem:[%s1 + $0xf8] sm:$0xf]
  %v113 = vld [vmem:[%s1 + $0xfc] sm:$0xf]
  %v146 = vunpack.c.l.b16 %v18
  %v147 = vunpack.c.h.b16 %v18
  %v148 = vunpack.c.l.b16 %v19
  %v149 = vunpack.c.h.b16 %v19
  %v150 = vunpack.c.l.b16 %v20
  %v151 = vunpack.c.h.b16 %v20
  %v152 = vunpack.c.l.b16 %v21
  %v153 = vunpack.c.h.b16 %v21
  %v154 = vunpack.c.l.b16 %v22
  %v155 = vunpack.c.h.b16 %v22
  %v156 = vunpack.c.l.b16 %v23
  %v157 = vunpack.c.h.b16 %v23
  %v158 = vunpack.c.l.b16 %v24
  %v159 = vunpack.c.h.b16 %v24
  %v160 = vunpack.c.l.b16 %v25
  %v161 = vunpack.c.h.b16 %v25
  %v162 = vunpack.c.l.b16 %v26
  %v163 = vunpack.c.h.b16 %v26
  %v164 = vunpack.c.l.b16 %v27
  %v165 = vunpack.c.h.b16 %v27
  %v166 = vunpack.c.l.b16 %v28
  %v167 = vunpack.c.h.b16 %v28
  %v168 = vunpack.c.l.b16 %v29
  %v169 = vunpack.c.h.b16 %v29
  %v170 = vunpack.c.l.b16 %v30
  %v171 = vunpack.c.h.b16 %v30
  %v172 = vunpack.c.l.b16 %v31
  %v173 = vunpack.c.h.b16 %v31
  %v174 = vunpack.c.l.b16 %v32
  %v175 = vunpack.c.h.b16 %v32
  %v176 = vunpack.c.l.b16 %v33
  %v177 = vunpack.c.h.b16 %v33
  %v178 = vunpack.c.l.b16 %v34
  %v179 = vunpack.c.h.b16 %v34
  %v180 = vunpack.c.l.b16 %v35
  %v181 = vunpack.c.h.b16 %v35
  %v182 = vunpack.c.l.b16 %v36
  %v183 = vunpack.c.h.b16 %v36
  %v184 = vunpack.c.l.b16 %v37
  %v185 = vunpack.c.h.b16 %v37
  %v186 = vunpack.c.l.b16 %v38
  %v187 = vunpack.c.h.b16 %v38
  %v188 = vunpack.c.l.b16 %v39
  %v189 = vunpack.c.h.b16 %v39
  %v190 = vunpack.c.l.b16 %v40
  %v191 = vunpack.c.h.b16 %v40
  %v192 = vunpack.c.l.b16 %v41
  %v193 = vunpack.c.h.b16 %v41
  %v194 = vunpack.c.l.b16 %v42
  %v195 = vunpack.c.h.b16 %v42
  %v196 = vunpack.c.l.b16 %v43
  %v197 = vunpack.c.h.b16 %v43
  %v198 = vunpack.c.l.b16 %v44
  %v199 = vunpack.c.h.b16 %v44
  %v200 = vunpack.c.l.b16 %v45
  %v201 = vunpack.c.h.b16 %v45
  %v202 = vunpack.c.l.b16 %v46
  %v203 = vunpack.c.h.b16 %v46
  %v204 = vunpack.c.l.b16 %v47
  %v205 = vunpack.c.h.b16 %v47
  %v206 = vunpack.c.l.b16 %v48
  %v207 = vunpack.c.h.b16 %v48
  %v208 = vunpack.c.l.b16 %v49
  %v209 = vunpack.c.h.b16 %v49
  %v210 = vpack.c.b16 %v150, %v146
  %v211 = vpack.c.b16 %v151, %v147
  %v212 = vpack.c.b16 %v152, %v148
  %v213 = vpack.c.b16 %v153, %v149
  %v214 = vpack.c.b16 %v158, %v154
  %v215 = vpack.c.b16 %v159, %v155
  %v216 = vpack.c.b16 %v160, %v156
  %v217 = vpack.c.b16 %v161, %v157
  %v218 = vpack.c.b16 %v166, %v162
  %v219 = vpack.c.b16 %v167, %v163
  %v220 = vpack.c.b16 %v168, %v164
  %v221 = vpack.c.b16 %v169, %v165
  %v222 = vpack.c.b16 %v174, %v170
  %v223 = vpack.c.b16 %v175, %v171
  %v224 = vpack.c.b16 %v176, %v172
  %v225 = vpack.c.b16 %v177, %v173
  %v226 = vpack.c.b16 %v182, %v178
  %v227 = vpack.c.b16 %v183, %v179
  %v228 = vpack.c.b16 %v184, %v180
  %v229 = vpack.c.b16 %v185, %v181
  %v230 = vpack.c.b16 %v190, %v186
  %v231 = vpack.c.b16 %v191, %v187
  %v232 = vpack.c.b16 %v192, %v188
  %v233 = vpack.c.b16 %v193, %v189
  %v234 = vpack.c.b16 %v198, %v194
  %v235 = vpack.c.b16 %v199, %v195
  %v236 = vpack.c.b16 %v200, %v196
  %v237 = vpack.c.b16 %v201, %v197
  %v238 = vpack.c.b16 %v206, %v202
  %v239 = vpack.c.b16 %v207, %v203
  %v240 = vpack.c.b16 %v208, %v204
  %v241 = vpack.c.b16 %v209, %v205
  %v338 = vunpack.c.l.b16 %v50
  %v339 = vunpack.c.l.b16 %v51
  %v340 = vunpack.c.l.b16 %v52
  %v341 = vunpack.c.l.b16 %v53
  %v342 = vunpack.c.l.b16 %v54
  %v343 = vunpack.c.l.b16 %v55
  %v344 = vunpack.c.l.b16 %v56
  %v345 = vunpack.c.l.b16 %v57
  %v346 = vunpack.c.l.b16 %v58
  %v347 = vunpack.c.l.b16 %v59
  %v348 = vunpack.c.l.b16 %v60
  %v349 = vunpack.c.l.b16 %v61
  %v350 = vunpack.c.l.b16 %v62
  %v351 = vunpack.c.l.b16 %v63
  %v352 = vunpack.c.l.b16 %v64
  %v353 = vunpack.c.l.b16 %v65
  %v354 = vunpack.c.l.b16 %v66
  %v355 = vunpack.c.l.b16 %v67
  %v356 = vunpack.c.l.b16 %v68
  %v357 = vunpack.c.l.b16 %v69
  %v358 = vunpack.c.l.b16 %v70
  %v359 = vunpack.c.l.b16 %v71
  %v360 = vunpack.c.l.b16 %v72
  %v361 = vunpack.c.l.b16 %v73
  %v362 = vunpack.c.l.b16 %v74
  %v363 = vunpack.c.l.b16 %v75
  %v364 = vunpack.c.l.b16 %v76
  %v365 = vunpack.c.l.b16 %v77
  %v366 = vunpack.c.l.b16 %v78
  %v367 = vunpack.c.l.b16 %v79
  %v368 = vunpack.c.l.b16 %v80
  %v369 = vunpack.c.l.b16 %v81
  %v370 = vunpack.c.l.b16 %v82
  %v371 = vunpack.c.l.b16 %v83
  %v372 = vunpack.c.l.b16 %v84
  %v373 = vunpack.c.l.b16 %v85
  %v374 = vunpack.c.l.b16 %v86
  %v375 = vunpack.c.l.b16 %v87
  %v376 = vunpack.c.l.b16 %v88
  %v377 = vunpack.c.l.b16 %v89
  %v378 = vunpack.c.l.b16 %v90
  %v379 = vunpack.c.l.b16 %v91
  %v380 = vunpack.c.l.b16 %v92
  %v381 = vunpack.c.l.b16 %v93
  %v382 = vunpack.c.l.b16 %v94
  %v383 = vunpack.c.l.b16 %v95
  %v384 = vunpack.c.l.b16 %v96
  %v385 = vunpack.c.l.b16 %v97
  %v386 = vunpack.c.l.b16 %v98
  %v387 = vunpack.c.l.b16 %v99
  %v388 = vunpack.c.l.b16 %v100
  %v389 = vunpack.c.l.b16 %v101
  %v390 = vunpack.c.l.b16 %v102
  %v391 = vunpack.c.l.b16 %v103
  %v392 = vunpack.c.l.b16 %v104
  %v393 = vunpack.c.l.b16 %v105
  %v394 = vunpack.c.l.b16 %v106
  %v395 = vunpack.c.l.b16 %v107
  %v396 = vunpack.c.l.b16 %v108
  %v397 = vunpack.c.l.b16 %v109
  %v398 = vunpack.c.l.b16 %v110
  %v399 = vunpack.c.l.b16 %v111
  %v400 = vunpack.c.l.b16 %v112
  %v401 = vunpack.c.l.b16 %v113
  %v402 = vpack.c.b16 %v339, %v338
  %v403 = vpack.c.b16 %v341, %v340
  %v404 = vpack.c.b16 %v343, %v342
  %v405 = vpack.c.b16 %v345, %v344
  %v406 = vpack.c.b16 %v347, %v346
  %v407 = vpack.c.b16 %v349, %v348
  %v408 = vpack.c.b16 %v351, %v350
  %v409 = vpack.c.b16 %v353, %v352
  %v410 = vpack.c.b16 %v355, %v354
  %v411 = vpack.c.b16 %v357, %v356
  %v412 = vpack.c.b16 %v359, %v358
  %v413 = vpack.c.b16 %v361, %v360
  %v414 = vpack.c.b16 %v363, %v362
  %v415 = vpack.c.b16 %v365, %v364
  %v416 = vpack.c.b16 %v367, %v366
  %v417 = vpack.c.b16 %v369, %v368
  %v418 = vpack.c.b16 %v371, %v370
  %v419 = vpack.c.b16 %v373, %v372
  %v420 = vpack.c.b16 %v375, %v374
  %v421 = vpack.c.b16 %v377, %v376
  %v422 = vpack.c.b16 %v379, %v378
  %v423 = vpack.c.b16 %v381, %v380
  %v424 = vpack.c.b16 %v383, %v382
  %v425 = vpack.c.b16 %v385, %v384
  %v426 = vpack.c.b16 %v387, %v386
  %v427 = vpack.c.b16 %v389, %v388
  %v428 = vpack.c.b16 %v391, %v390
  %v429 = vpack.c.b16 %v393, %v392
  %v430 = vpack.c.b16 %v395, %v394
  %v431 = vpack.c.b16 %v397, %v396
  %v432 = vpack.c.b16 %v399, %v398
  %v433 = vpack.c.b16 %v401, %v400
  %466 = vmatprep.subr.bf16.mxu0 0
  %467 = vmatpush1.bf16.msra.mxu0 %v402
  %468 = vmatprep.subr.bf16.mxu0 0
  %469 = vmatpush1.bf16.msra.mxu0 %v403
  %470 = vmatprep.subr.bf16.mxu0 0
  %471 = vmatpush1.bf16.msra.mxu0 %v404
  %472 = vmatprep.subr.bf16.mxu0 0
  %473 = vmatpush1.bf16.msra.mxu0 %v405
  %474 = vmatprep.subr.bf16.mxu0 0
  %475 = vmatpush1.bf16.msra.mxu0 %v406
  %476 = vmatprep.subr.bf16.mxu0 0
  %477 = vmatpush1.bf16.msra.mxu0 %v407
  %478 = vmatprep.subr.bf16.mxu0 0
  %479 = vmatpush1.bf16.msra.mxu0 %v408
  %480 = vmatprep.subr.bf16.mxu0 0
  %481 = vmatpush1.bf16.msra.mxu0 %v409
  %482 = vmatprep.subr.bf16.mxu0 0
  %483 = vmatpush1.bf16.msra.mxu0 %v410
  %484 = vmatprep.subr.bf16.mxu0 0
  %485 = vmatpush1.bf16.msra.mxu0 %v411
  %486 = vmatprep.subr.bf16.mxu0 0
  %487 = vmatpush1.bf16.msra.mxu0 %v412
  %488 = vmatprep.subr.bf16.mxu0 0
  %489 = vmatpush1.bf16.msra.mxu0 %v413
  %490 = vmatprep.subr.bf16.mxu0 0
  %491 = vmatpush1.bf16.msra.mxu0 %v414
  %492 = vmatprep.subr.bf16.mxu0 0
  %493 = vmatpush1.bf16.msra.mxu0 %v415
  %494 = vmatprep.subr.bf16.mxu0 0
  %495 = vmatpush1.bf16.msra.mxu0 %v416
  %496 = vmatprep.subr.bf16.mxu0 0
  %497 = vmatpush1.bf16.msra.mxu0 %v417
  %498 = vmatprep.mubr.bf16.mxu0 %v211
  %499 = vmatmul.mubr.bf16.gmra.mrb[0].mxu0 %v210
  %v500 = vpop.f32.mrb[0].mxu0
  %v501 = vadd.f32 0.0, %v500
  %v502 = vpop.f32.mrb[0].mxu0
  %v503 = vpop.f32.mrb[0].mxu0
  %v504 = vadd.f32 0.0, %v503
  %v505 = vpop.f32.mrb[0].mxu0
  %506 = vmatprep.mubr.bf16.mxu0 %v215
  %507 = vmatmul.mubr.bf16.gmra.mrb[0].mxu0 %v214
  %v508 = vpop.f32.mrb[0].mxu0
  %v509 = vadd.f32 0.0, %v508
  %v510 = vpop.f32.mrb[0].mxu0
  %v511 = vpop.f32.mrb[0].mxu0
  %v512 = vadd.f32 0.0, %v511
  %v513 = vpop.f32.mrb[0].mxu0
  %514 = vmatprep.mubr.bf16.mxu0 %v219
  %515 = vmatmul.mubr.bf16.gmra.mrb[0].mxu0 %v218
  %v516 = vpop.f32.mrb[0].mxu0
  %v517 = vadd.f32 0.0, %v516
  %v518 = vpop.f32.mrb[0].mxu0
  %v519 = vpop.f32.mrb[0].mxu0
  %v520 = vadd.f32 0.0, %v519
  %v521 = vpop.f32.mrb[0].mxu0
  %522 = vmatprep.mubr.bf16.mxu0 %v223
  %523 = vmatmul.mubr.bf16.gmra.mrb[0].mxu0 %v222
  %v524 = vpop.f32.mrb[0].mxu0
  %v525 = vadd.f32 0.0, %v524
  %v526 = vpop.f32.mrb[0].mxu0
  %v527 = vpop.f32.mrb[0].mxu0
  %v528 = vadd.f32 0.0, %v527
  %v529 = vpop.f32.mrb[0].mxu0
  %530 = vmatprep.mubr.bf16.mxu0 %v227
  %531 = vmatmul.mubr.bf16.gmra.mrb[0].mxu0 %v226
  %v532 = vpop.f32.mrb[0].mxu0
  %v533 = vadd.f32 0.0, %v532
  %v534 = vpop.f32.mrb[0].mxu0
  %v535 = vpop.f32.mrb[0].mxu0
  %v536 = vadd.f32 0.0, %v535
  %v537 = vpop.f32.mrb[0].mxu0
  %538 = vmatprep.mubr.bf16.mxu0 %v231
  %539 = vmatmul.mubr.bf16.gmra.mrb[0].mxu0 %v230
  %v540 = vpop.f32.mrb[0].mxu0
  %v541 = vadd.f32 0.0, %v540
  %v542 = vpop.f32.mrb[0].mxu0
  %v543 = vpop.f32.mrb[0].mxu0
  %v544 = vadd.f32 0.0, %v543
  %v545 = vpop.f32.mrb[0].mxu0
  %546 = vmatprep.mubr.bf16.mxu0 %v235
  %547 = vmatmul.mubr.bf16.gmra.mrb[0].mxu0 %v234
  %v548 = vpop.f32.mrb[0].mxu0
  %v549 = vadd.f32 0.0, %v548
  %v550 = vpop.f32.mrb[0].mxu0
  %v551 = vpop.f32.mrb[0].mxu0
  %v552 = vadd.f32 0.0, %v551
  %v553 = vpop.f32.mrb[0].mxu0
  %554 = vmatprep.mubr.bf16.mxu0 %v239
  %555 = vmatmul.mubr.bf16.gmra.mrb[0].mxu0 %v238
  %v556 = vpop.f32.mrb[0].mxu0
  %v557 = vadd.f32 0.0, %v556
  %v558 = vpop.f32.mrb[0].mxu0
  %v559 = vpop.f32.mrb[0].mxu0
  %v560 = vadd.f32 0.0, %v559
  %v561 = vpop.f32.mrb[0].mxu0
  %562 = vdwg.mxu0
  %563 = vmatprep.subr.bf16.mxu0 0
  %564 = vmatpush1.bf16.msra.mxu0 %v418
  %565 = vmatprep.subr.bf16.mxu0 0
  %566 = vmatpush1.bf16.msra.mxu0 %v419
  %567 = vmatprep.subr.bf16.mxu0 0
  %568 = vmatpush1.bf16.msra.mxu0 %v420
  %569 = vmatprep.subr.bf16.mxu0 0
  %570 = vmatpush1.bf16.msra.mxu0 %v421
  %571 = vmatprep.subr.bf16.mxu0 0
  %572 = vmatpush1.bf16.msra.mxu0 %v422
  %573 = vmatprep.subr.bf16.mxu0 0
  %574 = vmatpush1.bf16.msra.mxu0 %v423
  %575 = vmatprep.subr.bf16.mxu0 0
  %576 = vmatpush1.bf16.msra.mxu0 %v424
  %577 = vmatprep.subr.bf16.mxu0 0
  %578 = vmatpush1.bf16.msra.mxu0 %v425
  %579 = vmatprep.subr.bf16.mxu0 0
  %580 = vmatpush1.bf16.msra.mxu0 %v426
  %581 = vmatprep.subr.bf16.mxu0 0
  %582 = vmatpush1.bf16.msra.mxu0 %v427
  %583 = vmatprep.subr.bf16.mxu0 0
  %584 = vmatpush1.bf16.msra.mxu0 %v428
  %585 = vmatprep.subr.bf16.mxu0 0
  %586 = vmatpush1.bf16.msra.mxu0 %v429
  %587 = vmatprep.subr.bf16.mxu0 0
  %588 = vmatpush1.bf16.msra.mxu0 %v430
  %589 = vmatprep.subr.bf16.mxu0 0
  %590 = vmatpush1.bf16.msra.mxu0 %v431
  %591 = vmatprep.subr.bf16.mxu0 0
  %592 = vmatpush1.bf16.msra.mxu0 %v432
  %593 = vmatprep.subr.bf16.mxu0 0
  %594 = vmatpush1.bf16.msra.mxu0 %v433
  %595 = vmatprep.mubr.bf16.mxu0 %v213
  %596 = vmatmul.mubr.bf16.gmra.mrb[0].mxu0 %v212
  %v597 = vpop.f32.mrb[0].mxu0
  %v598 = vadd.f32 %v501, %v597
  %v599 = vpop.f32.mrb[0].mxu0
  %v600 = vpop.f32.mrb[0].mxu0
  %v601 = vadd.f32 %v504, %v600
  %v602 = vpop.f32.mrb[0].mxu0
  %603 = vmatprep.mubr.bf16.mxu0 %v217
  %604 = vmatmul.mubr.bf16.gmra.mrb[0].mxu0 %v216
  %v605 = vpop.f32.mrb[0].mxu0
  %v606 = vadd.f32 %v509, %v605
  %v607 = vpop.f32.mrb[0].mxu0
  %v608 = vpop.f32.mrb[0].mxu0
  %v609 = vadd.f32 %v512, %v608
  %v610 = vpop.f32.mrb[0].mxu0
  %611 = vmatprep.mubr.bf16.mxu0 %v221
  %612 = vmatmul.mubr.bf16.gmra.mrb[0].mxu0 %v220
  %v613 = vpop.f32.mrb[0].mxu0
  %v614 = vadd.f32 %v517, %v613
  %v615 = vpop.f32.mrb[0].mxu0
  %v616 = vpop.f32.mrb[0].mxu0
  %v617 = vadd.f32 %v520, %v616
  %v618 = vpop.f32.mrb[0].mxu0
  %619 = vmatprep.mubr.bf16.mxu0 %v225
  %620 = vmatmul.mubr.bf16.gmra.mrb[0].mxu0 %v224
  %v621 = vpop.f32.mrb[0].mxu0
  %v622 = vadd.f32 %v525, %v621
  %v623 = vpop.f32.mrb[0].mxu0
  %v624 = vpop.f32.mrb[0].mxu0
  %v625 = vadd.f32 %v528, %v624
  %v626 = vpop.f32.mrb[0].mxu0
  %627 = vmatprep.mubr.bf16.mxu0 %v229
  %628 = vmatmul.mubr.bf16.gmra.mrb[0].mxu0 %v228
  %v629 = vpop.f32.mrb[0].mxu0
  %v630 = vadd.f32 %v533, %v629
  %v631 = vpop.f32.mrb[0].mxu0
  %v632 = vpop.f32.mrb[0].mxu0
  %v633 = vadd.f32 %v536, %v632
  %v634 = vpop.f32.mrb[0].mxu0
  %635 = vmatprep.mubr.bf16.mxu0 %v233
  %636 = vmatmul.mubr.bf16.gmra.mrb[0].mxu0 %v232
  %v637 = vpop.f32.mrb[0].mxu0
  %v638 = vadd.f32 %v541, %v637
  %v639 = vpop.f32.mrb[0].mxu0
  %v640 = vpop.f32.mrb[0].mxu0
  %v641 = vadd.f32 %v544, %v640
  %v642 = vpop.f32.mrb[0].mxu0
  %643 = vmatprep.mubr.bf16.mxu0 %v237
  %644 = vmatmul.mubr.bf16.gmra.mrb[0].mxu0 %v236
  %v645 = vpop.f32.mrb[0].mxu0
  %v646 = vadd.f32 %v549, %v645
  %v647 = vpop.f32.mrb[0].mxu0
  %v648 = vpop.f32.mrb[0].mxu0
  %v649 = vadd.f32 %v552, %v648
  %v650 = vpop.f32.mrb[0].mxu0
  %651 = vmatprep.mubr.bf16.mxu0 %v241
  %652 = vmatmul.mubr.bf16.gmra.mrb[0].mxu0 %v240
  %v653 = vpop.f32.mrb[0].mxu0
  %v654 = vadd.f32 %v557, %v653
  %v655 = vpop.f32.mrb[0].mxu0
  %v656 = vpop.f32.mrb[0].mxu0
  %v657 = vadd.f32 %v560, %v656
  %v658 = vpop.f32.mrb[0].mxu0
  %659 = vdwg.mxu0
  %v660 = vadd.f32 %v598, %v601
  %v661 = vadd.f32 %v660, %v606
  %v662 = vadd.f32 %v661, %v609
  %v663 = vadd.f32 %v662, %v614
  %v664 = vadd.f32 %v663, %v617
  %v665 = vadd.f32 %v664, %v622
  %v666 = vadd.f32 %v665, %v625
  %v667 = vadd.f32 %v666, %v630
  %v668 = vadd.f32 %v667, %v633
  %v669 = vadd.f32 %v668, %v638
  %v670 = vadd.f32 %v669, %v641
  %v671 = vadd.f32 %v670, %v646
  %v672 = vadd.f32 %v671, %v649
  %v673 = vadd.f32 %v672, %v654
  %v674 = vadd.f32 %v673, %v657
  %v675 = vrot.slane %v674, 4
  %v676 = vadd.f32 %v674, %v675
  %v677 = vrot.slane %v676, 2
  %v678 = vadd.f32 %v676, %v677
  %v679 = vrot.slane %v678, 1
  %v680 = vadd.f32 %v678, %v679
  %v681 = vmul.f32 %v680, 0.0078125
  %v682 = vmul.f32 %v598, %v598
  %v683 = vmul.f32 %v601, %v601
  %v684 = vmul.f32 %v606, %v606
  %v685 = vmul.f32 %v609, %v609
  %v686 = vmul.f32 %v614, %v614
  %v687 = vmul.f32 %v617, %v617
  %v688 = vmul.f32 %v622, %v622
  %v689 = vmul.f32 %v625, %v625
  %v690 = vmul.f32 %v630, %v630
  %v691 = vmul.f32 %v633, %v633
  %v692 = vmul.f32 %v638, %v638
  %v693 = vmul.f32 %v641, %v641
  %v694 = vmul.f32 %v646, %v646
  %v695 = vmul.f32 %v649, %v649
  %v696 = vmul.f32 %v654, %v654
  %v697 = vmul.f32 %v657, %v657
  %v698 = vadd.f32 %v682, %v683
  %v699 = vadd.f32 %v698, %v684
  %v700 = vadd.f32 %v699, %v685
  %v701 = vadd.f32 %v700, %v686
  %v702 = vadd.f32 %v701, %v687
  %v703 = vadd.f32 %v702, %v688
  %v704 = vadd.f32 %v703, %v689
  %v705 = vadd.f32 %v704, %v690
  %v706 = vadd.f32 %v705, %v691
  %v707 = vadd.f32 %v706, %v692
  %v708 = vadd.f32 %v707, %v693
  %v709 = vadd.f32 %v708, %v694
  %v710 = vadd.f32 %v709, %v695
  %v711 = vadd.f32 %v710, %v696
  %v712 = vadd.f32 %v711, %v697
  %v713 = vrot.slane %v712, 4
  %v714 = vadd.f32 %v712, %v713
  %v715 = vrot.slane %v714, 2
  %v716 = vadd.f32 %v714, %v715
  %v717 = vrot.slane %v716, 1
  %v718 = vadd.f32 %v716, %v717
  %v719 = vmul.f32 %v718, 0.0078125
  %v720 = vmul.f32 %v681, %v681
  %v721 = vsub.f32 %v719, %v720
  %v722 = vld [vmem:[%s2] sm:$0x1]
  %v723 = vadd.f32 %v721, 1e-05
  %v724 = vrsqrt.pop %v723
  %v725 = vmul.f32 %v722, %v724
  %v726 = vld [vmem:[%s3] sm:$0x1]
  %v727 = vmul.f32 %v681, %v725
  %v728 = vsub.f32 %v726, %v727
  %v730 = vlaneseq
  %v731 = vshrl.u32 %v730, 7
  %v732 = vsub.s32 0, %v731
  %v733 = vrot.slane %v725, %v732
  %v735 = vmul.f32 %v598, %v733
  %v736 = vmul.f32 %v601, %v733
  %v737 = vmul.f32 %v606, %v733
  %v738 = vmul.f32 %v609, %v733
  %v739 = vmul.f32 %v614, %v733
  %v740 = vmul.f32 %v617, %v733
  %v741 = vmul.f32 %v622, %v733
  %v742 = vmul.f32 %v625, %v733
  %v743 = vmul.f32 %v630, %v733
  %v744 = vmul.f32 %v633, %v733
  %v745 = vmul.f32 %v638, %v733
  %v746 = vmul.f32 %v641, %v733
  %v747 = vmul.f32 %v646, %v733
  %v748 = vmul.f32 %v649, %v733
  %v749 = vmul.f32 %v654, %v733
  %v750 = vmul.f32 %v657, %v733
  %v752 = vlaneseq
  %v753 = vshrl.u32 %v752, 7
  %v754 = vsub.s32 0, %v753
  %v755 = vrot.slane %v728, %v754
  %v757 = vadd.f32 %v735, %v755
  %v758 = vadd.f32 %v736, %v755
  %v759 = vadd.f32 %v737, %v755
  %v760 = vadd.f32 %v738, %v755
  %v761 = vadd.f32 %v739, %v755
  %v762 = vadd.f32 %v740, %v755
  %v763 = vadd.f32 %v741, %v755
  %v764 = vadd.f32 %v742, %v755
  %v765 = vadd.f32 %v743, %v755
  %v766 = vadd.f32 %v744, %v755
  %v767 = vadd.f32 %v745, %v755
  %v768 = vadd.f32 %v746, %v755
  %v769 = vadd.f32 %v747, %v755
  %v770 = vadd.f32 %v748, %v755
  %v771 = vadd.f32 %v749, %v755
  %v772 = vadd.f32 %v750, %v755
  %v773 = vmul.f32 %v757, 0.2
  %v774 = vmul.f32 %v758, 0.2
  %v775 = vmul.f32 %v759, 0.2
  %v776 = vmul.f32 %v760, 0.2
  %v777 = vmul.f32 %v761, 0.2
  %v778 = vmul.f32 %v762, 0.2
  %v779 = vmul.f32 %v763, 0.2
  %v780 = vmul.f32 %v764, 0.2
  %v781 = vmul.f32 %v765, 0.2
  %v782 = vmul.f32 %v766, 0.2
  %v783 = vmul.f32 %v767, 0.2
  %v784 = vmul.f32 %v768, 0.2
  %v785 = vmul.f32 %v769, 0.2
  %v786 = vmul.f32 %v770, 0.2
  %v787 = vmul.f32 %v771, 0.2
  %v788 = vmul.f32 %v772, 0.2
  %v789 = vmax.f32 %v757, %v773
  %v790 = vmax.f32 %v758, %v774
  %v791 = vmax.f32 %v759, %v775
  %v792 = vmax.f32 %v760, %v776
  %v793 = vmax.f32 %v761, %v777
  %v794 = vmax.f32 %v762, %v778
  %v795 = vmax.f32 %v763, %v779
  %v796 = vmax.f32 %v764, %v780
  %v797 = vmax.f32 %v765, %v781
  %v798 = vmax.f32 %v766, %v782
  %v799 = vmax.f32 %v767, %v783
  %v800 = vmax.f32 %v768, %v784
  %v801 = vmax.f32 %v769, %v785
  %v802 = vmax.f32 %v770, %v786
  %v803 = vmax.f32 %v771, %v787
  %v804 = vmax.f32 %v772, %v788
  %v805 = vpack.c.bf16 %v790, %v789
  %v806 = vpack.c.bf16 %v792, %v791
  %v807 = vpack.c.bf16 %v794, %v793
  %v808 = vpack.c.bf16 %v796, %v795
  %v809 = vpack.c.bf16 %v798, %v797
  %v810 = vpack.c.bf16 %v800, %v799
  %v811 = vpack.c.bf16 %v802, %v801
  %v812 = vpack.c.bf16 %v804, %v803
  %v821 = vunpack.c.l.b16 %v805
  %v822 = vunpack.c.h.b16 %v805
  %v823 = vunpack.c.l.b16 %v806
  %v824 = vunpack.c.h.b16 %v806
  %v825 = vunpack.c.l.b16 %v807
  %v826 = vunpack.c.h.b16 %v807
  %v827 = vunpack.c.l.b16 %v808
  %v828 = vunpack.c.h.b16 %v808
  %v829 = vunpack.c.l.b16 %v809
  %v830 = vunpack.c.h.b16 %v809
  %v831 = vunpack.c.l.b16 %v810
  %v832 = vunpack.c.h.b16 %v810
  %v833 = vunpack.c.l.b16 %v811
  %v834 = vunpack.c.h.b16 %v811
  %v835 = vunpack.c.l.b16 %v812
  %v836 = vunpack.c.h.b16 %v812
  %v837 = vpack.c.b16 %v821, %v821
  %v838 = vpack.c.b16 %v822, %v822
  %v839 = vpack.c.b16 %v823, %v823
  %v840 = vpack.c.b16 %v824, %v824
  %v841 = vpack.c.b16 %v825, %v825
  %v842 = vpack.c.b16 %v826, %v826
  %v843 = vpack.c.b16 %v827, %v827
  %v844 = vpack.c.b16 %v828, %v828
  %v845 = vpack.c.b16 %v829, %v829
  %v846 = vpack.c.b16 %v830, %v830
  %v847 = vpack.c.b16 %v831, %v831
  %v848 = vpack.c.b16 %v832, %v832
  %v849 = vpack.c.b16 %v833, %v833
  %v850 = vpack.c.b16 %v834, %v834
  %v851 = vpack.c.b16 %v835, %v835
  %v852 = vpack.c.b16 %v836, %v836
  %869 = vst [vmem:[%s4] sm:$0xf] %v837
  %870 = vst [vmem:[%s4 + $0x4] sm:$0xf] %v838
  %871 = vst [vmem:[%s4 + $0x8] sm:$0xf] %v839
  %872 = vst [vmem:[%s4 + $0xc] sm:$0xf] %v840
  %873 = vst [vmem:[%s4 + $0x10] sm:$0xf] %v841
  %874 = vst [vmem:[%s4 + $0x14] sm:$0xf] %v842
  %875 = vst [vmem:[%s4 + $0x18] sm:$0xf] %v843
  %876 = vst [vmem:[%s4 + $0x1c] sm:$0xf] %v844
  %877 = vst [vmem:[%s4 + $0x20] sm:$0xf] %v845
  %878 = vst [vmem:[%s4 + $0x24] sm:$0xf] %v846
  %879 = vst [vmem:[%s4 + $0x28] sm:$0xf] %v847
  %880 = vst [vmem:[%s4 + $0x2c] sm:$0xf] %v848
  %881 = vst [vmem:[%s4 + $0x30] sm:$0xf] %v849
  %882 = vst [vmem:[%s4 + $0x34] sm:$0xf] %v850
  %883 = vst [vmem:[%s4 + $0x38] sm:$0xf] %v851
  %884 = vst [vmem:[%s4 + $0x3c] sm:$0xf] %v852
  // Predicated region
  $region18: #{discriminator_forward.7} parent=0 // pred_check
    _
  $region19: #{discriminator_forward.7} parent=0 // pred_check_branch
    %886 = sbr.rel (0) target = $region21
  $region20: #{discriminator_forward.7} parent=0 // pred_region
    _
  $region21: #{discriminator_forward.7} parent=0 // pred_fallthru
    _
  // Predicated region
  $region22: #{discriminator_forward.7} parent=0 // pred_check
    _
  $region23: #{discriminator_forward.7} parent=0 // pred_check_branch
    %888 = sbr.rel (0) target = $region25
  $region24: #{discriminator_forward.7} parent=0 // pred_region
    _
  $region25: #{discriminator_forward.7} parent=0 // pred_fallthru
    _

// kernel: discriminator_forward.8
$region0: #{discriminator_forward.8}
  #allocation0 [shape = 'u32[]', space=smem, size = 0x4, offset = 0x4, fixed_abs, tag = 'smem constant byte address 0x4 - core index']
  #allocation1 [shape = 'u32[144,128]{1,0:T(1,128)}', space=vmem, size = 0x12000, scoped, tag = 'internal scratch']
  %s0 = inlined_call_operand.vmem [shape: bf16[32,1024], index: 0, kind: input, shape index: {}]
  %s1 = inlined_call_operand.vmem [shape: bf16[1024,128], index: 1, kind: input, shape index: {}]
  %s2 = inlined_call_operand.vmem [shape: f32[1,128], index: 2, kind: input, shape index: {}]
  %s3 = inlined_call_operand.vmem [shape: f32[1,128], index: 3, kind: input, shape index: {}]
  %s4 = inlined_call_operand.vmem [shape: bf16[32,128], index: 4, kind: output, shape index: {}]
  %s5 = sld [smem:[#allocation0]]
  $region26: #{discriminator_forward.8} parent=0
    _
  %s7 = ssub.s32 1, %s5
  %s8 = scalar_select 0, %s7, %s5
  // Predicated region
  $region2: #{discriminator_forward.8} parent=0 // pred_check
    _
  $region3: #{discriminator_forward.8} parent=0 // pred_check_branch
    %10 = sbr.rel (0) target = $region5
  $region4: #{discriminator_forward.8} parent=0 // pred_region
    _
  $region5: #{discriminator_forward.8} parent=0 // pred_fallthru
    _
  // Predicated region
  $region6: #{discriminator_forward.8} parent=0 // pred_check
    _
  $region7: #{discriminator_forward.8} parent=0 // pred_check_branch
    %12 = sbr.rel (0) target = $region9
  $region8: #{discriminator_forward.8} parent=0 // pred_region
    _
  $region9: #{discriminator_forward.8} parent=0 // pred_fallthru
    _
  // Predicated region
  $region10: #{discriminator_forward.8} parent=0 // pred_check
    _
  $region11: #{discriminator_forward.8} parent=0 // pred_check_branch
    %14 = sbr.rel (0) target = $region13
  $region12: #{discriminator_forward.8} parent=0 // pred_region
    _
  $region13: #{discriminator_forward.8} parent=0 // pred_fallthru
    _
  // Predicated region
  $region14: #{discriminator_forward.8} parent=0 // pred_check
    _
  $region15: #{discriminator_forward.8} parent=0 // pred_check_branch
    %16 = sbr.rel (0) target = $region17
  $region16: #{discriminator_forward.8} parent=0 // pred_region
    _
  $region17: #{discriminator_forward.8} parent=0 // pred_fallthru
    _
  %v18 = vld [vmem:[%s0] sm:$0xff]
  %v19 = vld [vmem:[%s0 + $0x8] sm:$0xff]
  %v20 = vld [vmem:[%s0 + $0x10] sm:$0xff]
  %v21 = vld [vmem:[%s0 + $0x18] sm:$0xff]
  %v22 = vld [vmem:[%s0 + $0x20] sm:$0xff]
  %v23 = vld [vmem:[%s0 + $0x28] sm:$0xff]
  %v24 = vld [vmem:[%s0 + $0x30] sm:$0xff]
  %v25 = vld [vmem:[%s0 + $0x38] sm:$0xff]
  %v26 = vld [vmem:[%s0 + $0x40] sm:$0xff]
  %v27 = vld [vmem:[%s0 + $0x48] sm:$0xff]
  %v28 = vld [vmem:[%s0 + $0x50] sm:$0xff]
  %v29 = vld [vmem:[%s0 + $0x58] sm:$0xff]
  %v30 = vld [vmem:[%s0 + $0x60] sm:$0xff]
  %v31 = vld [vmem:[%s0 + $0x68] sm:$0xff]
  %v32 = vld [vmem:[%s0 + $0x70] sm:$0xff]
  %v33 = vld [vmem:[%s0 + $0x78] sm:$0xff]
  %v34 = vld [vmem:[%s1] sm:$0xf]
  %v35 = vld [vmem:[%s1 + $0x4] sm:$0xf]
  %v36 = vld [vmem:[%s1 + $0x8] sm:$0xf]
  %v37 = vld [vmem:[%s1 + $0xc] sm:$0xf]
  %v38 = vld [vmem:[%s1 + $0x10] sm:$0xf]
  %v39 = vld [vmem:[%s1 + $0x14] sm:$0xf]
  %v40 = vld [vmem:[%s1 + $0x18] sm:$0xf]
  %v41 = vld [vmem:[%s1 + $0x1c] sm:$0xf]
  %v42 = vld [vmem:[%s1 + $0x20] sm:$0xf]
  %v43 = vld [vmem:[%s1 + $0x24] sm:$0xf]
  %v44 = vld [vmem:[%s1 + $0x28] sm:$0xf]
  %v45 = vld [vmem:[%s1 + $0x2c] sm:$0xf]
  %v46 = vld [vmem:[%s1 + $0x30] sm:$0xf]
  %v47 = vld [vmem:[%s1 + $0x34] sm:$0xf]
  %v48 = vld [vmem:[%s1 + $0x38] sm:$0xf]
  %v49 = vld [vmem:[%s1 + $0x3c] sm:$0xf]
  %v50 = vld [vmem:[%s1 + $0x40] sm:$0xf]
  %v51 = vld [vmem:[%s1 + $0x44] sm:$0xf]
  %v52 = vld [vmem:[%s1 + $0x48] sm:$0xf]
  %v53 = vld [vmem:[%s1 + $0x4c] sm:$0xf]
  %v54 = vld [vmem:[%s1 + $0x50] sm:$0xf]
  %v55 = vld [vmem:[%s1 + $0x54] sm:$0xf]
  %v56 = vld [vmem:[%s1 + $0x58] sm:$0xf]
  %v57 = vld [vmem:[%s1 + $0x5c] sm:$0xf]
  %v58 = vld [vmem:[%s1 + $0x60] sm:$0xf]
  %v59 = vld [vmem:[%s1 + $0x64] sm:$0xf]
  %v60 = vld [vmem:[%s1 + $0x68] sm:$0xf]
  %v61 = vld [vmem:[%s1 + $0x6c] sm:$0xf]
  %v62 = vld [vmem:[%s1 + $0x70] sm:$0xf]
  %v63 = vld [vmem:[%s1 + $0x74] sm:$0xf]
  %v64 = vld [vmem:[%s1 + $0x78] sm:$0xf]
  %v65 = vld [vmem:[%s1 + $0x7c] sm:$0xf]
  %v66 = vld [vmem:[%s1 + $0x80] sm:$0xf]
  %v67 = vld [vmem:[%s1 + $0x84] sm:$0xf]
  %v68 = vld [vmem:[%s1 + $0x88] sm:$0xf]
  %v69 = vld [vmem:[%s1 + $0x8c] sm:$0xf]
  %v70 = vld [vmem:[%s1 + $0x90] sm:$0xf]
  %v71 = vld [vmem:[%s1 + $0x94] sm:$0xf]
  %v72 = vld [vmem:[%s1 + $0x98] sm:$0xf]
  %v73 = vld [vmem:[%s1 + $0x9c] sm:$0xf]
  %v74 = vld [vmem:[%s1 + $0xa0] sm:$0xf]
  %v75 = vld [vmem:[%s1 + $0xa4] sm:$0xf]
  %v76 = vld [vmem:[%s1 + $0xa8] sm:$0xf]
  %v77 = vld [vmem:[%s1 + $0xac] sm:$0xf]
  %v78 = vld [vmem:[%s1 + $0xb0] sm:$0xf]
  %v79 = vld [vmem:[%s1 + $0xb4] sm:$0xf]
  %v80 = vld [vmem:[%s1 + $0xb8] sm:$0xf]
  %v81 = vld [vmem:[%s1 + $0xbc] sm:$0xf]
  %v82 = vld [vmem:[%s1 + $0xc0] sm:$0xf]
  %v83 = vld [vmem:[%s1 + $0xc4] sm:$0xf]
  %v84 = vld [vmem:[%s1 + $0xc8] sm:$0xf]
  %v85 = vld [vmem:[%s1 + $0xcc] sm:$0xf]
  %v86 = vld [vmem:[%s1 + $0xd0] sm:$0xf]
  %v87 = vld [vmem:[%s1 + $0xd4] sm:$0xf]
  %v88 = vld [vmem:[%s1 + $0xd8] sm:$0xf]
  %v89 = vld [vmem:[%s1 + $0xdc] sm:$0xf]
  %v90 = vld [vmem:[%s1 + $0xe0] sm:$0xf]
  %v91 = vld [vmem:[%s1 + $0xe4] sm:$0xf]
  %v92 = vld [vmem:[%s1 + $0xe8] sm:$0xf]
  %v93 = vld [vmem:[%s1 + $0xec] sm:$0xf]
  %v94 = vld [vmem:[%s1 + $0xf0] sm:$0xf]
  %v95 = vld [vmem:[%s1 + $0xf4] sm:$0xf]
  %v96 = vld [vmem:[%s1 + $0xf8] sm:$0xf]
  %v97 = vld [vmem:[%s1 + $0xfc] sm:$0xf]
  %v98 = vld [vmem:[%s1 + $0x100] sm:$0xf]
  %v99 = vld [vmem:[%s1 + $0x104] sm:$0xf]
  %v100 = vld [vmem:[%s1 + $0x108] sm:$0xf]
  %v101 = vld [vmem:[%s1 + $0x10c] sm:$0xf]
  %v102 = vld [vmem:[%s1 + $0x110] sm:$0xf]
  %v103 = vld [vmem:[%s1 + $0x114] sm:$0xf]
  %v104 = vld [vmem:[%s1 + $0x118] sm:$0xf]
  %v105 = vld [vmem:[%s1 + $0x11c] sm:$0xf]
  %v106 = vld [vmem:[%s1 + $0x120] sm:$0xf]
  %v107 = vld [vmem:[%s1 + $0x124] sm:$0xf]
  %v108 = vld [vmem:[%s1 + $0x128] sm:$0xf]
  %v109 = vld [vmem:[%s1 + $0x12c] sm:$0xf]
  %v110 = vld [vmem:[%s1 + $0x130] sm:$0xf]
  %v111 = vld [vmem:[%s1 + $0x134] sm:$0xf]
  %v112 = vld [vmem:[%s1 + $0x138] sm:$0xf]
  %v113 = vld [vmem:[%s1 + $0x13c] sm:$0xf]
  %v114 = vld [vmem:[%s1 + $0x140] sm:$0xf]
  %v115 = vld [vmem:[%s1 + $0x144] sm:$0xf]
  %v116 = vld [vmem:[%s1 + $0x148] sm:$0xf]
  %v117 = vld [vmem:[%s1 + $0x14c] sm:$0xf]
  %v118 = vld [vmem:[%s1 + $0x150] sm:$0xf]
  %v119 = vld [vmem:[%s1 + $0x154] sm:$0xf]
  %v120 = vld [vmem:[%s1 + $0x158] sm:$0xf]
  %v121 = vld [vmem:[%s1 + $0x15c] sm:$0xf]
  %v122 = vld [vmem:[%s1 + $0x160] sm:$0xf]
  %v123 = vld [vmem:[%s1 + $0x164] sm:$0xf]
  %v124 = vld [vmem:[%s1 + $0x168] sm:$0xf]
  %v125 = vld [vmem:[%s1 + $0x16c] sm:$0xf]
  %v126 = vld [vmem:[%s1 + $0x170] sm:$0xf]
  %v127 = vld [vmem:[%s1 + $0x174] sm:$0xf]
  %v128 = vld [vmem:[%s1 + $0x178] sm:$0xf]
  %v129 = vld [vmem:[%s1 + $0x17c] sm:$0xf]
  %v130 = vld [vmem:[%s1 + $0x180] sm:$0xf]
  %v131 = vld [vmem:[%s1 + $0x184] sm:$0xf]
  %v132 = vld [vmem:[%s1 + $0x188] sm:$0xf]
  %v133 = vld [vmem:[%s1 + $0x18c] sm:$0xf]
  %v134 = vld [vmem:[%s1 + $0x190] sm:$0xf]
  %v135 = vld [vmem:[%s1 + $0x194] sm:$0xf]
  %v136 = vld [vmem:[%s1 + $0x198] sm:$0xf]
  %v137 = vld [vmem:[%s1 + $0x19c] sm:$0xf]
  %v138 = vld [vmem:[%s1 + $0x1a0] sm:$0xf]
  %v139 = vld [vmem:[%s1 + $0x1a4] sm:$0xf]
  %v140 = vld [vmem:[%s1 + $0x1a8] sm:$0xf]
  %v141 = vld [vmem:[%s1 + $0x1ac] sm:$0xf]
  %v142 = vld [vmem:[%s1 + $0x1b0] sm:$0xf]
  %v143 = vld [vmem:[%s1 + $0x1b4] sm:$0xf]
  %v144 = vld [vmem:[%s1 + $0x1b8] sm:$0xf]
  %v145 = vld [vmem:[%s1 + $0x1bc] sm:$0xf]
  %v146 = vld [vmem:[%s1 + $0x1c0] sm:$0xf]
  %v147 = vld [vmem:[%s1 + $0x1c4] sm:$0xf]
  %v148 = vld [vmem:[%s1 + $0x1c8] sm:$0xf]
  %v149 = vld [vmem:[%s1 + $0x1cc] sm:$0xf]
  %v150 = vld [vmem:[%s1 + $0x1d0] sm:$0xf]
  %v151 = vld [vmem:[%s1 + $0x1d4] sm:$0xf]
  %v152 = vld [vmem:[%s1 + $0x1d8] sm:$0xf]
  %v153 = vld [vmem:[%s1 + $0x1dc] sm:$0xf]
  %v154 = vld [vmem:[%s1 + $0x1e0] sm:$0xf]
  %v155 = vld [vmem:[%s1 + $0x1e4] sm:$0xf]
  %v156 = vld [vmem:[%s1 + $0x1e8] sm:$0xf]
  %v157 = vld [vmem:[%s1 + $0x1ec] sm:$0xf]
  %v158 = vld [vmem:[%s1 + $0x1f0] sm:$0xf]
  %v159 = vld [vmem:[%s1 + $0x1f4] sm:$0xf]
  %v160 = vld [vmem:[%s1 + $0x1f8] sm:$0xf]
  %v161 = vld [vmem:[%s1 + $0x1fc] sm:$0xf]
  %v178 = vunpack.c.l.b16 %v18
  %v179 = vunpack.c.h.b16 %v18
  %v180 = vunpack.c.l.b16 %v19
  %v181 = vunpack.c.h.b16 %v19
  %v182 = vunpack.c.l.b16 %v20
  %v183 = vunpack.c.h.b16 %v20
  %v184 = vunpack.c.l.b16 %v21
  %v185 = vunpack.c.h.b16 %v21
  %v186 = vunpack.c.l.b16 %v22
  %v187 = vunpack.c.h.b16 %v22
  %v188 = vunpack.c.l.b16 %v23
  %v189 = vunpack.c.h.b16 %v23
  %v190 = vunpack.c.l.b16 %v24
  %v191 = vunpack.c.h.b16 %v24
  %v192 = vunpack.c.l.b16 %v25
  %v193 = vunpack.c.h.b16 %v25
  %v194 = vunpack.c.l.b16 %v26
  %v195 = vunpack.c.h.b16 %v26
  %v196 = vunpack.c.l.b16 %v27
  %v197 = vunpack.c.h.b16 %v27
  %v198 = vunpack.c.l.b16 %v28
  %v199 = vunpack.c.h.b16 %v28
  %v200 = vunpack.c.l.b16 %v29
  %v201 = vunpack.c.h.b16 %v29
  %v202 = vunpack.c.l.b16 %v30
  %v203 = vunpack.c.h.b16 %v30
  %v204 = vunpack.c.l.b16 %v31
  %v205 = vunpack.c.h.b16 %v31
  %v206 = vunpack.c.l.b16 %v32
  %v207 = vunpack.c.h.b16 %v32
  %v208 = vunpack.c.l.b16 %v33
  %v209 = vunpack.c.h.b16 %v33
  %v210 = vpack.c.b16 %v186, %v178
  %v211 = vpack.c.b16 %v187, %v179
  %v212 = vpack.c.b16 %v188, %v180
  %v213 = vpack.c.b16 %v189, %v181
  %v214 = vpack.c.b16 %v190, %v182
  %v215 = vpack.c.b16 %v191, %v183
  %v216 = vpack.c.b16 %v192, %v184
  %v217 = vpack.c.b16 %v193, %v185
  %v218 = vpack.c.b16 %v202, %v194
  %v219 = vpack.c.b16 %v203, %v195
  %v220 = vpack.c.b16 %v204, %v196
  %v221 = vpack.c.b16 %v205, %v197
  %v222 = vpack.c.b16 %v206, %v198
  %v223 = vpack.c.b16 %v207, %v199
  %v224 = vpack.c.b16 %v208, %v200
  %v225 = vpack.c.b16 %v209, %v201
  %v370 = vunpack.c.l.b16 %v34
  %v371 = vunpack.c.l.b16 %v35
  %v372 = vunpack.c.l.b16 %v36
  %v373 = vunpack.c.l.b16 %v37
  %v374 = vunpack.c.l.b16 %v38
  %v375 = vunpack.c.l.b16 %v39
  %v376 = vunpack.c.l.b16 %v40
  %v377 = vunpack.c.l.b16 %v41
  %v378 = vunpack.c.l.b16 %v42
  %v379 = vunpack.c.l.b16 %v43
  %v380 = vunpack.c.l.b16 %v44
  %v381 = vunpack.c.l.b16 %v45
  %v382 = vunpack.c.l.b16 %v46
  %v383 = vunpack.c.l.b16 %v47
  %v384 = vunpack.c.l.b16 %v48
  %v385 = vunpack.c.l.b16 %v49
  %v386 = vunpack.c.l.b16 %v50
  %v387 = vunpack.c.l.b16 %v51
  %v388 = vunpack.c.l.b16 %v52
  %v389 = vunpack.c.l.b16 %v53
  %v390 = vunpack.c.l.b16 %v54
  %v391 = vunpack.c.l.b16 %v55
  %v392 = vunpack.c.l.b16 %v56
  %v393 = vunpack.c.l.b16 %v57
  %v394 = vunpack.c.l.b16 %v58
  %v395 = vunpack.c.l.b16 %v59
  %v396 = vunpack.c.l.b16 %v60
  %v397 = vunpack.c.l.b16 %v61
  %v398 = vunpack.c.l.b16 %v62
  %v399 = vunpack.c.l.b16 %v63
  %v400 = vunpack.c.l.b16 %v64
  %v401 = vunpack.c.l.b16 %v65
  %v402 = vunpack.c.l.b16 %v66
  %v403 = vunpack.c.l.b16 %v67
  %v404 = vunpack.c.l.b16 %v68
  %v405 = vunpack.c.l.b16 %v69
  %v406 = vunpack.c.l.b16 %v70
  %v407 = vunpack.c.l.b16 %v71
  %v408 = vunpack.c.l.b16 %v72
  %v409 = vunpack.c.l.b16 %v73
  %v410 = vunpack.c.l.b16 %v74
  %v411 = vunpack.c.l.b16 %v75
  %v412 = vunpack.c.l.b16 %v76
  %v413 = vunpack.c.l.b16 %v77
  %v414 = vunpack.c.l.b16 %v78
  %v415 = vunpack.c.l.b16 %v79
  %v416 = vunpack.c.l.b16 %v80
  %v417 = vunpack.c.l.b16 %v81
  %v418 = vunpack.c.l.b16 %v82
  %v419 = vunpack.c.l.b16 %v83
  %v420 = vunpack.c.l.b16 %v84
  %v421 = vunpack.c.l.b16 %v85
  %v422 = vunpack.c.l.b16 %v86
  %v423 = vunpack.c.l.b16 %v87
  %v424 = vunpack.c.l.b16 %v88
  %v425 = vunpack.c.l.b16 %v89
  %v426 = vunpack.c.l.b16 %v90
  %v427 = vunpack.c.l.b16 %v91
  %v428 = vunpack.c.l.b16 %v92
  %v429 = vunpack.c.l.b16 %v93
  %v430 = vunpack.c.l.b16 %v94
  %v431 = vunpack.c.l.b16 %v95
  %v432 = vunpack.c.l.b16 %v96
  %v433 = vunpack.c.l.b16 %v97
  %v434 = vunpack.c.l.b16 %v98
  %v435 = vunpack.c.l.b16 %v99
  %v436 = vunpack.c.l.b16 %v100
  %v437 = vunpack.c.l.b16 %v101
  %v438 = vunpack.c.l.b16 %v102
  %v439 = vunpack.c.l.b16 %v103
  %v440 = vunpack.c.l.b16 %v104
  %v441 = vunpack.c.l.b16 %v105
  %v442 = vunpack.c.l.b16 %v106
  %v443 = vunpack.c.l.b16 %v107
  %v444 = vunpack.c.l.b16 %v108
  %v445 = vunpack.c.l.b16 %v109
  %v446 = vunpack.c.l.b16 %v110
  %v447 = vunpack.c.l.b16 %v111
  %v448 = vunpack.c.l.b16 %v112
  %v449 = vunpack.c.l.b16 %v113
  %v450 = vunpack.c.l.b16 %v114
  %v451 = vunpack.c.l.b16 %v115
  %v452 = vunpack.c.l.b16 %v116
  %v453 = vunpack.c.l.b16 %v117
  %v454 = vunpack.c.l.b16 %v118
  %v455 = vunpack.c.l.b16 %v119
  %v456 = vunpack.c.l.b16 %v120
  %v457 = vunpack.c.l.b16 %v121
  %v458 = vunpack.c.l.b16 %v122
  %v459 = vunpack.c.l.b16 %v123
  %v460 = vunpack.c.l.b16 %v124
  %v461 = vunpack.c.l.b16 %v125
  %v462 = vunpack.c.l.b16 %v126
  %v463 = vunpack.c.l.b16 %v127
  %v464 = vunpack.c.l.b16 %v128
  %v465 = vunpack.c.l.b16 %v129
  %v466 = vunpack.c.l.b16 %v130
  %v467 = vunpack.c.l.b16 %v131
  %v468 = vunpack.c.l.b16 %v132
  %v469 = vunpack.c.l.b16 %v133
  %v470 = vunpack.c.l.b16 %v134
  %v471 = vunpack.c.l.b16 %v135
  %v472 = vunpack.c.l.b16 %v136
  %v473 = vunpack.c.l.b16 %v137
  %v474 = vunpack.c.l.b16 %v138
  %v475 = vunpack.c.l.b16 %v139
  %v476 = vunpack.c.l.b16 %v140
  %v477 = vunpack.c.l.b16 %v141
  %v478 = vunpack.c.l.b16 %v142
  %v479 = vunpack.c.l.b16 %v143
  %v480 = vunpack.c.l.b16 %v144
  %v481 = vunpack.c.l.b16 %v145
  %v482 = vunpack.c.l.b16 %v146
  %v483 = vunpack.c.l.b16 %v147
  %v484 = vunpack.c.l.b16 %v148
  %v485 = vunpack.c.l.b16 %v149
  %v486 = vunpack.c.l.b16 %v150
  %v487 = vunpack.c.l.b16 %v151
  %v488 = vunpack.c.l.b16 %v152
  %v489 = vunpack.c.l.b16 %v153
  %v490 = vunpack.c.l.b16 %v154
  %v491 = vunpack.c.l.b16 %v155
  %v492 = vunpack.c.l.b16 %v156
  %v493 = vunpack.c.l.b16 %v157
  %v494 = vunpack.c.l.b16 %v158
  %v495 = vunpack.c.l.b16 %v159
  %v496 = vunpack.c.l.b16 %v160
  %v497 = vunpack.c.l.b16 %v161
  %v498 = vpack.c.b16 %v371, %v370
  %v499 = vpack.c.b16 %v373, %v372
  %v500 = vpack.c.b16 %v375, %v374
  %v501 = vpack.c.b16 %v377, %v376
  %v502 = vpack.c.b16 %v379, %v378
  %v503 = vpack.c.b16 %v381, %v380
  %v504 = vpack.c.b16 %v383, %v382
  %v505 = vpack.c.b16 %v385, %v384
  %v506 = vpack.c.b16 %v387, %v386
  %v507 = vpack.c.b16 %v389, %v388
  %v508 = vpack.c.b16 %v391, %v390
  %v509 = vpack.c.b16 %v393, %v392
  %v510 = vpack.c.b16 %v395, %v394
  %v511 = vpack.c.b16 %v397, %v396
  %v512 = vpack.c.b16 %v399, %v398
  %v513 = vpack.c.b16 %v401, %v400
  %v514 = vpack.c.b16 %v403, %v402
  %v515 = vpack.c.b16 %v405, %v404
  %v516 = vpack.c.b16 %v407, %v406
  %v517 = vpack.c.b16 %v409, %v408
  %v518 = vpack.c.b16 %v411, %v410
  %v519 = vpack.c.b16 %v413, %v412
  %v520 = vpack.c.b16 %v415, %v414
  %v521 = vpack.c.b16 %v417, %v416
  %v522 = vpack.c.b16 %v419, %v418
  %v523 = vpack.c.b16 %v421, %v420
  %v524 = vpack.c.b16 %v423, %v422
  %v525 = vpack.c.b16 %v425, %v424
  %v526 = vpack.c.b16 %v427, %v426
  %v527 = vpack.c.b16 %v429, %v428
  %v528 = vpack.c.b16 %v431, %v430
  %v529 = vpack.c.b16 %v433, %v432
  %v530 = vpack.c.b16 %v435, %v434
  %v531 = vpack.c.b16 %v437, %v436
  %v532 = vpack.c.b16 %v439, %v438
  %v533 = vpack.c.b16 %v441, %v440
  %v534 = vpack.c.b16 %v443, %v442
  %v535 = vpack.c.b16 %v445, %v444
  %v536 = vpack.c.b16 %v447, %v446
  %v537 = vpack.c.b16 %v449, %v448
  %v538 = vpack.c.b16 %v451, %v450
  %v539 = vpack.c.b16 %v453, %v452
  %v540 = vpack.c.b16 %v455, %v454
  %v541 = vpack.c.b16 %v457, %v456
  %v542 = vpack.c.b16 %v459, %v458
  %v543 = vpack.c.b16 %v461, %v460
  %v544 = vpack.c.b16 %v463, %v462
  %v545 = vpack.c.b16 %v465, %v464
  %v546 = vpack.c.b16 %v467, %v466
  %v547 = vpack.c.b16 %v469, %v468
  %v548 = vpack.c.b16 %v471, %v470
  %v549 = vpack.c.b16 %v473, %v472
  %v550 = vpack.c.b16 %v475, %v474
  %v551 = vpack.c.b16 %v477, %v476
  %v552 = vpack.c.b16 %v479, %v478
  %v553 = vpack.c.b16 %v481, %v480
  %v554 = vpack.c.b16 %v483, %v482
  %v555 = vpack.c.b16 %v485, %v484
  %v556 = vpack.c.b16 %v487, %v486
  %v557 = vpack.c.b16 %v489, %v488
  %v558 = vpack.c.b16 %v491, %v490
  %v559 = vpack.c.b16 %v493, %v492
  %v560 = vpack.c.b16 %v495, %v494
  %v561 = vpack.c.b16 %v497, %v496
  %626 = vmatprep.subr.bf16.mxu0 0
  %627 = vmatpush1.bf16.msra.mxu0 %v498
  %628 = vmatprep.subr.bf16.mxu0 0
  %629 = vmatpush1.bf16.msra.mxu0 %v499
  %630 = vmatprep.subr.bf16.mxu0 0
  %631 = vmatpush1.bf16.msra.mxu0 %v500
  %632 = vmatprep.subr.bf16.mxu0 0
  %633 = vmatpush1.bf16.msra.mxu0 %v501
  %634 = vmatprep.subr.bf16.mxu0 0
  %635 = vmatpush1.bf16.msra.mxu0 %v502
  %636 = vmatprep.subr.bf16.mxu0 0
  %637 = vmatpush1.bf16.msra.mxu0 %v503
  %638 = vmatprep.subr.bf16.mxu0 0
  %639 = vmatpush1.bf16.msra.mxu0 %v504
  %640 = vmatprep.subr.bf16.mxu0 0
  %641 = vmatpush1.bf16.msra.mxu0 %v505
  %642 = vmatprep.subr.bf16.mxu0 0
  %643 = vmatpush1.bf16.msra.mxu0 %v506
  %644 = vmatprep.subr.bf16.mxu0 0
  %645 = vmatpush1.bf16.msra.mxu0 %v507
  %646 = vmatprep.subr.bf16.mxu0 0
  %647 = vmatpush1.bf16.msra.mxu0 %v508
  %648 = vmatprep.subr.bf16.mxu0 0
  %649 = vmatpush1.bf16.msra.mxu0 %v509
  %650 = vmatprep.subr.bf16.mxu0 0
  %651 = vmatpush1.bf16.msra.mxu0 %v510
  %652 = vmatprep.subr.bf16.mxu0 0
  %653 = vmatpush1.bf16.msra.mxu0 %v511
  %654 = vmatprep.subr.bf16.mxu0 0
  %655 = vmatpush1.bf16.msra.mxu0 %v512
  %656 = vmatprep.subr.bf16.mxu0 0
  %657 = vmatpush1.bf16.msra.mxu0 %v513
  %658 = vmatprep.mubr.bf16.mxu0 %v211
  %659 = vmatmul.mubr.bf16.gmra.mrb[0].mxu0 %v210
  %v660 = vpop.f32.mrb[0].mxu0
  %v661 = vadd.f32 0.0, %v660
  %v662 = vpop.f32.mrb[0].mxu0
  %v663 = vpop.f32.mrb[0].mxu0
  %v664 = vadd.f32 0.0, %v663
  %v665 = vpop.f32.mrb[0].mxu0
  %666 = vmatprep.mubr.bf16.mxu0 %v219
  %667 = vmatmul.mubr.bf16.gmra.mrb[0].mxu0 %v218
  %v668 = vpop.f32.mrb[0].mxu0
  %v669 = vadd.f32 0.0, %v668
  %v670 = vpop.f32.mrb[0].mxu0
  %v671 = vpop.f32.mrb[0].mxu0
  %v672 = vadd.f32 0.0, %v671
  %v673 = vpop.f32.mrb[0].mxu0
  %674 = vdwg.mxu0
  %675 = vmatprep.subr.bf16.mxu0 0
  %676 = vmatpush1.bf16.msra.mxu0 %v514
  %677 = vmatprep.subr.bf16.mxu0 0
  %678 = vmatpush1.bf16.msra.mxu0 %v515
  %679 = vmatprep.subr.bf16.mxu0 0
  %680 = vmatpush1.bf16.msra.mxu0 %v516
  %681 = vmatprep.subr.bf16.mxu0 0
  %682 = vmatpush1.bf16.msra.mxu0 %v517
  %683 = vmatprep.subr.bf16.mxu0 0
  %684 = vmatpush1.bf16.msra.mxu0 %v518
  %685 = vmatprep.subr.bf16.mxu0 0
  %686 = vmatpush1.bf16.msra.mxu0 %v519
  %687 = vmatprep.subr.bf16.mxu0 0
  %688 = vmatpush1.bf16.msra.mxu0 %v520
  %689 = vmatprep.subr.bf16.mxu0 0
  %690 = vmatpush1.bf16.msra.mxu0 %v521
  %691 = vmatprep.subr.bf16.mxu0 0
  %692 = vmatpush1.bf16.msra.mxu0 %v522
  %693 = vmatprep.subr.bf16.mxu0 0
  %694 = vmatpush1.bf16.msra.mxu0 %v523
  %695 = vmatprep.subr.bf16.mxu0 0
  %696 = vmatpush1.bf16.msra.mxu0 %v524
  %697 = vmatprep.subr.bf16.mxu0 0
  %698 = vmatpush1.bf16.msra.mxu0 %v525
  %699 = vmatprep.subr.bf16.mxu0 0
  %700 = vmatpush1.bf16.msra.mxu0 %v526
  %701 = vmatprep.subr.bf16.mxu0 0
  %702 = vmatpush1.bf16.msra.mxu0 %v527
  %703 = vmatprep.subr.bf16.mxu0 0
  %704 = vmatpush1.bf16.msra.mxu0 %v528
  %705 = vmatprep.subr.bf16.mxu0 0
  %706 = vmatpush1.bf16.msra.mxu0 %v529
  %707 = vmatprep.mubr.bf16.mxu0 %v213
  %708 = vmatmul.mubr.bf16.gmra.mrb[0].mxu0 %v212
  %v709 = vpop.f32.mrb[0].mxu0
  %v710 = vadd.f32 %v661, %v709
  %v711 = vpop.f32.mrb[0].mxu0
  %v712 = vpop.f32.mrb[0].mxu0
  %v713 = vadd.f32 %v664, %v712
  %v714 = vpop.f32.mrb[0].mxu0
  %715 = vmatprep.mubr.bf16.mxu0 %v221
  %716 = vmatmul.mubr.bf16.gmra.mrb[0].mxu0 %v220
  %v717 = vpop.f32.mrb[0].mxu0
  %v718 = vadd.f32 %v669, %v717
  %v719 = vpop.f32.mrb[0].mxu0
  %v720 = vpop.f32.mrb[0].mxu0
  %v721 = vadd.f32 %v672, %v720
  %v722 = vpop.f32.mrb[0].mxu0
  %723 = vdwg.mxu0
  %724 = vmatprep.subr.bf16.mxu0 0
  %725 = vmatpush1.bf16.msra.mxu0 %v530
  %726 = vmatprep.subr.bf16.mxu0 0
  %727 = vmatpush1.bf16.msra.mxu0 %v531
  %728 = vmatprep.subr.bf16.mxu0 0
  %729 = vmatpush1.bf16.msra.mxu0 %v532
  %730 = vmatprep.subr.bf16.mxu0 0
  %731 = vmatpush1.bf16.msra.mxu0 %v533
  %732 = vmatprep.subr.bf16.mxu0 0
  %733 = vmatpush1.bf16.msra.mxu0 %v534
  %734 = vmatprep.subr.bf16.mxu0 0
  %735 = vmatpush1.bf16.msra.mxu0 %v535
  %736 = vmatprep.subr.bf16.mxu0 0
  %737 = vmatpush1.bf16.msra.mxu0 %v536
  %738 = vmatprep.subr.bf16.mxu0 0
  %739 = vmatpush1.bf16.msra.mxu0 %v537
  %740 = vmatprep.subr.bf16.mxu0 0
  %741 = vmatpush1.bf16.msra.mxu0 %v538
  %742 = vmatprep.subr.bf16.mxu0 0
  %743 = vmatpush1.bf16.msra.mxu0 %v539
  %744 = vmatprep.subr.bf16.mxu0 0
  %745 = vmatpush1.bf16.msra.mxu0 %v540
  %746 = vmatprep.subr.bf16.mxu0 0
  %747 = vmatpush1.bf16.msra.mxu0 %v541
  %748 = vmatprep.subr.bf16.mxu0 0
  %749 = vmatpush1.bf16.msra.mxu0 %v542
  %750 = vmatprep.subr.bf16.mxu0 0
  %751 = vmatpush1.bf16.msra.mxu0 %v543
  %752 = vmatprep.subr.bf16.mxu0 0
  %753 = vmatpush1.bf16.msra.mxu0 %v544
  %754 = vmatprep.subr.bf16.mxu0 0
  %755 = vmatpush1.bf16.msra.mxu0 %v545
  %756 = vmatprep.mubr.bf16.mxu0 %v215
  %757 = vmatmul.mubr.bf16.gmra.mrb[0].mxu0 %v214
  %v758 = vpop.f32.mrb[0].mxu0
  %v759 = vadd.f32 %v710, %v758
  %v760 = vpop.f32.mrb[0].mxu0
  %v761 = vpop.f32.mrb[0].mxu0
  %v762 = vadd.f32 %v713, %v761
  %v763 = vpop.f32.mrb[0].mxu0
  %764 = vmatprep.mubr.bf16.mxu0 %v223
  %765 = vmatmul.mubr.bf16.gmra.mrb[0].mxu0 %v222
  %v766 = vpop.f32.mrb[0].mxu0
  %v767 = vadd.f32 %v718, %v766
  %v768 = vpop.f32.mrb[0].mxu0
  %v769 = vpop.f32.mrb[0].mxu0
  %v770 = vadd.f32 %v721, %v769
  %v771 = vpop.f32.mrb[0].mxu0
  %772 = vdwg.mxu0
  %773 = vmatprep.subr.bf16.mxu0 0
  %774 = vmatpush1.bf16.msra.mxu0 %v546
  %775 = vmatprep.subr.bf16.mxu0 0
  %776 = vmatpush1.bf16.msra.mxu0 %v547
  %777 = vmatprep.subr.bf16.mxu0 0
  %778 = vmatpush1.bf16.msra.mxu0 %v548
  %779 = vmatprep.subr.bf16.mxu0 0
  %780 = vmatpush1.bf16.msra.mxu0 %v549
  %781 = vmatprep.subr.bf16.mxu0 0
  %782 = vmatpush1.bf16.msra.mxu0 %v550
  %783 = vmatprep.subr.bf16.mxu0 0
  %784 = vmatpush1.bf16.msra.mxu0 %v551
  %785 = vmatprep.subr.bf16.mxu0 0
  %786 = vmatpush1.bf16.msra.mxu0 %v552
  %787 = vmatprep.subr.bf16.mxu0 0
  %788 = vmatpush1.bf16.msra.mxu0 %v553
  %789 = vmatprep.subr.bf16.mxu0 0
  %790 = vmatpush1.bf16.msra.mxu0 %v554
  %791 = vmatprep.subr.bf16.mxu0 0
  %792 = vmatpush1.bf16.msra.mxu0 %v555
  %793 = vmatprep.subr.bf16.mxu0 0
  %794 = vmatpush1.bf16.msra.mxu0 %v556
  %795 = vmatprep.subr.bf16.mxu0 0
  %796 = vmatpush1.bf16.msra.mxu0 %v557
  %797 = vmatprep.subr.bf16.mxu0 0
  %798 = vmatpush1.bf16.msra.mxu0 %v558
  %799 = vmatprep.subr.bf16.mxu0 0
  %800 = vmatpush1.bf16.msra.mxu0 %v559
  %801 = vmatprep.subr.bf16.mxu0 0
  %802 = vmatpush1.bf16.msra.mxu0 %v560
  %803 = vmatprep.subr.bf16.mxu0 0
  %804 = vmatpush1.bf16.msra.mxu0 %v561
  %805 = vmatprep.mubr.bf16.mxu0 %v217
  %806 = vmatmul.mubr.bf16.gmra.mrb[0].mxu0 %v216
  %v807 = vpop.f32.mrb[0].mxu0
  %v808 = vadd.f32 %v759, %v807
  %v809 = vpop.f32.mrb[0].mxu0
  %v810 = vpop.f32.mrb[0].mxu0
  %v811 = vadd.f32 %v762, %v810
  %v812 = vpop.f32.mrb[0].mxu0
  %813 = vmatprep.mubr.bf16.mxu0 %v225
  %814 = vmatmul.mubr.bf16.gmra.mrb[0].mxu0 %v224
  %v815 = vpop.f32.mrb[0].mxu0
  %v816 = vadd.f32 %v767, %v815
  %v817 = vpop.f32.mrb[0].mxu0
  %v818 = vpop.f32.mrb[0].mxu0
  %v819 = vadd.f32 %v770, %v818
  %v820 = vpop.f32.mrb[0].mxu0
  %821 = vdwg.mxu0
  %v822 = vadd.f32 %v808, %v811
  %v823 = vadd.f32 %v822, %v816
  %v824 = vadd.f32 %v823, %v819
  %v825 = vrot.slane %v824, 4
  %v826 = vadd.f32 %v824, %v825
  %v827 = vrot.slane %v826, 2
  %v828 = vadd.f32 %v826, %v827
  %v829 = vrot.slane %v828, 1
  %v830 = vadd.f32 %v828, %v829
  %v831 = vmul.f32 %v830, 0.03125
  %v832 = vmul.f32 %v808, %v808
  %v833 = vmul.f32 %v811, %v811
  %v834 = vmul.f32 %v816, %v816
  %v835 = vmul.f32 %v819, %v819
  %v836 = vadd.f32 %v832, %v833
  %v837 = vadd.f32 %v836, %v834
  %v838 = vadd.f32 %v837, %v835
  %v839 = vrot.slane %v838, 4
  %v840 = vadd.f32 %v838, %v839
  %v841 = vrot.slane %v840, 2
  %v842 = vadd.f32 %v840, %v841
  %v843 = vrot.slane %v842, 1
  %v844 = vadd.f32 %v842, %v843
  %v845 = vmul.f32 %v844, 0.03125
  %v846 = vmul.f32 %v831, %v831
  %v847 = vsub.f32 %v845, %v846
  %v848 = vld [vmem:[%s2] sm:$0x1]
  %v849 = vadd.f32 %v847, 1e-05
  %v850 = vrsqrt.pop %v849
  %v851 = vmul.f32 %v848, %v850
  %v852 = vld [vmem:[%s3] sm:$0x1]
  %v853 = vmul.f32 %v831, %v851
  %v854 = vsub.f32 %v852, %v853
  %v856 = vlaneseq
  %v857 = vshrl.u32 %v856, 7
  %v858 = vsub.s32 0, %v857
  %v859 = vrot.slane %v851, %v858
  %v861 = vmul.f32 %v808, %v859
  %v862 = vmul.f32 %v811, %v859
  %v863 = vmul.f32 %v816, %v859
  %v864 = vmul.f32 %v819, %v859
  %v866 = vlaneseq
  %v867 = vshrl.u32 %v866, 7
  %v868 = vsub.s32 0, %v867
  %v869 = vrot.slane %v854, %v868
  %v871 = vadd.f32 %v861, %v869
  %v872 = vadd.f32 %v862, %v869
  %v873 = vadd.f32 %v863, %v869
  %v874 = vadd.f32 %v864, %v869
  %v875 = vmul.f32 %v871, 0.2
  %v876 = vmul.f32 %v872, 0.2
  %v877 = vmul.f32 %v873, 0.2
  %v878 = vmul.f32 %v874, 0.2
  %v879 = vmax.f32 %v871, %v875
  %v880 = vmax.f32 %v872, %v876
  %v881 = vmax.f32 %v873, %v877
  %v882 = vmax.f32 %v874, %v878
  %v883 = vpack.c.bf16 %v880, %v879
  %v884 = vpack.c.bf16 %v882, %v881
  %v887 = vunpack.c.l.b16 %v883
  %v888 = vunpack.c.h.b16 %v883
  %v889 = vunpack.c.l.b16 %v884
  %v890 = vunpack.c.h.b16 %v884
  %v891 = vpack.c.b16 %v887, %v887
  %v892 = vpack.c.b16 %v888, %v888
  %v893 = vpack.c.b16 %v889, %v889
  %v894 = vpack.c.b16 %v890, %v890
  %899 = vst [vmem:[%s4] sm:$0xf] %v891
  %900 = vst [vmem:[%s4 + $0x4] sm:$0xf] %v892
  %901 = vst [vmem:[%s4 + $0x8] sm:$0xf] %v893
  %902 = vst [vmem:[%s4 + $0xc] sm:$0xf] %v894
  // Predicated region
  $region18: #{discriminator_forward.8} parent=0 // pred_check
    _
  $region19: #{discriminator_forward.8} parent=0 // pred_check_branch
    %904 = sbr.rel (0) target = $region21
  $region20: #{discriminator_forward.8} parent=0 // pred_region
    _
  $region21: #{discriminator_forward.8} parent=0 // pred_fallthru
    _
  // Predicated region
  $region22: #{discriminator_forward.8} parent=0 // pred_check
    _
  $region23: #{discriminator_forward.8} parent=0 // pred_check_branch
    %906 = sbr.rel (0) target = $region25
  $region24: #{discriminator_forward.8} parent=0 // pred_region
    _
  $region25: #{discriminator_forward.8} parent=0 // pred_fallthru
    _

// kernel: discriminator_forward.9
$region0: #{discriminator_forward.9}
  #allocation0 [shape = 'u32[]', space=smem, size = 0x4, offset = 0x4, fixed_abs, tag = 'smem constant byte address 0x4 - core index']
  #allocation1 [shape = 'u32[144,128]{1,0:T(1,128)}', space=vmem, size = 0x12000, scoped, tag = 'internal scratch']
  %s0 = inlined_call_operand.vmem [shape: bf16[2,2048], index: 0, kind: input, shape index: {}]
  %s1 = inlined_call_operand.vmem [shape: bf16[2048,128], index: 1, kind: input, shape index: {}]
  %s2 = inlined_call_operand.vmem [shape: f32[2,128], index: 2, kind: output, shape index: {}]
  %s3 = sld [smem:[#allocation0]]
  $region18: #{discriminator_forward.9} parent=0
    _
  %s5 = ssub.s32 1, %s3
  %s6 = scalar_select 0, %s5, %s3
  // Predicated region
  $region2: #{discriminator_forward.9} parent=0 // pred_check
    _
  $region3: #{discriminator_forward.9} parent=0 // pred_check_branch
    %8 = sbr.rel (0) target = $region5
  $region4: #{discriminator_forward.9} parent=0 // pred_region
    _
  $region5: #{discriminator_forward.9} parent=0 // pred_fallthru
    _
  // Predicated region
  $region6: #{discriminator_forward.9} parent=0 // pred_check
    _
  $region7: #{discriminator_forward.9} parent=0 // pred_check_branch
    %10 = sbr.rel (0) target = $region9
  $region8: #{discriminator_forward.9} parent=0 // pred_region
    _
  $region9: #{discriminator_forward.9} parent=0 // pred_fallthru
    _
  %v12 = vld [vmem:[%s0] sm:$0xff]
  %v13 = vld [vmem:[%s0 + $0x8] sm:$0xff]
  %v14 = vld [vmem:[%s1] sm:$0xf]
  %v15 = vld [vmem:[%s1 + $0x4] sm:$0xf]
  %v16 = vld [vmem:[%s1 + $0x8] sm:$0xf]
  %v17 = vld [vmem:[%s1 + $0xc] sm:$0xf]
  %v18 = vld [vmem:[%s1 + $0x10] sm:$0xf]
  %v19 = vld [vmem:[%s1 + $0x14] sm:$0xf]
  %v20 = vld [vmem:[%s1 + $0x18] sm:$0xf]
  %v21 = vld [vmem:[%s1 + $0x1c] sm:$0xf]
  %v22 = vld [vmem:[%s1 + $0x20] sm:$0xf]
  %v23 = vld [vmem:[%s1 + $0x24] sm:$0xf]
  %v24 = vld [vmem:[%s1 + $0x28] sm:$0xf]
  %v25 = vld [vmem:[%s1 + $0x2c] sm:$0xf]
  %v26 = vld [vmem:[%s1 + $0x30] sm:$0xf]
  %v27 = vld [vmem:[%s1 + $0x34] sm:$0xf]
  %v28 = vld [vmem:[%s1 + $0x38] sm:$0xf]
  %v29 = vld [vmem:[%s1 + $0x3c] sm:$0xf]
  %v30 = vld [vmem:[%s1 + $0x40] sm:$0xf]
  %v31 = vld [vmem:[%s1 + $0x44] sm:$0xf]
  %v32 = vld [vmem:[%s1 + $0x48] sm:$0xf]
  %v33 = vld [vmem:[%s1 + $0x4c] sm:$0xf]
  %v34 = vld [vmem:[%s1 + $0x50] sm:$0xf]
  %v35 = vld [vmem:[%s1 + $0x54] sm:$0xf]
  %v36 = vld [vmem:[%s1 + $0x58] sm:$0xf]
  %v37 = vld [vmem:[%s1 + $0x5c] sm:$0xf]
  %v38 = vld [vmem:[%s1 + $0x60] sm:$0xf]
  %v39 = vld [vmem:[%s1 + $0x64] sm:$0xf]
  %v40 = vld [vmem:[%s1 + $0x68] sm:$0xf]
  %v41 = vld [vmem:[%s1 + $0x6c] sm:$0xf]
  %v42 = vld [vmem:[%s1 + $0x70] sm:$0xf]
  %v43 = vld [vmem:[%s1 + $0x74] sm:$0xf]
  %v44 = vld [vmem:[%s1 + $0x78] sm:$0xf]
  %v45 = vld [vmem:[%s1 + $0x7c] sm:$0xf]
  %v46 = vld [vmem:[%s1 + $0x80] sm:$0xf]
  %v47 = vld [vmem:[%s1 + $0x84] sm:$0xf]
  %v48 = vld [vmem:[%s1 + $0x88] sm:$0xf]
  %v49 = vld [vmem:[%s1 + $0x8c] sm:$0xf]
  %v50 = vld [vmem:[%s1 + $0x90] sm:$0xf]
  %v51 = vld [vmem:[%s1 + $0x94] sm:$0xf]
  %v52 = vld [vmem:[%s1 + $0x98] sm:$0xf]
  %v53 = vld [vmem:[%s1 + $0x9c] sm:$0xf]
  %v54 = vld [vmem:[%s1 + $0xa0] sm:$0xf]
  %v55 = vld [vmem:[%s1 + $0xa4] sm:$0xf]
  %v56 = vld [vmem:[%s1 + $0xa8] sm:$0xf]
  %v57 = vld [vmem:[%s1 + $0xac] sm:$0xf]
  %v58 = vld [vmem:[%s1 + $0xb0] sm:$0xf]
  %v59 = vld [vmem:[%s1 + $0xb4] sm:$0xf]
  %v60 = vld [vmem:[%s1 + $0xb8] sm:$0xf]
  %v61 = vld [vmem:[%s1 + $0xbc] sm:$0xf]
  %v62 = vld [vmem:[%s1 + $0xc0] sm:$0xf]
  %v63 = vld [vmem:[%s1 + $0xc4] sm:$0xf]
  %v64 = vld [vmem:[%s1 + $0xc8] sm:$0xf]
  %v65 = vld [vmem:[%s1 + $0xcc] sm:$0xf]
  %v66 = vld [vmem:[%s1 + $0xd0] sm:$0xf]
  %v67 = vld [vmem:[%s1 + $0xd4] sm:$0xf]
  %v68 = vld [vmem:[%s1 + $0xd8] sm:$0xf]
  %v69 = vld [vmem:[%s1 + $0xdc] sm:$0xf]
  %v70 = vld [vmem:[%s1 + $0xe0] sm:$0xf]
  %v71 = vld [vmem:[%s1 + $0xe4] sm:$0xf]
  %v72 = vld [vmem:[%s1 + $0xe8] sm:$0xf]
  %v73 = vld [vmem:[%s1 + $0xec] sm:$0xf]
  %v74 = vld [vmem:[%s1 + $0xf0] sm:$0xf]
  %v75 = vld [vmem:[%s1 + $0xf4] sm:$0xf]
  %v76 = vld [vmem:[%s1 + $0xf8] sm:$0xf]
  %v77 = vld [vmem:[%s1 + $0xfc] sm:$0xf]
  %v78 = vld [vmem:[%s1 + $0x100] sm:$0xf]
  %v79 = vld [vmem:[%s1 + $0x104] sm:$0xf]
  %v80 = vld [vmem:[%s1 + $0x108] sm:$0xf]
  %v81 = vld [vmem:[%s1 + $0x10c] sm:$0xf]
  %v82 = vld [vmem:[%s1 + $0x110] sm:$0xf]
  %v83 = vld [vmem:[%s1 + $0x114] sm:$0xf]
  %v84 = vld [vmem:[%s1 + $0x118] sm:$0xf]
  %v85 = vld [vmem:[%s1 + $0x11c] sm:$0xf]
  %v86 = vld [vmem:[%s1 + $0x120] sm:$0xf]
  %v87 = vld [vmem:[%s1 + $0x124] sm:$0xf]
  %v88 = vld [vmem:[%s1 + $0x128] sm:$0xf]
  %v89 = vld [vmem:[%s1 + $0x12c] sm:$0xf]
  %v90 = vld [vmem:[%s1 + $0x130] sm:$0xf]
  %v91 = vld [vmem:[%s1 + $0x134] sm:$0xf]
  %v92 = vld [vmem:[%s1 + $0x138] sm:$0xf]
  %v93 = vld [vmem:[%s1 + $0x13c] sm:$0xf]
  %v94 = vld [vmem:[%s1 + $0x140] sm:$0xf]
  %v95 = vld [vmem:[%s1 + $0x144] sm:$0xf]
  %v96 = vld [vmem:[%s1 + $0x148] sm:$0xf]
  %v97 = vld [vmem:[%s1 + $0x14c] sm:$0xf]
  %v98 = vld [vmem:[%s1 + $0x150] sm:$0xf]
  %v99 = vld [vmem:[%s1 + $0x154] sm:$0xf]
  %v100 = vld [vmem:[%s1 + $0x158] sm:$0xf]
  %v101 = vld [vmem:[%s1 + $0x15c] sm:$0xf]
  %v102 = vld [vmem:[%s1 + $0x160] sm:$0xf]
  %v103 = vld [vmem:[%s1 + $0x164] sm:$0xf]
  %v104 = vld [vmem:[%s1 + $0x168] sm:$0xf]
  %v105 = vld [vmem:[%s1 + $0x16c] sm:$0xf]
  %v106 = vld [vmem:[%s1 + $0x170] sm:$0xf]
  %v107 = vld [vmem:[%s1 + $0x174] sm:$0xf]
  %v108 = vld [vmem:[%s1 + $0x178] sm:$0xf]
  %v109 = vld [vmem:[%s1 + $0x17c] sm:$0xf]
  %v110 = vld [vmem:[%s1 + $0x180] sm:$0xf]
  %v111 = vld [vmem:[%s1 + $0x184] sm:$0xf]
  %v112 = vld [vmem:[%s1 + $0x188] sm:$0xf]
  %v113 = vld [vmem:[%s1 + $0x18c] sm:$0xf]
  %v114 = vld [vmem:[%s1 + $0x190] sm:$0xf]
  %v115 = vld [vmem:[%s1 + $0x194] sm:$0xf]
  %v116 = vld [vmem:[%s1 + $0x198] sm:$0xf]
  %v117 = vld [vmem:[%s1 + $0x19c] sm:$0xf]
  %v118 = vld [vmem:[%s1 + $0x1a0] sm:$0xf]
  %v119 = vld [vmem:[%s1 + $0x1a4] sm:$0xf]
  %v120 = vld [vmem:[%s1 + $0x1a8] sm:$0xf]
  %v121 = vld [vmem:[%s1 + $0x1ac] sm:$0xf]
  %v122 = vld [vmem:[%s1 + $0x1b0] sm:$0xf]
  %v123 = vld [vmem:[%s1 + $0x1b4] sm:$0xf]
  %v124 = vld [vmem:[%s1 + $0x1b8] sm:$0xf]
  %v125 = vld [vmem:[%s1 + $0x1bc] sm:$0xf]
  %v126 = vld [vmem:[%s1 + $0x1c0] sm:$0xf]
  %v127 = vld [vmem:[%s1 + $0x1c4] sm:$0xf]
  %v128 = vld [vmem:[%s1 + $0x1c8] sm:$0xf]
  %v129 = vld [vmem:[%s1 + $0x1cc] sm:$0xf]
  %v130 = vld [vmem:[%s1 + $0x1d0] sm:$0xf]
  %v131 = vld [vmem:[%s1 + $0x1d4] sm:$0xf]
  %v132 = vld [vmem:[%s1 + $0x1d8] sm:$0xf]
  %v133 = vld [vmem:[%s1 + $0x1dc] sm:$0xf]
  %v134 = vld [vmem:[%s1 + $0x1e0] sm:$0xf]
  %v135 = vld [vmem:[%s1 + $0x1e4] sm:$0xf]
  %v136 = vld [vmem:[%s1 + $0x1e8] sm:$0xf]
  %v137 = vld [vmem:[%s1 + $0x1ec] sm:$0xf]
  %v138 = vld [vmem:[%s1 + $0x1f0] sm:$0xf]
  %v139 = vld [vmem:[%s1 + $0x1f4] sm:$0xf]
  %v140 = vld [vmem:[%s1 + $0x1f8] sm:$0xf]
  %v141 = vld [vmem:[%s1 + $0x1fc] sm:$0xf]
  %v142 = vld [vmem:[%s1 + $0x200] sm:$0xf]
  %v143 = vld [vmem:[%s1 + $0x204] sm:$0xf]
  %v144 = vld [vmem:[%s1 + $0x208] sm:$0xf]
  %v145 = vld [vmem:[%s1 + $0x20c] sm:$0xf]
  %v146 = vld [vmem:[%s1 + $0x210] sm:$0xf]
  %v147 = vld [vmem:[%s1 + $0x214] sm:$0xf]
  %v148 = vld [vmem:[%s1 + $0x218] sm:$0xf]
  %v149 = vld [vmem:[%s1 + $0x21c] sm:$0xf]
  %v150 = vld [vmem:[%s1 + $0x220] sm:$0xf]
  %v151 = vld [vmem:[%s1 + $0x224] sm:$0xf]
  %v152 = vld [vmem:[%s1 + $0x228] sm:$0xf]
  %v153 = vld [vmem:[%s1 + $0x22c] sm:$0xf]
  %v154 = vld [vmem:[%s1 + $0x230] sm:$0xf]
  %v155 = vld [vmem:[%s1 + $0x234] sm:$0xf]
  %v156 = vld [vmem:[%s1 + $0x238] sm:$0xf]
  %v157 = vld [vmem:[%s1 + $0x23c] sm:$0xf]
  %v158 = vld [vmem:[%s1 + $0x240] sm:$0xf]
  %v159 = vld [vmem:[%s1 + $0x244] sm:$0xf]
  %v160 = vld [vmem:[%s1 + $0x248] sm:$0xf]
  %v161 = vld [vmem:[%s1 + $0x24c] sm:$0xf]
  %v162 = vld [vmem:[%s1 + $0x250] sm:$0xf]
  %v163 = vld [vmem:[%s1 + $0x254] sm:$0xf]
  %v164 = vld [vmem:[%s1 + $0x258] sm:$0xf]
  %v165 = vld [vmem:[%s1 + $0x25c] sm:$0xf]
  %v166 = vld [vmem:[%s1 + $0x260] sm:$0xf]
  %v167 = vld [vmem:[%s1 + $0x264] sm:$0xf]
  %v168 = vld [vmem:[%s1 + $0x268] sm:$0xf]
  %v169 = vld [vmem:[%s1 + $0x26c] sm:$0xf]
  %v170 = vld [vmem:[%s1 + $0x270] sm:$0xf]
  %v171 = vld [vmem:[%s1 + $0x274] sm:$0xf]
  %v172 = vld [vmem:[%s1 + $0x278] sm:$0xf]
  %v173 = vld [vmem:[%s1 + $0x27c] sm:$0xf]
  %v174 = vld [vmem:[%s1 + $0x280] sm:$0xf]
  %v175 = vld [vmem:[%s1 + $0x284] sm:$0xf]
  %v176 = vld [vmem:[%s1 + $0x288] sm:$0xf]
  %v177 = vld [vmem:[%s1 + $0x28c] sm:$0xf]
  %v178 = vld [vmem:[%s1 + $0x290] sm:$0xf]
  %v179 = vld [vmem:[%s1 + $0x294] sm:$0xf]
  %v180 = vld [vmem:[%s1 + $0x298] sm:$0xf]
  %v181 = vld [vmem:[%s1 + $0x29c] sm:$0xf]
  %v182 = vld [vmem:[%s1 + $0x2a0] sm:$0xf]
  %v183 = vld [vmem:[%s1 + $0x2a4] sm:$0xf]
  %v184 = vld [vmem:[%s1 + $0x2a8] sm:$0xf]
  %v185 = vld [vmem:[%s1 + $0x2ac] sm:$0xf]
  %v186 = vld [vmem:[%s1 + $0x2b0] sm:$0xf]
  %v187 = vld [vmem:[%s1 + $0x2b4] sm:$0xf]
  %v188 = vld [vmem:[%s1 + $0x2b8] sm:$0xf]
  %v189 = vld [vmem:[%s1 + $0x2bc] sm:$0xf]
  %v190 = vld [vmem:[%s1 + $0x2c0] sm:$0xf]
  %v191 = vld [vmem:[%s1 + $0x2c4] sm:$0xf]
  %v192 = vld [vmem:[%s1 + $0x2c8] sm:$0xf]
  %v193 = vld [vmem:[%s1 + $0x2cc] sm:$0xf]
  %v194 = vld [vmem:[%s1 + $0x2d0] sm:$0xf]
  %v195 = vld [vmem:[%s1 + $0x2d4] sm:$0xf]
  %v196 = vld [vmem:[%s1 + $0x2d8] sm:$0xf]
  %v197 = vld [vmem:[%s1 + $0x2dc] sm:$0xf]
  %v198 = vld [vmem:[%s1 + $0x2e0] sm:$0xf]
  %v199 = vld [vmem:[%s1 + $0x2e4] sm:$0xf]
  %v200 = vld [vmem:[%s1 + $0x2e8] sm:$0xf]
  %v201 = vld [vmem:[%s1 + $0x2ec] sm:$0xf]
  %v202 = vld [vmem:[%s1 + $0x2f0] sm:$0xf]
  %v203 = vld [vmem:[%s1 + $0x2f4] sm:$0xf]
  %v204 = vld [vmem:[%s1 + $0x2f8] sm:$0xf]
  %v205 = vld [vmem:[%s1 + $0x2fc] sm:$0xf]
  %v206 = vld [vmem:[%s1 + $0x300] sm:$0xf]
  %v207 = vld [vmem:[%s1 + $0x304] sm:$0xf]
  %v208 = vld [vmem:[%s1 + $0x308] sm:$0xf]
  %v209 = vld [vmem:[%s1 + $0x30c] sm:$0xf]
  %v210 = vld [vmem:[%s1 + $0x310] sm:$0xf]
  %v211 = vld [vmem:[%s1 + $0x314] sm:$0xf]
  %v212 = vld [vmem:[%s1 + $0x318] sm:$0xf]
  %v213 = vld [vmem:[%s1 + $0x31c] sm:$0xf]
  %v214 = vld [vmem:[%s1 + $0x320] sm:$0xf]
  %v215 = vld [vmem:[%s1 + $0x324] sm:$0xf]
  %v216 = vld [vmem:[%s1 + $0x328] sm:$0xf]
  %v217 = vld [vmem:[%s1 + $0x32c] sm:$0xf]
  %v218 = vld [vmem:[%s1 + $0x330] sm:$0xf]
  %v219 = vld [vmem:[%s1 + $0x334] sm:$0xf]
  %v220 = vld [vmem:[%s1 + $0x338] sm:$0xf]
  %v221 = vld [vmem:[%s1 + $0x33c] sm:$0xf]
  %v222 = vld [vmem:[%s1 + $0x340] sm:$0xf]
  %v223 = vld [vmem:[%s1 + $0x344] sm:$0xf]
  %v224 = vld [vmem:[%s1 + $0x348] sm:$0xf]
  %v225 = vld [vmem:[%s1 + $0x34c] sm:$0xf]
  %v226 = vld [vmem:[%s1 + $0x350] sm:$0xf]
  %v227 = vld [vmem:[%s1 + $0x354] sm:$0xf]
  %v228 = vld [vmem:[%s1 + $0x358] sm:$0xf]
  %v229 = vld [vmem:[%s1 + $0x35c] sm:$0xf]
  %v230 = vld [vmem:[%s1 + $0x360] sm:$0xf]
  %v231 = vld [vmem:[%s1 + $0x364] sm:$0xf]
  %v232 = vld [vmem:[%s1 + $0x368] sm:$0xf]
  %v233 = vld [vmem:[%s1 + $0x36c] sm:$0xf]
  %v234 = vld [vmem:[%s1 + $0x370] sm:$0xf]
  %v235 = vld [vmem:[%s1 + $0x374] sm:$0xf]
  %v236 = vld [vmem:[%s1 + $0x378] sm:$0xf]
  %v237 = vld [vmem:[%s1 + $0x37c] sm:$0xf]
  %v238 = vld [vmem:[%s1 + $0x380] sm:$0xf]
  %v239 = vld [vmem:[%s1 + $0x384] sm:$0xf]
  %v240 = vld [vmem:[%s1 + $0x388] sm:$0xf]
  %v241 = vld [vmem:[%s1 + $0x38c] sm:$0xf]
  %v242 = vld [vmem:[%s1 + $0x390] sm:$0xf]
  %v243 = vld [vmem:[%s1 + $0x394] sm:$0xf]
  %v244 = vld [vmem:[%s1 + $0x398] sm:$0xf]
  %v245 = vld [vmem:[%s1 + $0x39c] sm:$0xf]
  %v246 = vld [vmem:[%s1 + $0x3a0] sm:$0xf]
  %v247 = vld [vmem:[%s1 + $0x3a4] sm:$0xf]
  %v248 = vld [vmem:[%s1 + $0x3a8] sm:$0xf]
  %v249 = vld [vmem:[%s1 + $0x3ac] sm:$0xf]
  %v250 = vld [vmem:[%s1 + $0x3b0] sm:$0xf]
  %v251 = vld [vmem:[%s1 + $0x3b4] sm:$0xf]
  %v252 = vld [vmem:[%s1 + $0x3b8] sm:$0xf]
  %v253 = vld [vmem:[%s1 + $0x3bc] sm:$0xf]
  %v254 = vld [vmem:[%s1 + $0x3c0] sm:$0xf]
  %v255 = vld [vmem:[%s1 + $0x3c4] sm:$0xf]
  %v256 = vld [vmem:[%s1 + $0x3c8] sm:$0xf]
  %v257 = vld [vmem:[%s1 + $0x3cc] sm:$0xf]
  %v258 = vld [vmem:[%s1 + $0x3d0] sm:$0xf]
  %v259 = vld [vmem:[%s1 + $0x3d4] sm:$0xf]
  %v260 = vld [vmem:[%s1 + $0x3d8] sm:$0xf]
  %v261 = vld [vmem:[%s1 + $0x3dc] sm:$0xf]
  %v262 = vld [vmem:[%s1 + $0x3e0] sm:$0xf]
  %v263 = vld [vmem:[%s1 + $0x3e4] sm:$0xf]
  %v264 = vld [vmem:[%s1 + $0x3e8] sm:$0xf]
  %v265 = vld [vmem:[%s1 + $0x3ec] sm:$0xf]
  %v266 = vld [vmem:[%s1 + $0x3f0] sm:$0xf]
  %v267 = vld [vmem:[%s1 + $0x3f4] sm:$0xf]
  %v268 = vld [vmem:[%s1 + $0x3f8] sm:$0xf]
  %v269 = vld [vmem:[%s1 + $0x3fc] sm:$0xf]
  %v272 = vcombine.high %v12, %v12
  %v274 = vunpack.c.l.s4 1966171168
  %v275 = vunpack.c.0.s8 %v274
  %v276 = vlaneseq
  %v277 = vshrl.u32 %v276, 7
  %v278 = vsub.s32 %v275, %v277
  %v279 = vrot.slane %v12, %v278
  %v281 = vunpack.c.l.s4 1966171168
  %v282 = vunpack.c.0.s8 %v281
  %v283 = vlaneseq
  %v284 = vshrl.u32 %v283, 7
  %v285 = vsub.s32 %v282, %v284
  %v286 = vrot.slane %v272, %v285
  %v287 = vcombine.high %v279, %v279
  %v288 = vcombine.high %v286, %v286
  %v290 = vunpack.c.l.s4 1966171168
  %v291 = vunpack.c.0.s8 %v290
  %v292 = vlaneseq
  %v293 = vshrl.u32 %v292, 7
  %v294 = vsub.s32 %v291, %v293
  %v295 = vrot.slane %v279, %v294
  %v297 = vunpack.c.l.s4 1966171168
  %v298 = vunpack.c.0.s8 %v297
  %v299 = vlaneseq
  %v300 = vshrl.u32 %v299, 7
  %v301 = vsub.s32 %v298, %v300
  %v302 = vrot.slane %v286, %v301
  %v304 = vunpack.c.l.s4 1966171168
  %v305 = vunpack.c.0.s8 %v304
  %v306 = vlaneseq
  %v307 = vshrl.u32 %v306, 7
  %v308 = vsub.s32 %v305, %v307
  %v309 = vrot.slane %v287, %v308
  %v311 = vunpack.c.l.s4 1966171168
  %v312 = vunpack.c.0.s8 %v311
  %v313 = vlaneseq
  %v314 = vshrl.u32 %v313, 7
  %v315 = vsub.s32 %v312, %v314
  %v316 = vrot.slane %v288, %v315
  %v317 = vcombine.high %v295, %v295
  %v318 = vcombine.high %v302, %v302
  %v319 = vcombine.high %v309, %v309
  %v320 = vcombine.high %v316, %v316
  %v321 = vcombine.high %v13, %v13
  %v323 = vunpack.c.l.s4 1966171168
  %v324 = vunpack.c.0.s8 %v323
  %v325 = vlaneseq
  %v326 = vshrl.u32 %v325, 7
  %v327 = vsub.s32 %v324, %v326
  %v328 = vrot.slane %v13, %v327
  %v330 = vunpack.c.l.s4 1966171168
  %v331 = vunpack.c.0.s8 %v330
  %v332 = vlaneseq
  %v333 = vshrl.u32 %v332, 7
  %v334 = vsub.s32 %v331, %v333
  %v335 = vrot.slane %v321, %v334
  %v336 = vcombine.high %v328, %v328
  %v337 = vcombine.high %v335, %v335
  %v339 = vunpack.c.l.s4 1966171168
  %v340 = vunpack.c.0.s8 %v339
  %v341 = vlaneseq
  %v342 = vshrl.u32 %v341, 7
  %v343 = vsub.s32 %v340, %v342
  %v344 = vrot.slane %v328, %v343
  %v346 = vunpack.c.l.s4 1966171168
  %v347 = vunpack.c.0.s8 %v346
  %v348 = vlaneseq
  %v349 = vshrl.u32 %v348, 7
  %v350 = vsub.s32 %v347, %v349
  %v351 = vrot.slane %v335, %v350
  %v353 = vunpack.c.l.s4 1966171168
  %v354 = vunpack.c.0.s8 %v353
  %v355 = vlaneseq
  %v356 = vshrl.u32 %v355, 7
  %v357 = vsub.s32 %v354, %v356
  %v358 = vrot.slane %v336, %v357
  %v360 = vunpack.c.l.s4 1966171168
  %v361 = vunpack.c.0.s8 %v360
  %v362 = vlaneseq
  %v363 = vshrl.u32 %v362, 7
  %v364 = vsub.s32 %v361, %v363
  %v365 = vrot.slane %v337, %v364
  %v366 = vcombine.high %v344, %v344
  %v367 = vcombine.high %v351, %v351
  %v368 = vcombine.high %v358, %v358
  %v369 = vcombine.high %v365, %v365
  %v642 = vunpack.c.l.b16 %v14
  %v643 = vunpack.c.l.b16 %v15
  %v644 = vunpack.c.l.b16 %v16
  %v645 = vunpack.c.l.b16 %v17
  %v646 = vunpack.c.l.b16 %v18
  %v647 = vunpack.c.l.b16 %v19
  %v648 = vunpack.c.l.b16 %v20
  %v649 = vunpack.c.l.b16 %v21
  %v650 = vunpack.c.l.b16 %v22
  %v651 = vunpack.c.l.b16 %v23
  %v652 = vunpack.c.l.b16 %v24
  %v653 = vunpack.c.l.b16 %v25
  %v654 = vunpack.c.l.b16 %v26
  %v655 = vunpack.c.l.b16 %v27
  %v656 = vunpack.c.l.b16 %v28
  %v657 = vunpack.c.l.b16 %v29
  %v658 = vunpack.c.l.b16 %v30
  %v659 = vunpack.c.l.b16 %v31
  %v660 = vunpack.c.l.b16 %v32
  %v661 = vunpack.c.l.b16 %v33
  %v662 = vunpack.c.l.b16 %v34
  %v663 = vunpack.c.l.b16 %v35
  %v664 = vunpack.c.l.b16 %v36
  %v665 = vunpack.c.l.b16 %v37
  %v666 = vunpack.c.l.b16 %v38
  %v667 = vunpack.c.l.b16 %v39
  %v668 = vunpack.c.l.b16 %v40
  %v669 = vunpack.c.l.b16 %v41
  %v670 = vunpack.c.l.b16 %v42
  %v671 = vunpack.c.l.b16 %v43
  %v672 = vunpack.c.l.b16 %v44
  %v673 = vunpack.c.l.b16 %v45
  %v674 = vunpack.c.l.b16 %v46
  %v675 = vunpack.c.l.b16 %v47
  %v676 = vunpack.c.l.b16 %v48
  %v677 = vunpack.c.l.b16 %v49
  %v678 = vunpack.c.l.b16 %v50
  %v679 = vunpack.c.l.b16 %v51
  %v680 = vunpack.c.l.b16 %v52
  %v681 = vunpack.c.l.b16 %v53
  %v682 = vunpack.c.l.b16 %v54
  %v683 = vunpack.c.l.b16 %v55
  %v684 = vunpack.c.l.b16 %v56
  %v685 = vunpack.c.l.b16 %v57
  %v686 = vunpack.c.l.b16 %v58
  %v687 = vunpack.c.l.b16 %v59
  %v688 = vunpack.c.l.b16 %v60
  %v689 = vunpack.c.l.b16 %v61
  %v690 = vunpack.c.l.b16 %v62
  %v691 = vunpack.c.l.b16 %v63
  %v692 = vunpack.c.l.b16 %v64
  %v693 = vunpack.c.l.b16 %v65
  %v694 = vunpack.c.l.b16 %v66
  %v695 = vunpack.c.l.b16 %v67
  %v696 = vunpack.c.l.b16 %v68
  %v697 = vunpack.c.l.b16 %v69
  %v698 = vunpack.c.l.b16 %v70
  %v699 = vunpack.c.l.b16 %v71
  %v700 = vunpack.c.l.b16 %v72
  %v701 = vunpack.c.l.b16 %v73
  %v702 = vunpack.c.l.b16 %v74
  %v703 = vunpack.c.l.b16 %v75
  %v704 = vunpack.c.l.b16 %v76
  %v705 = vunpack.c.l.b16 %v77
  %v706 = vunpack.c.l.b16 %v78
  %v707 = vunpack.c.l.b16 %v79
  %v708 = vunpack.c.l.b16 %v80
  %v709 = vunpack.c.l.b16 %v81
  %v710 = vunpack.c.l.b16 %v82
  %v711 = vunpack.c.l.b16 %v83
  %v712 = vunpack.c.l.b16 %v84
  %v713 = vunpack.c.l.b16 %v85
  %v714 = vunpack.c.l.b16 %v86
  %v715 = vunpack.c.l.b16 %v87
  %v716 = vunpack.c.l.b16 %v88
  %v717 = vunpack.c.l.b16 %v89
  %v718 = vunpack.c.l.b16 %v90
  %v719 = vunpack.c.l.b16 %v91
  %v720 = vunpack.c.l.b16 %v92
  %v721 = vunpack.c.l.b16 %v93
  %v722 = vunpack.c.l.b16 %v94
  %v723 = vunpack.c.l.b16 %v95
  %v724 = vunpack.c.l.b16 %v96
  %v725 = vunpack.c.l.b16 %v97
  %v726 = vunpack.c.l.b16 %v98
  %v727 = vunpack.c.l.b16 %v99
  %v728 = vunpack.c.l.b16 %v100
  %v729 = vunpack.c.l.b16 %v101
  %v730 = vunpack.c.l.b16 %v102
  %v731 = vunpack.c.l.b16 %v103
  %v732 = vunpack.c.l.b16 %v104
  %v733 = vunpack.c.l.b16 %v105
  %v734 = vunpack.c.l.b16 %v106
  %v735 = vunpack.c.l.b16 %v107
  %v736 = vunpack.c.l.b16 %v108
  %v737 = vunpack.c.l.b16 %v109
  %v738 = vunpack.c.l.b16 %v110
  %v739 = vunpack.c.l.b16 %v111
  %v740 = vunpack.c.l.b16 %v112
  %v741 = vunpack.c.l.b16 %v113
  %v742 = vunpack.c.l.b16 %v114
  %v743 = vunpack.c.l.b16 %v115
  %v744 = vunpack.c.l.b16 %v116
  %v745 = vunpack.c.l.b16 %v117
  %v746 = vunpack.c.l.b16 %v118
  %v747 = vunpack.c.l.b16 %v119
  %v748 = vunpack.c.l.b16 %v120
  %v749 = vunpack.c.l.b16 %v121
  %v750 = vunpack.c.l.b16 %v122
  %v751 = vunpack.c.l.b16 %v123
  %v752 = vunpack.c.l.b16 %v124
  %v753 = vunpack.c.l.b16 %v125
  %v754 = vunpack.c.l.b16 %v126
  %v755 = vunpack.c.l.b16 %v127
  %v756 = vunpack.c.l.b16 %v128
  %v757 = vunpack.c.l.b16 %v129
  %v758 = vunpack.c.l.b16 %v130
  %v759 = vunpack.c.l.b16 %v131
  %v760 = vunpack.c.l.b16 %v132
  %v761 = vunpack.c.l.b16 %v133
  %v762 = vunpack.c.l.b16 %v134
  %v763 = vunpack.c.l.b16 %v135
  %v764 = vunpack.c.l.b16 %v136
  %v765 = vunpack.c.l.b16 %v137
  %v766 = vunpack.c.l.b16 %v138
  %v767 = vunpack.c.l.b16 %v139
  %v768 = vunpack.c.l.b16 %v140
  %v769 = vunpack.c.l.b16 %v141
  %v770 = vunpack.c.l.b16 %v142
  %v771 = vunpack.c.l.b16 %v143
  %v772 = vunpack.c.l.b16 %v144
  %v773 = vunpack.c.l.b16 %v145
  %v774 = vunpack.c.l.b16 %v146
  %v775 = vunpack.c.l.b16 %v147
  %v776 = vunpack.c.l.b16 %v148
  %v777 = vunpack.c.l.b16 %v149
  %v778 = vunpack.c.l.b16 %v150
  %v779 = vunpack.c.l.b16 %v151
  %v780 = vunpack.c.l.b16 %v152
  %v781 = vunpack.c.l.b16 %v153
  %v782 = vunpack.c.l.b16 %v154
  %v783 = vunpack.c.l.b16 %v155
  %v784 = vunpack.c.l.b16 %v156
  %v785 = vunpack.c.l.b16 %v157
  %v786 = vunpack.c.l.b16 %v158
  %v787 = vunpack.c.l.b16 %v159
  %v788 = vunpack.c.l.b16 %v160
  %v789 = vunpack.c.l.b16 %v161
  %v790 = vunpack.c.l.b16 %v162
  %v791 = vunpack.c.l.b16 %v163
  %v792 = vunpack.c.l.b16 %v164
  %v793 = vunpack.c.l.b16 %v165
  %v794 = vunpack.c.l.b16 %v166
  %v795 = vunpack.c.l.b16 %v167
  %v796 = vunpack.c.l.b16 %v168
  %v797 = vunpack.c.l.b16 %v169
  %v798 = vunpack.c.l.b16 %v170
  %v799 = vunpack.c.l.b16 %v171
  %v800 = vunpack.c.l.b16 %v172
  %v801 = vunpack.c.l.b16 %v173
  %v802 = vunpack.c.l.b16 %v174
  %v803 = vunpack.c.l.b16 %v175
  %v804 = vunpack.c.l.b16 %v176
  %v805 = vunpack.c.l.b16 %v177
  %v806 = vunpack.c.l.b16 %v178
  %v807 = vunpack.c.l.b16 %v179
  %v808 = vunpack.c.l.b16 %v180
  %v809 = vunpack.c.l.b16 %v181
  %v810 = vunpack.c.l.b16 %v182
  %v811 = vunpack.c.l.b16 %v183
  %v812 = vunpack.c.l.b16 %v184
  %v813 = vunpack.c.l.b16 %v185
  %v814 = vunpack.c.l.b16 %v186
  %v815 = vunpack.c.l.b16 %v187
  %v816 = vunpack.c.l.b16 %v188
  %v817 = vunpack.c.l.b16 %v189
  %v818 = vunpack.c.l.b16 %v190
  %v819 = vunpack.c.l.b16 %v191
  %v820 = vunpack.c.l.b16 %v192
  %v821 = vunpack.c.l.b16 %v193
  %v822 = vunpack.c.l.b16 %v194
  %v823 = vunpack.c.l.b16 %v195
  %v824 = vunpack.c.l.b16 %v196
  %v825 = vunpack.c.l.b16 %v197
  %v826 = vunpack.c.l.b16 %v198
  %v827 = vunpack.c.l.b16 %v199
  %v828 = vunpack.c.l.b16 %v200
  %v829 = vunpack.c.l.b16 %v201
  %v830 = vunpack.c.l.b16 %v202
  %v831 = vunpack.c.l.b16 %v203
  %v832 = vunpack.c.l.b16 %v204
  %v833 = vunpack.c.l.b16 %v205
  %v834 = vunpack.c.l.b16 %v206
  %v835 = vunpack.c.l.b16 %v207
  %v836 = vunpack.c.l.b16 %v208
  %v837 = vunpack.c.l.b16 %v209
  %v838 = vunpack.c.l.b16 %v210
  %v839 = vunpack.c.l.b16 %v211
  %v840 = vunpack.c.l.b16 %v212
  %v841 = vunpack.c.l.b16 %v213
  %v842 = vunpack.c.l.b16 %v214
  %v843 = vunpack.c.l.b16 %v215
  %v844 = vunpack.c.l.b16 %v216
  %v845 = vunpack.c.l.b16 %v217
  %v846 = vunpack.c.l.b16 %v218
  %v847 = vunpack.c.l.b16 %v219
  %v848 = vunpack.c.l.b16 %v220
  %v849 = vunpack.c.l.b16 %v221
  %v850 = vunpack.c.l.b16 %v222
  %v851 = vunpack.c.l.b16 %v223
  %v852 = vunpack.c.l.b16 %v224
  %v853 = vunpack.c.l.b16 %v225
  %v854 = vunpack.c.l.b16 %v226
  %v855 = vunpack.c.l.b16 %v227
  %v856 = vunpack.c.l.b16 %v228
  %v857 = vunpack.c.l.b16 %v229
  %v858 = vunpack.c.l.b16 %v230
  %v859 = vunpack.c.l.b16 %v231
  %v860 = vunpack.c.l.b16 %v232
  %v861 = vunpack.c.l.b16 %v233
  %v862 = vunpack.c.l.b16 %v234
  %v863 = vunpack.c.l.b16 %v235
  %v864 = vunpack.c.l.b16 %v236
  %v865 = vunpack.c.l.b16 %v237
  %v866 = vunpack.c.l.b16 %v238
  %v867 = vunpack.c.l.b16 %v239
  %v868 = vunpack.c.l.b16 %v240
  %v869 = vunpack.c.l.b16 %v241
  %v870 = vunpack.c.l.b16 %v242
  %v871 = vunpack.c.l.b16 %v243
  %v872 = vunpack.c.l.b16 %v244
  %v873 = vunpack.c.l.b16 %v245
  %v874 = vunpack.c.l.b16 %v246
  %v875 = vunpack.c.l.b16 %v247
  %v876 = vunpack.c.l.b16 %v248
  %v877 = vunpack.c.l.b16 %v249
  %v878 = vunpack.c.l.b16 %v250
  %v879 = vunpack.c.l.b16 %v251
  %v880 = vunpack.c.l.b16 %v252
  %v881 = vunpack.c.l.b16 %v253
  %v882 = vunpack.c.l.b16 %v254
  %v883 = vunpack.c.l.b16 %v255
  %v884 = vunpack.c.l.b16 %v256
  %v885 = vunpack.c.l.b16 %v257
  %v886 = vunpack.c.l.b16 %v258
  %v887 = vunpack.c.l.b16 %v259
  %v888 = vunpack.c.l.b16 %v260
  %v889 = vunpack.c.l.b16 %v261
  %v890 = vunpack.c.l.b16 %v262
  %v891 = vunpack.c.l.b16 %v263
  %v892 = vunpack.c.l.b16 %v264
  %v893 = vunpack.c.l.b16 %v265
  %v894 = vunpack.c.l.b16 %v266
  %v895 = vunpack.c.l.b16 %v267
  %v896 = vunpack.c.l.b16 %v268
  %v897 = vunpack.c.l.b16 %v269
  %v898 = vpack.c.b16 %v643, %v642
  %v899 = vpack.c.b16 %v645, %v644
  %v900 = vpack.c.b16 %v647, %v646
  %v901 = vpack.c.b16 %v649, %v648
  %v902 = vpack.c.b16 %v651, %v650
  %v903 = vpack.c.b16 %v653, %v652
  %v904 = vpack.c.b16 %v655, %v654
  %v905 = vpack.c.b16 %v657, %v656
  %v906 = vpack.c.b16 %v659, %v658
  %v907 = vpack.c.b16 %v661, %v660
  %v908 = vpack.c.b16 %v663, %v662
  %v909 = vpack.c.b16 %v665, %v664
  %v910 = vpack.c.b16 %v667, %v666
  %v911 = vpack.c.b16 %v669, %v668
  %v912 = vpack.c.b16 %v671, %v670
  %v913 = vpack.c.b16 %v673, %v672
  %v914 = vpack.c.b16 %v675, %v674
  %v915 = vpack.c.b16 %v677, %v676
  %v916 = vpack.c.b16 %v679, %v678
  %v917 = vpack.c.b16 %v681, %v680
  %v918 = vpack.c.b16 %v683, %v682
  %v919 = vpack.c.b16 %v685, %v684
  %v920 = vpack.c.b16 %v687, %v686
  %v921 = vpack.c.b16 %v689, %v688
  %v922 = vpack.c.b16 %v691, %v690
  %v923 = vpack.c.b16 %v693, %v692
  %v924 = vpack.c.b16 %v695, %v694
  %v925 = vpack.c.b16 %v697, %v696
  %v926 = vpack.c.b16 %v699, %v698
  %v927 = vpack.c.b16 %v701, %v700
  %v928 = vpack.c.b16 %v703, %v702
  %v929 = vpack.c.b16 %v705, %v704
  %v930 = vpack.c.b16 %v707, %v706
  %v931 = vpack.c.b16 %v709, %v708
  %v932 = vpack.c.b16 %v711, %v710
  %v933 = vpack.c.b16 %v713, %v712
  %v934 = vpack.c.b16 %v715, %v714
  %v935 = vpack.c.b16 %v717, %v716
  %v936 = vpack.c.b16 %v719, %v718
  %v937 = vpack.c.b16 %v721, %v720
  %v938 = vpack.c.b16 %v723, %v722
  %v939 = vpack.c.b16 %v725, %v724
  %v940 = vpack.c.b16 %v727, %v726
  %v941 = vpack.c.b16 %v729, %v728
  %v942 = vpack.c.b16 %v731, %v730
  %v943 = vpack.c.b16 %v733, %v732
  %v944 = vpack.c.b16 %v735, %v734
  %v945 = vpack.c.b16 %v737, %v736
  %v946 = vpack.c.b16 %v739, %v738
  %v947 = vpack.c.b16 %v741, %v740
  %v948 = vpack.c.b16 %v743, %v742
  %v949 = vpack.c.b16 %v745, %v744
  %v950 = vpack.c.b16 %v747, %v746
  %v951 = vpack.c.b16 %v749, %v748
  %v952 = vpack.c.b16 %v751, %v750
  %v953 = vpack.c.b16 %v753, %v752
  %v954 = vpack.c.b16 %v755, %v754
  %v955 = vpack.c.b16 %v757, %v756
  %v956 = vpack.c.b16 %v759, %v758
  %v957 = vpack.c.b16 %v761, %v760
  %v958 = vpack.c.b16 %v763, %v762
  %v959 = vpack.c.b16 %v765, %v764
  %v960 = vpack.c.b16 %v767, %v766
  %v961 = vpack.c.b16 %v769, %v768
  %v962 = vpack.c.b16 %v771, %v770
  %v963 = vpack.c.b16 %v773, %v772
  %v964 = vpack.c.b16 %v775, %v774
  %v965 = vpack.c.b16 %v777, %v776
  %v966 = vpack.c.b16 %v779, %v778
  %v967 = vpack.c.b16 %v781, %v780
  %v968 = vpack.c.b16 %v783, %v782
  %v969 = vpack.c.b16 %v785, %v784
  %v970 = vpack.c.b16 %v787, %v786
  %v971 = vpack.c.b16 %v789, %v788
  %v972 = vpack.c.b16 %v791, %v790
  %v973 = vpack.c.b16 %v793, %v792
  %v974 = vpack.c.b16 %v795, %v794
  %v975 = vpack.c.b16 %v797, %v796
  %v976 = vpack.c.b16 %v799, %v798
  %v977 = vpack.c.b16 %v801, %v800
  %v978 = vpack.c.b16 %v803, %v802
  %v979 = vpack.c.b16 %v805, %v804
  %v980 = vpack.c.b16 %v807, %v806
  %v981 = vpack.c.b16 %v809, %v808
  %v982 = vpack.c.b16 %v811, %v810
  %v983 = vpack.c.b16 %v813, %v812
  %v984 = vpack.c.b16 %v815, %v814
  %v985 = vpack.c.b16 %v817, %v816
  %v986 = vpack.c.b16 %v819, %v818
  %v987 = vpack.c.b16 %v821, %v820
  %v988 = vpack.c.b16 %v823, %v822
  %v989 = vpack.c.b16 %v825, %v824
  %v990 = vpack.c.b16 %v827, %v826
  %v991 = vpack.c.b16 %v829, %v828
  %v992 = vpack.c.b16 %v831, %v830
  %v993 = vpack.c.b16 %v833, %v832
  %v994 = vpack.c.b16 %v835, %v834
  %v995 = vpack.c.b16 %v837, %v836
  %v996 = vpack.c.b16 %v839, %v838
  %v997 = vpack.c.b16 %v841, %v840
  %v998 = vpack.c.b16 %v843, %v842
  %v999 = vpack.c.b16 %v845, %v844
  %v1000 = vpack.c.b16 %v847, %v846
  %v1001 = vpack.c.b16 %v849, %v848
  %v1002 = vpack.c.b16 %v851, %v850
  %v1003 = vpack.c.b16 %v853, %v852
  %v1004 = vpack.c.b16 %v855, %v854
  %v1005 = vpack.c.b16 %v857, %v856
  %v1006 = vpack.c.b16 %v859, %v858
  %v1007 = vpack.c.b16 %v861, %v860
  %v1008 = vpack.c.b16 %v863, %v862
  %v1009 = vpack.c.b16 %v865, %v864
  %v1010 = vpack.c.b16 %v867, %v866
  %v1011 = vpack.c.b16 %v869, %v868
  %v1012 = vpack.c.b16 %v871, %v870
  %v1013 = vpack.c.b16 %v873, %v872
  %v1014 = vpack.c.b16 %v875, %v874
  %v1015 = vpack.c.b16 %v877, %v876
  %v1016 = vpack.c.b16 %v879, %v878
  %v1017 = vpack.c.b16 %v881, %v880
  %v1018 = vpack.c.b16 %v883, %v882
  %v1019 = vpack.c.b16 %v885, %v884
  %v1020 = vpack.c.b16 %v887, %v886
  %v1021 = vpack.c.b16 %v889, %v888
  %v1022 = vpack.c.b16 %v891, %v890
  %v1023 = vpack.c.b16 %v893, %v892
  %v1024 = vpack.c.b16 %v895, %v894
  %v1025 = vpack.c.b16 %v897, %v896
  %1154 = vmatprep.subr.bf16.mxu0 0
  %1155 = vmatpush1.bf16.msra.mxu0 %v898
  %1156 = vmatprep.subr.bf16.mxu0 0
  %1157 = vmatpush1.bf16.msra.mxu0 %v899
  %1158 = vmatprep.subr.bf16.mxu0 0
  %1159 = vmatpush1.bf16.msra.mxu0 %v900
  %1160 = vmatprep.subr.bf16.mxu0 0
  %1161 = vmatpush1.bf16.msra.mxu0 %v901
  %1162 = vmatprep.subr.bf16.mxu0 0
  %1163 = vmatpush1.bf16.msra.mxu0 %v902
  %1164 = vmatprep.subr.bf16.mxu0 0
  %1165 = vmatpush1.bf16.msra.mxu0 %v903
  %1166 = vmatprep.subr.bf16.mxu0 0
  %1167 = vmatpush1.bf16.msra.mxu0 %v904
  %1168 = vmatprep.subr.bf16.mxu0 0
  %1169 = vmatpush1.bf16.msra.mxu0 %v905
  %1170 = vmatprep.subr.bf16.mxu0 0
  %1171 = vmatpush1.bf16.msra.mxu0 %v906
  %1172 = vmatprep.subr.bf16.mxu0 0
  %1173 = vmatpush1.bf16.msra.mxu0 %v907
  %1174 = vmatprep.subr.bf16.mxu0 0
  %1175 = vmatpush1.bf16.msra.mxu0 %v908
  %1176 = vmatprep.subr.bf16.mxu0 0
  %1177 = vmatpush1.bf16.msra.mxu0 %v909
  %1178 = vmatprep.subr.bf16.mxu0 0
  %1179 = vmatpush1.bf16.msra.mxu0 %v910
  %1180 = vmatprep.subr.bf16.mxu0 0
  %1181 = vmatpush1.bf16.msra.mxu0 %v911
  %1182 = vmatprep.subr.bf16.mxu0 0
  %1183 = vmatpush1.bf16.msra.mxu0 %v912
  %1184 = vmatprep.subr.bf16.mxu0 0
  %1185 = vmatpush1.bf16.msra.mxu0 %v913
  %1186 = vmatprep.mubr.bf16.mxu0 %v309
  %1187 = vmatmul.mubr.bf16.gmra.mrb[0].mxu0 %v295
  %v1188 = vpop.f32.mrb[0].mxu0
  %v1189 = vadd.f32 0.0, %v1188
  %v1190 = vpop.f32.mrb[0].mxu0
  %v1191 = vpop.f32.mrb[0].mxu0
  %v1192 = vpop.f32.mrb[0].mxu0
  %1193 = vdwg.mxu0
  %1194 = vmatprep.subr.bf16.mxu0 0
  %1195 = vmatpush1.bf16.msra.mxu0 %v914
  %1196 = vmatprep.subr.bf16.mxu0 0
  %1197 = vmatpush1.bf16.msra.mxu0 %v915
  %1198 = vmatprep.subr.bf16.mxu0 0
  %1199 = vmatpush1.bf16.msra.mxu0 %v916
  %1200 = vmatprep.subr.bf16.mxu0 0
  %1201 = vmatpush1.bf16.msra.mxu0 %v917
  %1202 = vmatprep.subr.bf16.mxu0 0
  %1203 = vmatpush1.bf16.msra.mxu0 %v918
  %1204 = vmatprep.subr.bf16.mxu0 0
  %1205 = vmatpush1.bf16.msra.mxu0 %v919
  %1206 = vmatprep.subr.bf16.mxu0 0
  %1207 = vmatpush1.bf16.msra.mxu0 %v920
  %1208 = vmatprep.subr.bf16.mxu0 0
  %1209 = vmatpush1.bf16.msra.mxu0 %v921
  %1210 = vmatprep.subr.bf16.mxu0 0
  %1211 = vmatpush1.bf16.msra.mxu0 %v922
  %1212 = vmatprep.subr.bf16.mxu0 0
  %1213 = vmatpush1.bf16.msra.mxu0 %v923
  %1214 = vmatprep.subr.bf16.mxu0 0
  %1215 = vmatpush1.bf16.msra.mxu0 %v924
  %1216 = vmatprep.subr.bf16.mxu0 0
  %1217 = vmatpush1.bf16.msra.mxu0 %v925
  %1218 = vmatprep.subr.bf16.mxu0 0
  %1219 = vmatpush1.bf16.msra.mxu0 %v926
  %1220 = vmatprep.subr.bf16.mxu0 0
  %1221 = vmatpush1.bf16.msra.mxu0 %v927
  %1222 = vmatprep.subr.bf16.mxu0 0
  %1223 = vmatpush1.bf16.msra.mxu0 %v928
  %1224 = vmatprep.subr.bf16.mxu0 0
  %1225 = vmatpush1.bf16.msra.mxu0 %v929
  %1226 = vmatprep.mubr.bf16.mxu0 %v319
  %1227 = vmatmul.mubr.bf16.gmra.mrb[0].mxu0 %v317
  %v1228 = vpop.f32.mrb[0].mxu0
  %v1229 = vadd.f32 %v1189, %v1228
  %v1230 = vpop.f32.mrb[0].mxu0
  %v1231 = vpop.f32.mrb[0].mxu0
  %v1232 = vpop.f32.mrb[0].mxu0
  %1233 = vdwg.mxu0
  %1234 = vmatprep.subr.bf16.mxu0 0
  %1235 = vmatpush1.bf16.msra.mxu0 %v930
  %1236 = vmatprep.subr.bf16.mxu0 0
  %1237 = vmatpush1.bf16.msra.mxu0 %v931
  %1238 = vmatprep.subr.bf16.mxu0 0
  %1239 = vmatpush1.bf16.msra.mxu0 %v932
  %1240 = vmatprep.subr.bf16.mxu0 0
  %1241 = vmatpush1.bf16.msra.mxu0 %v933
  %1242 = vmatprep.subr.bf16.mxu0 0
  %1243 = vmatpush1.bf16.msra.mxu0 %v934
  %1244 = vmatprep.subr.bf16.mxu0 0
  %1245 = vmatpush1.bf16.msra.mxu0 %v935
  %1246 = vmatprep.subr.bf16.mxu0 0
  %1247 = vmatpush1.bf16.msra.mxu0 %v936
  %1248 = vmatprep.subr.bf16.mxu0 0
  %1249 = vmatpush1.bf16.msra.mxu0 %v937
  %1250 = vmatprep.subr.bf16.mxu0 0
  %1251 = vmatpush1.bf16.msra.mxu0 %v938
  %1252 = vmatprep.subr.bf16.mxu0 0
  %1253 = vmatpush1.bf16.msra.mxu0 %v939
  %1254 = vmatprep.subr.bf16.mxu0 0
  %1255 = vmatpush1.bf16.msra.mxu0 %v940
  %1256 = vmatprep.subr.bf16.mxu0 0
  %1257 = vmatpush1.bf16.msra.mxu0 %v941
  %1258 = vmatprep.subr.bf16.mxu0 0
  %1259 = vmatpush1.bf16.msra.mxu0 %v942
  %1260 = vmatprep.subr.bf16.mxu0 0
  %1261 = vmatpush1.bf16.msra.mxu0 %v943
  %1262 = vmatprep.subr.bf16.mxu0 0
  %1263 = vmatpush1.bf16.msra.mxu0 %v944
  %1264 = vmatprep.subr.bf16.mxu0 0
  %1265 = vmatpush1.bf16.msra.mxu0 %v945
  %1266 = vmatprep.mubr.bf16.mxu0 %v316
  %1267 = vmatmul.mubr.bf16.gmra.mrb[0].mxu0 %v302
  %v1268 = vpop.f32.mrb[0].mxu0
  %v1269 = vadd.f32 %v1229, %v1268
  %v1270 = vpop.f32.mrb[0].mxu0
  %v1271 = vpop.f32.mrb[0].mxu0
  %v1272 = vpop.f32.mrb[0].mxu0
  %1273 = vdwg.mxu0
  %1274 = vmatprep.subr.bf16.mxu0 0
  %1275 = vmatpush1.bf16.msra.mxu0 %v946
  %1276 = vmatprep.subr.bf16.mxu0 0
  %1277 = vmatpush1.bf16.msra.mxu0 %v947
  %1278 = vmatprep.subr.bf16.mxu0 0
  %1279 = vmatpush1.bf16.msra.mxu0 %v948
  %1280 = vmatprep.subr.bf16.mxu0 0
  %1281 = vmatpush1.bf16.msra.mxu0 %v949
  %1282 = vmatprep.subr.bf16.mxu0 0
  %1283 = vmatpush1.bf16.msra.mxu0 %v950
  %1284 = vmatprep.subr.bf16.mxu0 0
  %1285 = vmatpush1.bf16.msra.mxu0 %v951
  %1286 = vmatprep.subr.bf16.mxu0 0
  %1287 = vmatpush1.bf16.msra.mxu0 %v952
  %1288 = vmatprep.subr.bf16.mxu0 0
  %1289 = vmatpush1.bf16.msra.mxu0 %v953
  %1290 = vmatprep.subr.bf16.mxu0 0
  %1291 = vmatpush1.bf16.msra.mxu0 %v954
  %1292 = vmatprep.subr.bf16.mxu0 0
  %1293 = vmatpush1.bf16.msra.mxu0 %v955
  %1294 = vmatprep.subr.bf16.mxu0 0
  %1295 = vmatpush1.bf16.msra.mxu0 %v956
  %1296 = vmatprep.subr.bf16.mxu0 0
  %1297 = vmatpush1.bf16.msra.mxu0 %v957
  %1298 = vmatprep.subr.bf16.mxu0 0
  %1299 = vmatpush1.bf16.msra.mxu0 %v958
  %1300 = vmatprep.subr.bf16.mxu0 0
  %1301 = vmatpush1.bf16.msra.mxu0 %v959
  %1302 = vmatprep.subr.bf16.mxu0 0
  %1303 = vmatpush1.bf16.msra.mxu0 %v960
  %1304 = vmatprep.subr.bf16.mxu0 0
  %1305 = vmatpush1.bf16.msra.mxu0 %v961
  %1306 = vmatprep.mubr.bf16.mxu0 %v320
  %1307 = vmatmul.mubr.bf16.gmra.mrb[0].mxu0 %v318
  %v1308 = vpop.f32.mrb[0].mxu0
  %v1309 = vadd.f32 %v1269, %v1308
  %v1310 = vpop.f32.mrb[0].mxu0
  %v1311 = vpop.f32.mrb[0].mxu0
  %v1312 = vpop.f32.mrb[0].mxu0
  %1313 = vdwg.mxu0
  %1314 = vmatprep.subr.bf16.mxu0 0
  %1315 = vmatpush1.bf16.msra.mxu0 %v962
  %1316 = vmatprep.subr.bf16.mxu0 0
  %1317 = vmatpush1.bf16.msra.mxu0 %v963
  %1318 = vmatprep.subr.bf16.mxu0 0
  %1319 = vmatpush1.bf16.msra.mxu0 %v964
  %1320 = vmatprep.subr.bf16.mxu0 0
  %1321 = vmatpush1.bf16.msra.mxu0 %v965
  %1322 = vmatprep.subr.bf16.mxu0 0
  %1323 = vmatpush1.bf16.msra.mxu0 %v966
  %1324 = vmatprep.subr.bf16.mxu0 0
  %1325 = vmatpush1.bf16.msra.mxu0 %v967
  %1326 = vmatprep.subr.bf16.mxu0 0
  %1327 = vmatpush1.bf16.msra.mxu0 %v968
  %1328 = vmatprep.subr.bf16.mxu0 0
  %1329 = vmatpush1.bf16.msra.mxu0 %v969
  %1330 = vmatprep.subr.bf16.mxu0 0
  %1331 = vmatpush1.bf16.msra.mxu0 %v970
  %1332 = vmatprep.subr.bf16.mxu0 0
  %1333 = vmatpush1.bf16.msra.mxu0 %v971
  %1334 = vmatprep.subr.bf16.mxu0 0
  %1335 = vmatpush1.bf16.msra.mxu0 %v972
  %1336 = vmatprep.subr.bf16.mxu0 0
  %1337 = vmatpush1.bf16.msra.mxu0 %v973
  %1338 = vmatprep.subr.bf16.mxu0 0
  %1339 = vmatpush1.bf16.msra.mxu0 %v974
  %1340 = vmatprep.subr.bf16.mxu0 0
  %1341 = vmatpush1.bf16.msra.mxu0 %v975
  %1342 = vmatprep.subr.bf16.mxu0 0
  %1343 = vmatpush1.bf16.msra.mxu0 %v976
  %1344 = vmatprep.subr.bf16.mxu0 0
  %1345 = vmatpush1.bf16.msra.mxu0 %v977
  %1346 = vmatprep.mubr.bf16.mxu0 %v358
  %1347 = vmatmul.mubr.bf16.gmra.mrb[0].mxu0 %v344
  %v1348 = vpop.f32.mrb[0].mxu0
  %v1349 = vadd.f32 %v1309, %v1348
  %v1350 = vpop.f32.mrb[0].mxu0
  %v1351 = vpop.f32.mrb[0].mxu0
  %v1352 = vpop.f32.mrb[0].mxu0
  %1353 = vdwg.mxu0
  %1354 = vmatprep.subr.bf16.mxu0 0
  %1355 = vmatpush1.bf16.msra.mxu0 %v978
  %1356 = vmatprep.subr.bf16.mxu0 0
  %1357 = vmatpush1.bf16.msra.mxu0 %v979
  %1358 = vmatprep.subr.bf16.mxu0 0
  %1359 = vmatpush1.bf16.msra.mxu0 %v980
  %1360 = vmatprep.subr.bf16.mxu0 0
  %1361 = vmatpush1.bf16.msra.mxu0 %v981
  %1362 = vmatprep.subr.bf16.mxu0 0
  %1363 = vmatpush1.bf16.msra.mxu0 %v982
  %1364 = vmatprep.subr.bf16.mxu0 0
  %1365 = vmatpush1.bf16.msra.mxu0 %v983
  %1366 = vmatprep.subr.bf16.mxu0 0
  %1367 = vmatpush1.bf16.msra.mxu0 %v984
  %1368 = vmatprep.subr.bf16.mxu0 0
  %1369 = vmatpush1.bf16.msra.mxu0 %v985
  %1370 = vmatprep.subr.bf16.mxu0 0
  %1371 = vmatpush1.bf16.msra.mxu0 %v986
  %1372 = vmatprep.subr.bf16.mxu0 0
  %1373 = vmatpush1.bf16.msra.mxu0 %v987
  %1374 = vmatprep.subr.bf16.mxu0 0
  %1375 = vmatpush1.bf16.msra.mxu0 %v988
  %1376 = vmatprep.subr.bf16.mxu0 0
  %1377 = vmatpush1.bf16.msra.mxu0 %v989
  %1378 = vmatprep.subr.bf16.mxu0 0
  %1379 = vmatpush1.bf16.msra.mxu0 %v990
  %1380 = vmatprep.subr.bf16.mxu0 0
  %1381 = vmatpush1.bf16.msra.mxu0 %v991
  %1382 = vmatprep.subr.bf16.mxu0 0
  %1383 = vmatpush1.bf16.msra.mxu0 %v992
  %1384 = vmatprep.subr.bf16.mxu0 0
  %1385 = vmatpush1.bf16.msra.mxu0 %v993
  %1386 = vmatprep.mubr.bf16.mxu0 %v368
  %1387 = vmatmul.mubr.bf16.gmra.mrb[0].mxu0 %v366
  %v1388 = vpop.f32.mrb[0].mxu0
  %v1389 = vadd.f32 %v1349, %v1388
  %v1390 = vpop.f32.mrb[0].mxu0
  %v1391 = vpop.f32.mrb[0].mxu0
  %v1392 = vpop.f32.mrb[0].mxu0
  %1393 = vdwg.mxu0
  %1394 = vmatprep.subr.bf16.mxu0 0
  %1395 = vmatpush1.bf16.msra.mxu0 %v994
  %1396 = vmatprep.subr.bf16.mxu0 0
  %1397 = vmatpush1.bf16.msra.mxu0 %v995
  %1398 = vmatprep.subr.bf16.mxu0 0
  %1399 = vmatpush1.bf16.msra.mxu0 %v996
  %1400 = vmatprep.subr.bf16.mxu0 0
  %1401 = vmatpush1.bf16.msra.mxu0 %v997
  %1402 = vmatprep.subr.bf16.mxu0 0
  %1403 = vmatpush1.bf16.msra.mxu0 %v998
  %1404 = vmatprep.subr.bf16.mxu0 0
  %1405 = vmatpush1.bf16.msra.mxu0 %v999
  %1406 = vmatprep.subr.bf16.mxu0 0
  %1407 = vmatpush1.bf16.msra.mxu0 %v1000
  %1408 = vmatprep.subr.bf16.mxu0 0
  %1409 = vmatpush1.bf16.msra.mxu0 %v1001
  %1410 = vmatprep.subr.bf16.mxu0 0
  %1411 = vmatpush1.bf16.msra.mxu0 %v1002
  %1412 = vmatprep.subr.bf16.mxu0 0
  %1413 = vmatpush1.bf16.msra.mxu0 %v1003
  %1414 = vmatprep.subr.bf16.mxu0 0
  %1415 = vmatpush1.bf16.msra.mxu0 %v1004
  %1416 = vmatprep.subr.bf16.mxu0 0
  %1417 = vmatpush1.bf16.msra.mxu0 %v1005
  %1418 = vmatprep.subr.bf16.mxu0 0
  %1419 = vmatpush1.bf16.msra.mxu0 %v1006
  %1420 = vmatprep.subr.bf16.mxu0 0
  %1421 = vmatpush1.bf16.msra.mxu0 %v1007
  %1422 = vmatprep.subr.bf16.mxu0 0
  %1423 = vmatpush1.bf16.msra.mxu0 %v1008
  %1424 = vmatprep.subr.bf16.mxu0 0
  %1425 = vmatpush1.bf16.msra.mxu0 %v1009
  %1426 = vmatprep.mubr.bf16.mxu0 %v365
  %1427 = vmatmul.mubr.bf16.gmra.mrb[0].mxu0 %v351
  %v1428 = vpop.f32.mrb[0].mxu0
  %v1429 = vadd.f32 %v1389, %v1428
  %v1430 = vpop.f32.mrb[0].mxu0
  %v1431 = vpop.f32.mrb[0].mxu0
  %v1432 = vpop.f32.mrb[0].mxu0
  %1433 = vdwg.mxu0
  %1434 = vmatprep.subr.bf16.mxu0 0
  %1435 = vmatpush1.bf16.msra.mxu0 %v1010
  %1436 = vmatprep.subr.bf16.mxu0 0
  %1437 = vmatpush1.bf16.msra.mxu0 %v1011
  %1438 = vmatprep.subr.bf16.mxu0 0
  %1439 = vmatpush1.bf16.msra.mxu0 %v1012
  %1440 = vmatprep.subr.bf16.mxu0 0
  %1441 = vmatpush1.bf16.msra.mxu0 %v1013
  %1442 = vmatprep.subr.bf16.mxu0 0
  %1443 = vmatpush1.bf16.msra.mxu0 %v1014
  %1444 = vmatprep.subr.bf16.mxu0 0
  %1445 = vmatpush1.bf16.msra.mxu0 %v1015
  %1446 = vmatprep.subr.bf16.mxu0 0
  %1447 = vmatpush1.bf16.msra.mxu0 %v1016
  %1448 = vmatprep.subr.bf16.mxu0 0
  %1449 = vmatpush1.bf16.msra.mxu0 %v1017
  %1450 = vmatprep.subr.bf16.mxu0 0
  %1451 = vmatpush1.bf16.msra.mxu0 %v1018
  %1452 = vmatprep.subr.bf16.mxu0 0
  %1453 = vmatpush1.bf16.msra.mxu0 %v1019
  %1454 = vmatprep.subr.bf16.mxu0 0
  %1455 = vmatpush1.bf16.msra.mxu0 %v1020
  %1456 = vmatprep.subr.bf16.mxu0 0
  %1457 = vmatpush1.bf16.msra.mxu0 %v1021
  %1458 = vmatprep.subr.bf16.mxu0 0
  %1459 = vmatpush1.bf16.msra.mxu0 %v1022
  %1460 = vmatprep.subr.bf16.mxu0 0
  %1461 = vmatpush1.bf16.msra.mxu0 %v1023
  %1462 = vmatprep.subr.bf16.mxu0 0
  %1463 = vmatpush1.bf16.msra.mxu0 %v1024
  %1464 = vmatprep.subr.bf16.mxu0 0
  %1465 = vmatpush1.bf16.msra.mxu0 %v1025
  %1466 = vmatprep.mubr.bf16.mxu0 %v369
  %1467 = vmatmul.mubr.bf16.gmra.mrb[0].mxu0 %v367
  %v1468 = vpop.f32.mrb[0].mxu0
  %v1469 = vadd.f32 %v1429, %v1468
  %v1470 = vpop.f32.mrb[0].mxu0
  %v1471 = vpop.f32.mrb[0].mxu0
  %v1472 = vpop.f32.mrb[0].mxu0
  %1473 = vdwg.mxu0
  %v1474 = vmul.f32 %v1469, 0.5
  %v1475 = vtanh.pop %v1474
  %v1476 = vadd.f32 %v1475, 1.0
  %v1477 = vmul.f32 %v1476, 0.5
  %1478 = vst [vmem:[%s2] sm:$0x3] %v1477
  // Predicated region
  $region10: #{discriminator_forward.9} parent=0 // pred_check
    _
  $region11: #{discriminator_forward.9} parent=0 // pred_check_branch
    %1480 = sbr.rel (0) target = $region13
  $region12: #{discriminator_forward.9} parent=0 // pred_region
    _
  $region13: #{discriminator_forward.9} parent=0 // pred_fallthru
    _
  // Predicated region
  $region14: #{discriminator_forward.9} parent=0 // pred_check
    _
  $region15: #{discriminator_forward.9} parent=0 // pred_check_branch
    %1482 = sbr.rel (0) target = $region17
  $region16: #{discriminator_forward.9} parent=0 // pred_region
    _
  $region17: #{discriminator_forward.9} parent=0 // pred_fallthru
    _

</llo_original>
